<compile_context>
chip_gen: v6e
topology: v6e:2x2x1
jax: 0.10.0
libtpu: 0.0.40
codegen_flags: <defaults>
</compile_context>

<pallas_src>
import functools
import math

import jax
import jax.numpy as jnp
from jax.experimental import pallas as pl
from jax.experimental.pallas import tpu as pltpu


# ----------------------------------------------------------------------------
# Generation-aware VMEM budget / tile targets
# ----------------------------------------------------------------------------
def _vmem_capacity_bytes():
    try:
        return int(pltpu.get_tpu_info().vmem_capacity_bytes)
    except Exception:
        return 64 * 1024 * 1024          # conservative fallback (v7x-like)


_VMEM_CAP = _vmem_capacity_bytes()
VMEM_LIMIT_BYTES = max(32 * 1024 * 1024,
                       min(int(_VMEM_CAP * 0.75), 100 * 1024 * 1024))

if _VMEM_CAP >= 96 * 1024 * 1024:        # v5e / v6e: 128 MiB physical VMEM
    _TM_TARGET, _TF_TARGET = 512, 1024
else:                                    # v7x: 64 MiB per TensorCore
    _TM_TARGET, _TF_TARGET = 256, 512


def _compiler_params(dim_semantics):
    return pltpu.CompilerParams(dimension_semantics=dim_semantics,
                                vmem_limit_bytes=VMEM_LIMIT_BYTES)


def _pick_tile(n, target, step):
    """Largest multiple of `step` that divides n and is <= target, else n."""
    if n <= target:
        return n
    t = (target // step) * step
    while t >= step:
        if n % t == 0:
            return t
        t -= step
    return n


def _layer_norm_f32(x, a, b, eps):
    """Annotated-Transformer LayerNorm: Bessel-corrected std, eps on std."""
    d = x.shape[-1]
    mean = jnp.mean(x, axis=-1, keepdims=True)
    diff = x - mean
    var = jnp.sum(diff * diff, axis=-1, keepdims=True) * (1.0 / (d - 1))
    return a * diff / (jnp.sqrt(var) + eps) + b


# ----------------------------------------------------------------------------
# Kernel 1 (per layer): LayerNorm + fused QKV projection + multi-head
# attention + single concat-heads Wo projection + residual, one batch per
# grid step.  The (1, S) mask is converted to an additive bias in-kernel, so
# no (B*H, S, S) mask tensor is ever materialized in HBM.
# ----------------------------------------------------------------------------
def _mha_block_kernel(x_ref, a_ref, b_ref, wqkv_ref, bqkv_ref, mask_ref,
                      wo_ref, bo_ref, o_ref, *, n_heads, scale, eps):
    x = x_ref[...].astype(jnp.float32)                     # (S, D)
    d = x.shape[-1]
    dk = d // n_heads

    # --- pre-norm LayerNorm (exact inverse-std) -----------------------------
    xn = _layer_norm_f32(x, a_ref[...], b_ref[...], eps)

    # --- fused QKV projection: one K=D matmul, lane-dense (S, 3D) output ----
    qkv = jnp.dot(xn.astype(jnp.bfloat16), wqkv_ref[...],
                  preferred_element_type=jnp.float32) + bqkv_ref[...]

    # additive mask bias, computed ONCE (not per head)
    bias = jnp.where(mask_ref[...] == 0.0,
                     jnp.float32(-1e9), jnp.float32(0.0))   # (1, S)

    # fold 1/sqrt(dk) into Q once (S*dk mults instead of H*S*S)
    q = (qkv[:, :d] * jnp.float32(scale)).astype(jnp.bfloat16)
    k = qkv[:, d:2 * d].astype(jnp.bfloat16)
    v = qkv[:, 2 * d:3 * d].astype(jnp.bfloat16)

    # TODO(synk): switch to lax.fori_loop + flash-style kv tiling for long S
    # (static unroll is fine at these head counts / sequence lengths).
    heads = []
    for h in range(n_heads):
        qh = q[:, h * dk:(h + 1) * dk]
        kh = k[:, h * dk:(h + 1) * dk]
        vh = v[:, h * dk:(h + 1) * dk]

        s = jnp.einsum("qd,kd->qk", qh, kh,
                       preferred_element_type=jnp.float32)
        s = s + bias                                        # masked_fill(-1e9)
        m = jnp.max(s, axis=-1, keepdims=True)
        p = jnp.exp(s - m)
        l = jnp.sum(p, axis=-1, keepdims=True)
        p = p * pl.reciprocal(l, approx=True)               # EUP (softmax only)
        heads.append(jnp.dot(p.astype(jnp.bfloat16), vh,
                             preferred_element_type=jnp.float32))

    # single concat-heads output projection (K = D, full MXU) + residual
    attn = jnp.concatenate(heads, axis=-1).astype(jnp.bfloat16)   # (S, D)
    out = x + bo_ref[...] + jnp.dot(attn, wo_ref[...],
                                    preferred_element_type=jnp.float32)
    o_ref[...] = out.astype(o_ref.dtype)


def mha_block(x, mask, a, b, wqkv, bqkv, wo, bo, n_heads, eps=1e-6):
    bsz, s_len, d = x.shape
    d3 = wqkv.shape[1]
    scale = 1.0 / math.sqrt(d // n_heads)
    return pl.pallas_call(
        functools.partial(_mha_block_kernel, n_heads=n_heads, scale=scale,
                          eps=eps),
        out_shape=jax.ShapeDtypeStruct((bsz, s_len, d), x.dtype),
        grid=(bsz,),
        in_specs=[
            pl.BlockSpec((None, s_len, d), lambda i: (i, 0, 0)),   # x
            pl.BlockSpec((1, d), lambda i: (0, 0)),                # ln a
            pl.BlockSpec((1, d), lambda i: (0, 0)),                # ln b
            pl.BlockSpec((d, d3), lambda i: (0, 0)),               # Wqkv
            pl.BlockSpec((1, d3), lambda i: (0, 0)),               # bqkv
            pl.BlockSpec((None, 1, s_len), lambda i: (i, 0, 0)),   # mask
            pl.BlockSpec((d, d), lambda i: (0, 0)),                # Wo
            pl.BlockSpec((1, d), lambda i: (0, 0)),                # bo
        ],
        out_specs=pl.BlockSpec((None, s_len, d), lambda i: (i, 0, 0)),
        compiler_params=_compiler_params(("parallel",)),
    )(x, a, b, wqkv, bqkv, mask, wo, bo)


# ----------------------------------------------------------------------------
# Kernel 2 (per layer): LayerNorm + position-wise FFN + residual, tiled over
# d_ff with an f32 VMEM accumulator.  For the LAST layer the final Encoder
# LayerNorm is fused into the epilogue (no separate pallas_call / HBM pass).
# ----------------------------------------------------------------------------
def _ln_ffn_kernel(*refs, eps, final_ln):
    if final_ln:
        (x_ref, a_ref, b_ref, w1_ref, b1_ref, w2_ref, b2_ref,
         fa_ref, fb_ref, o_ref, xn_sc, acc_sc) = refs
    else:
        (x_ref, a_ref, b_ref, w1_ref, b1_ref, w2_ref, b2_ref,
         o_ref, xn_sc, acc_sc) = refs

    j = pl.program_id(1)

    @pl.when(j == 0)
    def _():
        x = x_ref[...].astype(jnp.float32)
        xn = _layer_norm_f32(x, a_ref[...], b_ref[...], eps)
        xn_sc[...] = xn.astype(jnp.bfloat16)
        acc_sc[...] = x + b2_ref[...]          # residual + second-layer bias

    h = jnp.dot(xn_sc[...], w1_ref[...], preferred_element_type=jnp.float32)
    h = jnp.maximum(h + b1_ref[...], 0.0)
    acc_sc[...] += jnp.dot(h.astype(jnp.bfloat16), w2_ref[...],
                           preferred_element_type=jnp.float32)

    @pl.when(j == pl.num_programs(1) - 1)
    def _():
        y = acc_sc[...]
        if final_ln:                           # fused final Encoder LayerNorm
            y = _layer_norm_f32(y, fa_ref[...], fb_ref[...], eps)
        o_ref[...] = y.astype(o_ref.dtype)


def ln_ffn_residual(x2d, a, b, w1, b1, w2, b2,
                    final_a=None, final_b=None, eps=1e-6):
    m, d = x2d.shape
    f = w1.shape[1]
    tm = _pick_tile(m, _TM_TARGET, 8)
    tf = _pick_tile(f, _TF_TARGET, 128)
    grid = (pl.cdiv(m, tm), pl.cdiv(f, tf))
    final_ln = final_a is not None

    in_specs = [
        pl.BlockSpec((tm, d), lambda i, j: (i, 0)),
        pl.BlockSpec((1, d), lambda i, j: (0, 0)),
        pl.BlockSpec((1, d), lambda i, j: (0, 0)),
        pl.BlockSpec((d, tf), lambda i, j: (0, j)),
        pl.BlockSpec((1, tf), lambda i, j: (0, j)),
        pl.BlockSpec((tf, d), lambda i, j: (j, 0)),
        pl.BlockSpec((1, d), lambda i, j: (0, 0)),
    ]
    inputs = [x2d, a, b, w1, b1, w2, b2]
    if final_ln:
        in_specs += [pl.BlockSpec((1, d), lambda i, j: (0, 0)),
                     pl.BlockSpec((1, d), lambda i, j: (0, 0))]
        inputs += [final_a, final_b]

    return pl.pallas_call(
        functools.partial(_ln_ffn_kernel, eps=eps, final_ln=final_ln),
        out_shape=jax.ShapeDtypeStruct((m, d), x2d.dtype),
        grid=grid,
        in_specs=in_specs,
        out_specs=pl.BlockSpec((tm, d), lambda i, j: (i, 0)),
        scratch_shapes=[pltpu.VMEM((tm, d), jnp.bfloat16),
                        pltpu.VMEM((tm, d), jnp.float32)],
        compiler_params=_compiler_params(("parallel", "arbitrary")),
    )(*inputs)


# ----------------------------------------------------------------------------
# Standalone LayerNorm (only needed for the degenerate N == 0 case)
# ----------------------------------------------------------------------------
def _ln_kernel(x_ref, a_ref, b_ref, o_ref, *, eps):
    x = x_ref[...].astype(jnp.float32)
    o_ref[...] = _layer_norm_f32(x, a_ref[...], b_ref[...], eps).astype(o_ref.dtype)


def layernorm(x2d, a, b, eps=1e-6):
    m, d = x2d.shape
    tm = _pick_tile(m, _TM_TARGET, 8)
    return pl.pallas_call(
        functools.partial(_ln_kernel, eps=eps),
        out_shape=jax.ShapeDtypeStruct((m, d), x2d.dtype),
        grid=(pl.cdiv(m, tm),),
        in_specs=[pl.BlockSpec((tm, d), lambda i: (i, 0)),
                  pl.BlockSpec((1, d), lambda i: (0, 0)),
                  pl.BlockSpec((1, d), lambda i: (0, 0))],
        out_specs=pl.BlockSpec((tm, d), lambda i: (i, 0)),
        compiler_params=_compiler_params(("parallel",)),
    )(x2d, a, b)


# ----------------------------------------------------------------------------
# Parameters (deterministic, synthetic) and forward pass
# ----------------------------------------------------------------------------
def init_params(key, n_layers, d_model, d_ff):
    def dense(k, din, dout):
        kw, kb = jax.random.split(k)
        w = (jax.random.normal(kw, (din, dout), jnp.float32) * 0.05
             ).astype(jnp.bfloat16)                      # bf16 weights, f32 acc
        b = jax.random.normal(kb, (1, dout), jnp.float32) * 0.05
        return w, b

    layers = []
    for lk in jax.random.split(key, n_layers):
        ks = jax.random.split(lk, 4)
        wqkv, bqkv = dense(ks[0], d_model, 3 * d_model)   # fused Q/K/V
        wo, bo = dense(ks[1], d_model, d_model)
        w1, b1 = dense(ks[2], d_model, d_ff)
        w2, b2 = dense(ks[3], d_ff, d_model)
        layers.append(dict(
            wqkv=wqkv, bqkv=bqkv, wo=wo, bo=bo,
            w1=w1, b1=b1, w2=w2, b2=b2,
            ln1_a=jnp.ones((1, d_model), jnp.float32),
            ln1_b=jnp.zeros((1, d_model), jnp.float32),
            ln2_a=jnp.ones((1, d_model), jnp.float32),
            ln2_b=jnp.zeros((1, d_model), jnp.float32),
        ))
    norm = dict(a=jnp.ones((1, d_model), jnp.float32),
                b=jnp.zeros((1, d_model), jnp.float32))
    return dict(layers=layers, norm=norm)


def encoder_forward(params, x, mask, n_heads):
    B, S, D = x.shape
    n_layers = len(params["layers"])

    if n_layers == 0:
        return layernorm(x.reshape(B * S, D),
                         params["norm"]["a"], params["norm"]["b"]).reshape(B, S, D)

    x3 = x
    for li, lp in enumerate(params["layers"]):
        # --- sublayer 1: fused pre-norm + QKV + MHA + Wo + residual ---------
        x3 = mha_block(x3, mask, lp["ln1_a"], lp["ln1_b"],
                       lp["wqkv"], lp["bqkv"], lp["wo"], lp["bo"], n_heads)

        # --- sublayer 2: fused pre-norm FFN + residual (+ final LN on last) -
        last = (li == n_layers - 1)
        x2d = ln_ffn_residual(
            x3.reshape(B * S, D), lp["ln2_a"], lp["ln2_b"],
            lp["w1"], lp["b1"], lp["w2"], lp["b2"],
            final_a=params["norm"]["a"] if last else None,
            final_b=params["norm"]["b"] if last else None)
        x3 = x2d.reshape(B, S, D)

    return x3


if __name__ == "__main__":
    key = jax.random.PRNGKey(0)
    kx, kp = jax.random.split(key)

    B, S, D, H, D_FF, N = 2, 8, 32, 4, 64, 2
    x = jax.random.normal(kx, (B, S, D), jnp.float32)
    mask = jnp.ones((B, 1, S), jnp.float32)      # 1 = attend, 0 = masked

    params = init_params(kp, N, D, D_FF)
    fwd = jax.jit(lambda p, xx, mm: encoder_forward(p, xx, mm, H))
    out = fwd(params, x, mask)
    jax.block_until_ready(out)
    assert out.shape == (B, S, D) and out.dtype == jnp.float32
    print("KERNEL_OK")
</pallas_src>

<mosaic_0001>
module attributes {stable_mosaic.version = 11 : i64} {
  func.func @_mha_block_kernel(%arg0: i32, %arg1: memref<1x8x32xf32, #tpu.memory_space<vmem>>, %arg2: memref<1x32xf32, #tpu.memory_space<vmem>>, %arg3: memref<1x32xf32, #tpu.memory_space<vmem>>, %arg4: memref<32x96xbf16, #tpu.memory_space<vmem>>, %arg5: memref<1x96xf32, #tpu.memory_space<vmem>>, %arg6: memref<1x1x8xf32, #tpu.memory_space<vmem>>, %arg7: memref<32x32xbf16, #tpu.memory_space<vmem>>, %arg8: memref<1x32xf32, #tpu.memory_space<vmem>>, %arg9: memref<1x8x32xf32, #tpu.memory_space<vmem>>) attributes {dimension_semantics = [#tpu.dimension_semantics<parallel>], iteration_bounds = array<i64: 2>, scalar_prefetch = 0 : i64, scratch_operands = 0 : i64, tpu.core_type = #tpu.core_type<tc>, window_params = [{transform_indices = @transform_0, window_bounds = array<i64: 1, 8, 32>}, {pipeline_mode = #tpu.pipeline_mode<synchronous>, transform_indices = @transform_1, window_bounds = array<i64: 1, 32>}, {pipeline_mode = #tpu.pipeline_mode<synchronous>, transform_indices = @transform_2, window_bounds = array<i64: 1, 32>}, {pipeline_mode = #tpu.pipeline_mode<synchronous>, transform_indices = @transform_3, window_bounds = array<i64: 32, 96>}, {pipeline_mode = #tpu.pipeline_mode<synchronous>, transform_indices = @transform_4, window_bounds = array<i64: 1, 96>}, {transform_indices = @transform_5, window_bounds = array<i64: 1, 1, 8>}, {pipeline_mode = #tpu.pipeline_mode<synchronous>, transform_indices = @transform_6, window_bounds = array<i64: 32, 32>}, {pipeline_mode = #tpu.pipeline_mode<synchronous>, transform_indices = @transform_7, window_bounds = array<i64: 1, 32>}, {transform_indices = @transform_8, window_bounds = array<i64: 1, 8, 32>}]} {
    %c0 = arith.constant 0 : index
    %c0_0 = arith.constant 0 : index
    %c0_1 = arith.constant 0 : index
    %0 = vector.load %arg1[%c0, %c0_0, %c0_1] : memref<1x8x32xf32, #tpu.memory_space<vmem>>, vector<1x8x32xf32>
    %1 = vector.shape_cast %0 : vector<1x8x32xf32> to vector<8x32xf32>
    %c0_2 = arith.constant 0 : index
    %c0_3 = arith.constant 0 : index
    %2 = vector.load %arg2[%c0_2, %c0_3] : memref<1x32xf32, #tpu.memory_space<vmem>>, vector<1x32xf32>
    %c0_4 = arith.constant 0 : index
    %c0_5 = arith.constant 0 : index
    %3 = vector.load %arg3[%c0_4, %c0_5] : memref<1x32xf32, #tpu.memory_space<vmem>>, vector<1x32xf32>
    %cst = arith.constant dense<0.000000e+00> : vector<8xf32>
    %4 = vector.multi_reduction <add>, %1, %cst [1] : vector<8x32xf32> to vector<8xf32>
    %5 = vector.shape_cast %4 : vector<8xf32> to vector<8x1xf32>
    %cst_6 = arith.constant 3.200000e+01 : f32
    %6 = vector.broadcast %cst_6 : f32 to vector<8x1xf32>
    %7 = arith.divf %5, %6 : vector<8x1xf32>
    %8 = vector.broadcast %7 : vector<8x1xf32> to vector<8x32xf32>
    %9 = arith.subf %1, %8 : vector<8x32xf32>
    %10 = arith.mulf %9, %9 : vector<8x32xf32>
    %cst_7 = arith.constant dense<0.000000e+00> : vector<8xf32>
    %11 = vector.multi_reduction <add>, %10, %cst_7 [1] : vector<8x32xf32> to vector<8xf32>
    %12 = vector.shape_cast %11 : vector<8xf32> to vector<8x1xf32>
    %cst_8 = arith.constant 0.0322580636 : f32
    %13 = vector.broadcast %cst_8 : f32 to vector<8x1xf32>
    %14 = arith.mulf %12, %13 : vector<8x1xf32>
    %15 = vector.broadcast %2 : vector<1x32xf32> to vector<8x32xf32>
    %16 = arith.mulf %15, %9 : vector<8x32xf32>
    %17 = math.sqrt %14 : vector<8x1xf32>
    %cst_9 = arith.constant 9.99999997E-7 : f32
    %18 = vector.broadcast %cst_9 : f32 to vector<8x1xf32>
    %19 = arith.addf %17, %18 : vector<8x1xf32>
    %20 = vector.broadcast %19 : vector<8x1xf32> to vector<8x32xf32>
    %21 = arith.divf %16, %20 : vector<8x32xf32>
    %22 = vector.broadcast %3 : vector<1x32xf32> to vector<8x32xf32>
    %23 = arith.addf %21, %22 : vector<8x32xf32>
    %24 = arith.truncf %23 : vector<8x32xf32> to vector<8x32xbf16>
    %c0_10 = arith.constant 0 : index
    %c0_11 = arith.constant 0 : index
    %25 = vector.load %arg4[%c0_10, %c0_11] : memref<32x96xbf16, #tpu.memory_space<vmem>>, vector<32x96xbf16>
    %cst_12 = arith.constant dense<0.000000e+00> : vector<8x96xf32>
    %26 = tpu.matmul %24, %25, %cst_12 {dimension_numbers = #tpu.dot_dimension_numbers<[1], [0], [0], [1], [0, 0, 1, 1], [], []>} : vector<8x32xbf16>, vector<32x96xbf16>, vector<8x96xf32> -> vector<8x96xf32>
    %c0_13 = arith.constant 0 : index
    %c0_14 = arith.constant 0 : index
    %27 = vector.load %arg5[%c0_13, %c0_14] : memref<1x96xf32, #tpu.memory_space<vmem>>, vector<1x96xf32>
    %28 = vector.broadcast %27 : vector<1x96xf32> to vector<8x96xf32>
    %29 = arith.addf %26, %28 : vector<8x96xf32>
    %c0_15 = arith.constant 0 : index
    %c0_16 = arith.constant 0 : index
    %c0_17 = arith.constant 0 : index
    %30 = vector.load %arg6[%c0_15, %c0_16, %c0_17] : memref<1x1x8xf32, #tpu.memory_space<vmem>>, vector<1x1x8xf32>
    %31 = vector.shape_cast %30 : vector<1x1x8xf32> to vector<1x8xf32>
    %cst_18 = arith.constant 0.000000e+00 : f32
    %32 = vector.broadcast %cst_18 : f32 to vector<1x8xf32>
    %33 = arith.cmpf oeq, %31, %32 : vector<1x8xf32>
    %cst_19 = arith.constant -1.000000e+09 : f32
    %cst_20 = arith.constant 0.000000e+00 : f32
    %34 = vector.broadcast %cst_19 : f32 to vector<1x8xf32>
    %35 = vector.broadcast %cst_20 : f32 to vector<1x8xf32>
    %36 = arith.select %33, %34, %35 : vector<1x8xi1>, vector<1x8xf32>
    %37 = vector.extract_strided_slice %29 {offsets = [0, 0], sizes = [8, 32], strides = [1, 1]} : vector<8x96xf32> to vector<8x32xf32>
    %cst_21 = arith.constant 0.353553385 : f32
    %38 = vector.broadcast %cst_21 : f32 to vector<8x32xf32>
    %39 = arith.mulf %37, %38 : vector<8x32xf32>
    %40 = arith.truncf %39 : vector<8x32xf32> to vector<8x32xbf16>
    %41 = vector.extract_strided_slice %29 {offsets = [0, 32], sizes = [8, 32], strides = [1, 1]} : vector<8x96xf32> to vector<8x32xf32>
    %42 = arith.truncf %41 : vector<8x32xf32> to vector<8x32xbf16>
    %43 = vector.extract_strided_slice %29 {offsets = [0, 64], sizes = [8, 32], strides = [1, 1]} : vector<8x96xf32> to vector<8x32xf32>
    %44 = arith.truncf %43 : vector<8x32xf32> to vector<8x32xbf16>
    %45 = vector.extract_strided_slice %40 {offsets = [0, 0], sizes = [8, 8], strides = [1, 1]} : vector<8x32xbf16> to vector<8x8xbf16>
    %46 = vector.extract_strided_slice %42 {offsets = [0, 0], sizes = [8, 8], strides = [1, 1]} : vector<8x32xbf16> to vector<8x8xbf16>
    %47 = vector.extract_strided_slice %44 {offsets = [0, 0], sizes = [8, 8], strides = [1, 1]} : vector<8x32xbf16> to vector<8x8xbf16>
    "tpu.trace_start"() <{level = 10 : i32, message = "qd,kd->qk"}> : () -> ()
    %cst_22 = arith.constant dense<0.000000e+00> : vector<8x8xf32>
    %48 = tpu.matmul %45, %46, %cst_22 {dimension_numbers = #tpu.dot_dimension_numbers<[1], [1], [0], [0], [0, 0, 1, 0], [], []>} : vector<8x8xbf16>, vector<8x8xbf16>, vector<8x8xf32> -> vector<8x8xf32>
    "tpu.trace_stop"() : () -> ()
    %49 = vector.broadcast %36 : vector<1x8xf32> to vector<8x8xf32>
    %50 = arith.addf %48, %49 : vector<8x8xf32>
    %cst_23 = arith.constant dense<0xFF800000> : vector<8xf32>
    %51 = vector.multi_reduction <maximumf>, %50, %cst_23 [1] : vector<8x8xf32> to vector<8xf32>
    %52 = vector.shape_cast %51 : vector<8xf32> to vector<8x1xf32>
    %53 = vector.broadcast %52 : vector<8x1xf32> to vector<8x8xf32>
    %54 = arith.subf %50, %53 : vector<8x8xf32>
    %55 = math.exp %54 : vector<8x8xf32>
    %cst_24 = arith.constant dense<0.000000e+00> : vector<8xf32>
    %56 = vector.multi_reduction <add>, %55, %cst_24 [1] : vector<8x8xf32> to vector<8xf32>
    %57 = vector.shape_cast %56 : vector<8xf32> to vector<8x1xf32>
    %58 = tpu.reciprocal %57 {approx = true} : vector<8x1xf32> -> vector<8x1xf32>
    %59 = vector.broadcast %58 : vector<8x1xf32> to vector<8x8xf32>
    %60 = arith.mulf %55, %59 : vector<8x8xf32>
    %61 = arith.truncf %60 : vector<8x8xf32> to vector<8x8xbf16>
    %cst_25 = arith.constant dense<0.000000e+00> : vector<8x8xf32>
    %62 = tpu.matmul %61, %47, %cst_25 {dimension_numbers = #tpu.dot_dimension_numbers<[1], [0], [0], [1], [0, 0, 1, 1], [], []>} : vector<8x8xbf16>, vector<8x8xbf16>, vector<8x8xf32> -> vector<8x8xf32>
    %63 = vector.extract_strided_slice %40 {offsets = [0, 8], sizes = [8, 8], strides = [1, 1]} : vector<8x32xbf16> to vector<8x8xbf16>
    %64 = vector.extract_strided_slice %42 {offsets = [0, 8], sizes = [8, 8], strides = [1, 1]} : vector<8x32xbf16> to vector<8x8xbf16>
    %65 = vector.extract_strided_slice %44 {offsets = [0, 8], sizes = [8, 8], strides = [1, 1]} : vector<8x32xbf16> to vector<8x8xbf16>
    "tpu.trace_start"() <{level = 10 : i32, message = "qd,kd->qk"}> : () -> ()
    %cst_26 = arith.constant dense<0.000000e+00> : vector<8x8xf32>
    %66 = tpu.matmul %63, %64, %cst_26 {dimension_numbers = #tpu.dot_dimension_numbers<[1], [1], [0], [0], [0, 0, 1, 0], [], []>} : vector<8x8xbf16>, vector<8x8xbf16>, vector<8x8xf32> -> vector<8x8xf32>
    "tpu.trace_stop"() : () -> ()
    %67 = vector.broadcast %36 : vector<1x8xf32> to vector<8x8xf32>
    %68 = arith.addf %66, %67 : vector<8x8xf32>
    %cst_27 = arith.constant dense<0xFF800000> : vector<8xf32>
    %69 = vector.multi_reduction <maximumf>, %68, %cst_27 [1] : vector<8x8xf32> to vector<8xf32>
    %70 = vector.shape_cast %69 : vector<8xf32> to vector<8x1xf32>
    %71 = vector.broadcast %70 : vector<8x1xf32> to vector<8x8xf32>
    %72 = arith.subf %68, %71 : vector<8x8xf32>
    %73 = math.exp %72 : vector<8x8xf32>
    %cst_28 = arith.constant dense<0.000000e+00> : vector<8xf32>
    %74 = vector.multi_reduction <add>, %73, %cst_28 [1] : vector<8x8xf32> to vector<8xf32>
    %75 = vector.shape_cast %74 : vector<8xf32> to vector<8x1xf32>
    %76 = tpu.reciprocal %75 {approx = true} : vector<8x1xf32> -> vector<8x1xf32>
    %77 = vector.broadcast %76 : vector<8x1xf32> to vector<8x8xf32>
    %78 = arith.mulf %73, %77 : vector<8x8xf32>
    %79 = arith.truncf %78 : vector<8x8xf32> to vector<8x8xbf16>
    %cst_29 = arith.constant dense<0.000000e+00> : vector<8x8xf32>
    %80 = tpu.matmul %79, %65, %cst_29 {dimension_numbers = #tpu.dot_dimension_numbers<[1], [0], [0], [1], [0, 0, 1, 1], [], []>} : vector<8x8xbf16>, vector<8x8xbf16>, vector<8x8xf32> -> vector<8x8xf32>
    %81 = vector.extract_strided_slice %40 {offsets = [0, 16], sizes = [8, 8], strides = [1, 1]} : vector<8x32xbf16> to vector<8x8xbf16>
    %82 = vector.extract_strided_slice %42 {offsets = [0, 16], sizes = [8, 8], strides = [1, 1]} : vector<8x32xbf16> to vector<8x8xbf16>
    %83 = vector.extract_strided_slice %44 {offsets = [0, 16], sizes = [8, 8], strides = [1, 1]} : vector<8x32xbf16> to vector<8x8xbf16>
    "tpu.trace_start"() <{level = 10 : i32, message = "qd,kd->qk"}> : () -> ()
    %cst_30 = arith.constant dense<0.000000e+00> : vector<8x8xf32>
    %84 = tpu.matmul %81, %82, %cst_30 {dimension_numbers = #tpu.dot_dimension_numbers<[1], [1], [0], [0], [0, 0, 1, 0], [], []>} : vector<8x8xbf16>, vector<8x8xbf16>, vector<8x8xf32> -> vector<8x8xf32>
    "tpu.trace_stop"() : () -> ()
    %85 = vector.broadcast %36 : vector<1x8xf32> to vector<8x8xf32>
    %86 = arith.addf %84, %85 : vector<8x8xf32>
    %cst_31 = arith.constant dense<0xFF800000> : vector<8xf32>
    %87 = vector.multi_reduction <maximumf>, %86, %cst_31 [1] : vector<8x8xf32> to vector<8xf32>
    %88 = vector.shape_cast %87 : vector<8xf32> to vector<8x1xf32>
    %89 = vector.broadcast %88 : vector<8x1xf32> to vector<8x8xf32>
    %90 = arith.subf %86, %89 : vector<8x8xf32>
    %91 = math.exp %90 : vector<8x8xf32>
    %cst_32 = arith.constant dense<0.000000e+00> : vector<8xf32>
    %92 = vector.multi_reduction <add>, %91, %cst_32 [1] : vector<8x8xf32> to vector<8xf32>
    %93 = vector.shape_cast %92 : vector<8xf32> to vector<8x1xf32>
    %94 = tpu.reciprocal %93 {approx = true} : vector<8x1xf32> -> vector<8x1xf32>
    %95 = vector.broadcast %94 : vector<8x1xf32> to vector<8x8xf32>
    %96 = arith.mulf %91, %95 : vector<8x8xf32>
    %97 = arith.truncf %96 : vector<8x8xf32> to vector<8x8xbf16>
    %cst_33 = arith.constant dense<0.000000e+00> : vector<8x8xf32>
    %98 = tpu.matmul %97, %83, %cst_33 {dimension_numbers = #tpu.dot_dimension_numbers<[1], [0], [0], [1], [0, 0, 1, 1], [], []>} : vector<8x8xbf16>, vector<8x8xbf16>, vector<8x8xf32> -> vector<8x8xf32>
    %99 = vector.extract_strided_slice %40 {offsets = [0, 24], sizes = [8, 8], strides = [1, 1]} : vector<8x32xbf16> to vector<8x8xbf16>
    %100 = vector.extract_strided_slice %42 {offsets = [0, 24], sizes = [8, 8], strides = [1, 1]} : vector<8x32xbf16> to vector<8x8xbf16>
    %101 = vector.extract_strided_slice %44 {offsets = [0, 24], sizes = [8, 8], strides = [1, 1]} : vector<8x32xbf16> to vector<8x8xbf16>
    "tpu.trace_start"() <{level = 10 : i32, message = "qd,kd->qk"}> : () -> ()
    %cst_34 = arith.constant dense<0.000000e+00> : vector<8x8xf32>
    %102 = tpu.matmul %99, %100, %cst_34 {dimension_numbers = #tpu.dot_dimension_numbers<[1], [1], [0], [0], [0, 0, 1, 0], [], []>} : vector<8x8xbf16>, vector<8x8xbf16>, vector<8x8xf32> -> vector<8x8xf32>
    "tpu.trace_stop"() : () -> ()
    %103 = vector.broadcast %36 : vector<1x8xf32> to vector<8x8xf32>
    %104 = arith.addf %102, %103 : vector<8x8xf32>
    %cst_35 = arith.constant dense<0xFF800000> : vector<8xf32>
    %105 = vector.multi_reduction <maximumf>, %104, %cst_35 [1] : vector<8x8xf32> to vector<8xf32>
    %106 = vector.shape_cast %105 : vector<8xf32> to vector<8x1xf32>
    %107 = vector.broadcast %106 : vector<8x1xf32> to vector<8x8xf32>
    %108 = arith.subf %104, %107 : vector<8x8xf32>
    %109 = math.exp %108 : vector<8x8xf32>
    %cst_36 = arith.constant dense<0.000000e+00> : vector<8xf32>
    %110 = vector.multi_reduction <add>, %109, %cst_36 [1] : vector<8x8xf32> to vector<8xf32>
    %111 = vector.shape_cast %110 : vector<8xf32> to vector<8x1xf32>
    %112 = tpu.reciprocal %111 {approx = true} : vector<8x1xf32> -> vector<8x1xf32>
    %113 = vector.broadcast %112 : vector<8x1xf32> to vector<8x8xf32>
    %114 = arith.mulf %109, %113 : vector<8x8xf32>
    %115 = arith.truncf %114 : vector<8x8xf32> to vector<8x8xbf16>
    %cst_37 = arith.constant dense<0.000000e+00> : vector<8x8xf32>
    %116 = tpu.matmul %115, %101, %cst_37 {dimension_numbers = #tpu.dot_dimension_numbers<[1], [0], [0], [1], [0, 0, 1, 1], [], []>} : vector<8x8xbf16>, vector<8x8xbf16>, vector<8x8xf32> -> vector<8x8xf32>
    %117 = tpu.concatenate %62, %80, %98, %116 in 1 : vector<8x8xf32>, vector<8x8xf32>, vector<8x8xf32>, vector<8x8xf32> -> vector<8x32xf32>
    %118 = arith.truncf %117 : vector<8x32xf32> to vector<8x32xbf16>
    %c0_38 = arith.constant 0 : index
    %c0_39 = arith.constant 0 : index
    %119 = vector.load %arg8[%c0_38, %c0_39] : memref<1x32xf32, #tpu.memory_space<vmem>>, vector<1x32xf32>
    %120 = vector.broadcast %119 : vector<1x32xf32> to vector<8x32xf32>
    %121 = arith.addf %1, %120 : vector<8x32xf32>
    %c0_40 = arith.constant 0 : index
    %c0_41 = arith.constant 0 : index
    %122 = vector.load %arg7[%c0_40, %c0_41] : memref<32x32xbf16, #tpu.memory_space<vmem>>, vector<32x32xbf16>
    %cst_42 = arith.constant dense<0.000000e+00> : vector<8x32xf32>
    %123 = tpu.matmul %118, %122, %cst_42 {dimension_numbers = #tpu.dot_dimension_numbers<[1], [0], [0], [1], [0, 0, 1, 1], [], []>} : vector<8x32xbf16>, vector<32x32xbf16>, vector<8x32xf32> -> vector<8x32xf32>
    %124 = arith.addf %121, %123 : vector<8x32xf32>
    %c0_43 = arith.constant 0 : index
    %c0_44 = arith.constant 0 : index
    %c0_45 = arith.constant 0 : index
    %125 = vector.load %arg9[%c0_43, %c0_44, %c0_45] : memref<1x8x32xf32, #tpu.memory_space<vmem>>, vector<1x8x32xf32>
    %126 = vector.shape_cast %125 : vector<1x8x32xf32> to vector<8x32xf32>
    %127 = vector.shape_cast %124 : vector<8x32xf32> to vector<1x8x32xf32>
    tpu.vector_store %arg9[%c0_43, %c0_44, %c0_45], %127 {strides = array<i32>} : memref<1x8x32xf32, #tpu.memory_space<vmem>>, vector<1x8x32xf32>,
    return
  }
  func.func @transform_0(%arg0: i32) -> (i32, i32, i32) {
    %c0_i32 = arith.constant 0 : i32
    %c0_i32_0 = arith.constant 0 : i32
    %c0_i32_1 = arith.constant 0 : i32
    return %arg0, %c0_i32, %c0_i32_0 : i32, i32, i32
  }
  func.func @transform_1(%arg0: i32) -> (i32, i32) {
    %c0_i32 = arith.constant 0 : i32
    %c0_i32_0 = arith.constant 0 : i32
    %c0_i32_1 = arith.constant 0 : i32
    return %c0_i32, %c0_i32_0 : i32, i32
  }
  func.func @transform_2(%arg0: i32) -> (i32, i32) {
    %c0_i32 = arith.constant 0 : i32
    %c0_i32_0 = arith.constant 0 : i32
    %c0_i32_1 = arith.constant 0 : i32
    return %c0_i32, %c0_i32_0 : i32, i32
  }
  func.func @transform_3(%arg0: i32) -> (i32, i32) {
    %c0_i32 = arith.constant 0 : i32
    %c0_i32_0 = arith.constant 0 : i32
    %c0_i32_1 = arith.constant 0 : i32
    return %c0_i32, %c0_i32_0 : i32, i32
  }
  func.func @transform_4(%arg0: i32) -> (i32, i32) {
    %c0_i32 = arith.constant 0 : i32
    %c0_i32_0 = arith.constant 0 : i32
    %c0_i32_1 = arith.constant 0 : i32
    return %c0_i32, %c0_i32_0 : i32, i32
  }
  func.func @transform_5(%arg0: i32) -> (i32, i32, i32) {
    %c0_i32 = arith.constant 0 : i32
    %c0_i32_0 = arith.constant 0 : i32
    %c0_i32_1 = arith.constant 0 : i32
    return %arg0, %c0_i32, %c0_i32_0 : i32, i32, i32
  }
  func.func @transform_6(%arg0: i32) -> (i32, i32) {
    %c0_i32 = arith.constant 0 : i32
    %c0_i32_0 = arith.constant 0 : i32
    %c0_i32_1 = arith.constant 0 : i32
    return %c0_i32, %c0_i32_0 : i32, i32
  }
  func.func @transform_7(%arg0: i32) -> (i32, i32) {
    %c0_i32 = arith.constant 0 : i32
    %c0_i32_0 = arith.constant 0 : i32
    %c0_i32_1 = arith.constant 0 : i32
    return %c0_i32, %c0_i32_0 : i32, i32
  }
  func.func @transform_8(%arg0: i32) -> (i32, i32, i32) {
    %c0_i32 = arith.constant 0 : i32
    %c0_i32_0 = arith.constant 0 : i32
    %c0_i32_1 = arith.constant 0 : i32
    return %arg0, %c0_i32, %c0_i32_0 : i32, i32, i32
  }
}

module attributes {stable_mosaic.version = 11 : i64} {
  func.func @_mha_block_kernel(%arg0: i32, %arg1: memref<1x8x32xf32, #tpu.memory_space<vmem>>, %arg2: memref<1x32xf32, #tpu.memory_space<vmem>>, %arg3: memref<1x32xf32, #tpu.memory_space<vmem>>, %arg4: memref<32x96xbf16, #tpu.memory_space<vmem>>, %arg5: memref<1x96xf32, #tpu.memory_space<vmem>>, %arg6: memref<1x1x8xf32, #tpu.memory_space<vmem>>, %arg7: memref<32x32xbf16, #tpu.memory_space<vmem>>, %arg8: memref<1x32xf32, #tpu.memory_space<vmem>>, %arg9: memref<1x8x32xf32, #tpu.memory_space<vmem>>) attributes {dimension_semantics = [#tpu.dimension_semantics<parallel>], iteration_bounds = array<i64: 2>, scalar_prefetch = 0 : i64, scratch_operands = 0 : i64, tpu.core_type = #tpu.core_type<tc>, window_params = [{transform_indices = @transform_0, window_bounds = array<i64: 1, 8, 32>}, {pipeline_mode = #tpu.pipeline_mode<synchronous>, transform_indices = @transform_1, window_bounds = array<i64: 1, 32>}, {pipeline_mode = #tpu.pipeline_mode<synchronous>, transform_indices = @transform_2, window_bounds = array<i64: 1, 32>}, {pipeline_mode = #tpu.pipeline_mode<synchronous>, transform_indices = @transform_3, window_bounds = array<i64: 32, 96>}, {pipeline_mode = #tpu.pipeline_mode<synchronous>, transform_indices = @transform_4, window_bounds = array<i64: 1, 96>}, {transform_indices = @transform_5, window_bounds = array<i64: 1, 1, 8>}, {pipeline_mode = #tpu.pipeline_mode<synchronous>, transform_indices = @transform_6, window_bounds = array<i64: 32, 32>}, {pipeline_mode = #tpu.pipeline_mode<synchronous>, transform_indices = @transform_7, window_bounds = array<i64: 1, 32>}, {transform_indices = @transform_8, window_bounds = array<i64: 1, 8, 32>}]} {
    %c0 = arith.constant 0 : index
    %c0_0 = arith.constant 0 : index
    %c0_1 = arith.constant 0 : index
    %0 = vector.load %arg1[%c0, %c0_0, %c0_1] : memref<1x8x32xf32, #tpu.memory_space<vmem>>, vector<1x8x32xf32>
    %1 = vector.shape_cast %0 : vector<1x8x32xf32> to vector<8x32xf32>
    %c0_2 = arith.constant 0 : index
    %c0_3 = arith.constant 0 : index
    %2 = vector.load %arg2[%c0_2, %c0_3] : memref<1x32xf32, #tpu.memory_space<vmem>>, vector<1x32xf32>
    %c0_4 = arith.constant 0 : index
    %c0_5 = arith.constant 0 : index
    %3 = vector.load %arg3[%c0_4, %c0_5] : memref<1x32xf32, #tpu.memory_space<vmem>>, vector<1x32xf32>
    %cst = arith.constant dense<0.000000e+00> : vector<8xf32>
    %4 = vector.multi_reduction <add>, %1, %cst [1] : vector<8x32xf32> to vector<8xf32>
    %5 = vector.shape_cast %4 : vector<8xf32> to vector<8x1xf32>
    %cst_6 = arith.constant 3.200000e+01 : f32
    %6 = vector.broadcast %cst_6 : f32 to vector<8x1xf32>
    %7 = arith.divf %5, %6 : vector<8x1xf32>
    %8 = vector.broadcast %7 : vector<8x1xf32> to vector<8x32xf32>
    %9 = arith.subf %1, %8 : vector<8x32xf32>
    %10 = arith.mulf %9, %9 : vector<8x32xf32>
    %cst_7 = arith.constant dense<0.000000e+00> : vector<8xf32>
    %11 = vector.multi_reduction <add>, %10, %cst_7 [1] : vector<8x32xf32> to vector<8xf32>
    %12 = vector.shape_cast %11 : vector<8xf32> to vector<8x1xf32>
    %cst_8 = arith.constant 0.0322580636 : f32
    %13 = vector.broadcast %cst_8 : f32 to vector<8x1xf32>
    %14 = arith.mulf %12, %13 : vector<8x1xf32>
    %15 = vector.broadcast %2 : vector<1x32xf32> to vector<8x32xf32>
    %16 = arith.mulf %15, %9 : vector<8x32xf32>
    %17 = math.sqrt %14 : vector<8x1xf32>
    %cst_9 = arith.constant 9.99999997E-7 : f32
    %18 = vector.broadcast %cst_9 : f32 to vector<8x1xf32>
    %19 = arith.addf %17, %18 : vector<8x1xf32>
    %20 = vector.broadcast %19 : vector<8x1xf32> to vector<8x32xf32>
    %21 = arith.divf %16, %20 : vector<8x32xf32>
    %22 = vector.broadcast %3 : vector<1x32xf32> to vector<8x32xf32>
    %23 = arith.addf %21, %22 : vector<8x32xf32>
    %24 = arith.truncf %23 : vector<8x32xf32> to vector<8x32xbf16>
    %c0_10 = arith.constant 0 : index
    %c0_11 = arith.constant 0 : index
    %25 = vector.load %arg4[%c0_10, %c0_11] : memref<32x96xbf16, #tpu.memory_space<vmem>>, vector<32x96xbf16>
    %cst_12 = arith.constant dense<0.000000e+00> : vector<8x96xf32>
    %26 = tpu.matmul %24, %25, %cst_12 {dimension_numbers = #tpu.dot_dimension_numbers<[1], [0], [0], [1], [0, 0, 1, 1], [], []>} : vector<8x32xbf16>, vector<32x96xbf16>, vector<8x96xf32> -> vector<8x96xf32>
    %c0_13 = arith.constant 0 : index
    %c0_14 = arith.constant 0 : index
    %27 = vector.load %arg5[%c0_13, %c0_14] : memref<1x96xf32, #tpu.memory_space<vmem>>, vector<1x96xf32>
    %28 = vector.broadcast %27 : vector<1x96xf32> to vector<8x96xf32>
    %29 = arith.addf %26, %28 : vector<8x96xf32>
    %c0_15 = arith.constant 0 : index
    %c0_16 = arith.constant 0 : index
    %c0_17 = arith.constant 0 : index
    %30 = vector.load %arg6[%c0_15, %c0_16, %c0_17] : memref<1x1x8xf32, #tpu.memory_space<vmem>>, vector<1x1x8xf32>
    %31 = vector.shape_cast %30 : vector<1x1x8xf32> to vector<1x8xf32>
    %cst_18 = arith.constant 0.000000e+00 : f32
    %32 = vector.broadcast %cst_18 : f32 to vector<1x8xf32>
    %33 = arith.cmpf oeq, %31, %32 : vector<1x8xf32>
    %cst_19 = arith.constant -1.000000e+09 : f32
    %cst_20 = arith.constant 0.000000e+00 : f32
    %34 = vector.broadcast %cst_19 : f32 to vector<1x8xf32>
    %35 = vector.broadcast %cst_20 : f32 to vector<1x8xf32>
    %36 = arith.select %33, %34, %35 : vector<1x8xi1>, vector<1x8xf32>
    %37 = vector.extract_strided_slice %29 {offsets = [0, 0], sizes = [8, 32], strides = [1, 1]} : vector<8x96xf32> to vector<8x32xf32>
    %cst_21 = arith.constant 0.353553385 : f32
    %38 = vector.broadcast %cst_21 : f32 to vector<8x32xf32>
    %39 = arith.mulf %37, %38 : vector<8x32xf32>
    %40 = arith.truncf %39 : vector<8x32xf32> to vector<8x32xbf16>
    %41 = vector.extract_strided_slice %29 {offsets = [0, 32], sizes = [8, 32], strides = [1, 1]} : vector<8x96xf32> to vector<8x32xf32>
    %42 = arith.truncf %41 : vector<8x32xf32> to vector<8x32xbf16>
    %43 = vector.extract_strided_slice %29 {offsets = [0, 64], sizes = [8, 32], strides = [1, 1]} : vector<8x96xf32> to vector<8x32xf32>
    %44 = arith.truncf %43 : vector<8x32xf32> to vector<8x32xbf16>
    %45 = vector.extract_strided_slice %40 {offsets = [0, 0], sizes = [8, 8], strides = [1, 1]} : vector<8x32xbf16> to vector<8x8xbf16>
    %46 = vector.extract_strided_slice %42 {offsets = [0, 0], sizes = [8, 8], strides = [1, 1]} : vector<8x32xbf16> to vector<8x8xbf16>
    %47 = vector.extract_strided_slice %44 {offsets = [0, 0], sizes = [8, 8], strides = [1, 1]} : vector<8x32xbf16> to vector<8x8xbf16>
    "tpu.trace_start"() <{level = 10 : i32, message = "qd,kd->qk"}> : () -> ()
    %cst_22 = arith.constant dense<0.000000e+00> : vector<8x8xf32>
    %48 = tpu.matmul %45, %46, %cst_22 {dimension_numbers = #tpu.dot_dimension_numbers<[1], [1], [0], [0], [0, 0, 1, 0], [], []>} : vector<8x8xbf16>, vector<8x8xbf16>, vector<8x8xf32> -> vector<8x8xf32>
    "tpu.trace_stop"() : () -> ()
    %49 = vector.broadcast %36 : vector<1x8xf32> to vector<8x8xf32>
    %50 = arith.addf %48, %49 : vector<8x8xf32>
    %cst_23 = arith.constant dense<0xFF800000> : vector<8xf32>
    %51 = vector.multi_reduction <maximumf>, %50, %cst_23 [1] : vector<8x8xf32> to vector<8xf32>
    %52 = vector.shape_cast %51 : vector<8xf32> to vector<8x1xf32>
    %53 = vector.broadcast %52 : vector<8x1xf32> to vector<8x8xf32>
    %54 = arith.subf %50, %53 : vector<8x8xf32>
    %55 = math.exp %54 : vector<8x8xf32>
    %cst_24 = arith.constant dense<0.000000e+00> : vector<8xf32>
    %56 = vector.multi_reduction <add>, %55, %cst_24 [1] : vector<8x8xf32> to vector<8xf32>
    %57 = vector.shape_cast %56 : vector<8xf32> to vector<8x1xf32>
    %58 = tpu.reciprocal %57 {approx = true} : vector<8x1xf32> -> vector<8x1xf32>
    %59 = vector.broadcast %58 : vector<8x1xf32> to vector<8x8xf32>
    %60 = arith.mulf %55, %59 : vector<8x8xf32>
    %61 = arith.truncf %60 : vector<8x8xf32> to vector<8x8xbf16>
    %cst_25 = arith.constant dense<0.000000e+00> : vector<8x8xf32>
    %62 = tpu.matmul %61, %47, %cst_25 {dimension_numbers = #tpu.dot_dimension_numbers<[1], [0], [0], [1], [0, 0, 1, 1], [], []>} : vector<8x8xbf16>, vector<8x8xbf16>, vector<8x8xf32> -> vector<8x8xf32>
    %63 = vector.extract_strided_slice %40 {offsets = [0, 8], sizes = [8, 8], strides = [1, 1]} : vector<8x32xbf16> to vector<8x8xbf16>
    %64 = vector.extract_strided_slice %42 {offsets = [0, 8], sizes = [8, 8], strides = [1, 1]} : vector<8x32xbf16> to vector<8x8xbf16>
    %65 = vector.extract_strided_slice %44 {offsets = [0, 8], sizes = [8, 8], strides = [1, 1]} : vector<8x32xbf16> to vector<8x8xbf16>
    "tpu.trace_start"() <{level = 10 : i32, message = "qd,kd->qk"}> : () -> ()
    %cst_26 = arith.constant dense<0.000000e+00> : vector<8x8xf32>
    %66 = tpu.matmul %63, %64, %cst_26 {dimension_numbers = #tpu.dot_dimension_numbers<[1], [1], [0], [0], [0, 0, 1, 0], [], []>} : vector<8x8xbf16>, vector<8x8xbf16>, vector<8x8xf32> -> vector<8x8xf32>
    "tpu.trace_stop"() : () -> ()
    %67 = vector.broadcast %36 : vector<1x8xf32> to vector<8x8xf32>
    %68 = arith.addf %66, %67 : vector<8x8xf32>
    %cst_27 = arith.constant dense<0xFF800000> : vector<8xf32>
    %69 = vector.multi_reduction <maximumf>, %68, %cst_27 [1] : vector<8x8xf32> to vector<8xf32>
    %70 = vector.shape_cast %69 : vector<8xf32> to vector<8x1xf32>
    %71 = vector.broadcast %70 : vector<8x1xf32> to vector<8x8xf32>
    %72 = arith.subf %68, %71 : vector<8x8xf32>
    %73 = math.exp %72 : vector<8x8xf32>
    %cst_28 = arith.constant dense<0.000000e+00> : vector<8xf32>
    %74 = vector.multi_reduction <add>, %73, %cst_28 [1] : vector<8x8xf32> to vector<8xf32>
    %75 = vector.shape_cast %74 : vector<8xf32> to vector<8x1xf32>
    %76 = tpu.reciprocal %75 {approx = true} : vector<8x1xf32> -> vector<8x1xf32>
    %77 = vector.broadcast %76 : vector<8x1xf32> to vector<8x8xf32>
    %78 = arith.mulf %73, %77 : vector<8x8xf32>
    %79 = arith.truncf %78 : vector<8x8xf32> to vector<8x8xbf16>
    %cst_29 = arith.constant dense<0.000000e+00> : vector<8x8xf32>
    %80 = tpu.matmul %79, %65, %cst_29 {dimension_numbers = #tpu.dot_dimension_numbers<[1], [0], [0], [1], [0, 0, 1, 1], [], []>} : vector<8x8xbf16>, vector<8x8xbf16>, vector<8x8xf32> -> vector<8x8xf32>
    %81 = vector.extract_strided_slice %40 {offsets = [0, 16], sizes = [8, 8], strides = [1, 1]} : vector<8x32xbf16> to vector<8x8xbf16>
    %82 = vector.extract_strided_slice %42 {offsets = [0, 16], sizes = [8, 8], strides = [1, 1]} : vector<8x32xbf16> to vector<8x8xbf16>
    %83 = vector.extract_strided_slice %44 {offsets = [0, 16], sizes = [8, 8], strides = [1, 1]} : vector<8x32xbf16> to vector<8x8xbf16>
    "tpu.trace_start"() <{level = 10 : i32, message = "qd,kd->qk"}> : () -> ()
    %cst_30 = arith.constant dense<0.000000e+00> : vector<8x8xf32>
    %84 = tpu.matmul %81, %82, %cst_30 {dimension_numbers = #tpu.dot_dimension_numbers<[1], [1], [0], [0], [0, 0, 1, 0], [], []>} : vector<8x8xbf16>, vector<8x8xbf16>, vector<8x8xf32> -> vector<8x8xf32>
    "tpu.trace_stop"() : () -> ()
    %85 = vector.broadcast %36 : vector<1x8xf32> to vector<8x8xf32>
    %86 = arith.addf %84, %85 : vector<8x8xf32>
    %cst_31 = arith.constant dense<0xFF800000> : vector<8xf32>
    %87 = vector.multi_reduction <maximumf>, %86, %cst_31 [1] : vector<8x8xf32> to vector<8xf32>
    %88 = vector.shape_cast %87 : vector<8xf32> to vector<8x1xf32>
    %89 = vector.broadcast %88 : vector<8x1xf32> to vector<8x8xf32>
    %90 = arith.subf %86, %89 : vector<8x8xf32>
    %91 = math.exp %90 : vector<8x8xf32>
    %cst_32 = arith.constant dense<0.000000e+00> : vector<8xf32>
    %92 = vector.multi_reduction <add>, %91, %cst_32 [1] : vector<8x8xf32> to vector<8xf32>
    %93 = vector.shape_cast %92 : vector<8xf32> to vector<8x1xf32>
    %94 = tpu.reciprocal %93 {approx = true} : vector<8x1xf32> -> vector<8x1xf32>
    %95 = vector.broadcast %94 : vector<8x1xf32> to vector<8x8xf32>
    %96 = arith.mulf %91, %95 : vector<8x8xf32>
    %97 = arith.truncf %96 : vector<8x8xf32> to vector<8x8xbf16>
    %cst_33 = arith.constant dense<0.000000e+00> : vector<8x8xf32>
    %98 = tpu.matmul %97, %83, %cst_33 {dimension_numbers = #tpu.dot_dimension_numbers<[1], [0], [0], [1], [0, 0, 1, 1], [], []>} : vector<8x8xbf16>, vector<8x8xbf16>, vector<8x8xf32> -> vector<8x8xf32>
    %99 = vector.extract_strided_slice %40 {offsets = [0, 24], sizes = [8, 8], strides = [1, 1]} : vector<8x32xbf16> to vector<8x8xbf16>
    %100 = vector.extract_strided_slice %42 {offsets = [0, 24], sizes = [8, 8], strides = [1, 1]} : vector<8x32xbf16> to vector<8x8xbf16>
    %101 = vector.extract_strided_slice %44 {offsets = [0, 24], sizes = [8, 8], strides = [1, 1]} : vector<8x32xbf16> to vector<8x8xbf16>
    "tpu.trace_start"() <{level = 10 : i32, message = "qd,kd->qk"}> : () -> ()
    %cst_34 = arith.constant dense<0.000000e+00> : vector<8x8xf32>
    %102 = tpu.matmul %99, %100, %cst_34 {dimension_numbers = #tpu.dot_dimension_numbers<[1], [1], [0], [0], [0, 0, 1, 0], [], []>} : vector<8x8xbf16>, vector<8x8xbf16>, vector<8x8xf32> -> vector<8x8xf32>
    "tpu.trace_stop"() : () -> ()
    %103 = vector.broadcast %36 : vector<1x8xf32> to vector<8x8xf32>
    %104 = arith.addf %102, %103 : vector<8x8xf32>
    %cst_35 = arith.constant dense<0xFF800000> : vector<8xf32>
    %105 = vector.multi_reduction <maximumf>, %104, %cst_35 [1] : vector<8x8xf32> to vector<8xf32>
    %106 = vector.shape_cast %105 : vector<8xf32> to vector<8x1xf32>
    %107 = vector.broadcast %106 : vector<8x1xf32> to vector<8x8xf32>
    %108 = arith.subf %104, %107 : vector<8x8xf32>
    %109 = math.exp %108 : vector<8x8xf32>
    %cst_36 = arith.constant dense<0.000000e+00> : vector<8xf32>
    %110 = vector.multi_reduction <add>, %109, %cst_36 [1] : vector<8x8xf32> to vector<8xf32>
    %111 = vector.shape_cast %110 : vector<8xf32> to vector<8x1xf32>
    %112 = tpu.reciprocal %111 {approx = true} : vector<8x1xf32> -> vector<8x1xf32>
    %113 = vector.broadcast %112 : vector<8x1xf32> to vector<8x8xf32>
    %114 = arith.mulf %109, %113 : vector<8x8xf32>
    %115 = arith.truncf %114 : vector<8x8xf32> to vector<8x8xbf16>
    %cst_37 = arith.constant dense<0.000000e+00> : vector<8x8xf32>
    %116 = tpu.matmul %115, %101, %cst_37 {dimension_numbers = #tpu.dot_dimension_numbers<[1], [0], [0], [1], [0, 0, 1, 1], [], []>} : vector<8x8xbf16>, vector<8x8xbf16>, vector<8x8xf32> -> vector<8x8xf32>
    %117 = tpu.concatenate %62, %80, %98, %116 in 1 : vector<8x8xf32>, vector<8x8xf32>, vector<8x8xf32>, vector<8x8xf32> -> vector<8x32xf32>
    %118 = arith.truncf %117 : vector<8x32xf32> to vector<8x32xbf16>
    %c0_38 = arith.constant 0 : index
    %c0_39 = arith.constant 0 : index
    %119 = vector.load %arg8[%c0_38, %c0_39] : memref<1x32xf32, #tpu.memory_space<vmem>>, vector<1x32xf32>
    %120 = vector.broadcast %119 : vector<1x32xf32> to vector<8x32xf32>
    %121 = arith.addf %1, %120 : vector<8x32xf32>
    %c0_40 = arith.constant 0 : index
    %c0_41 = arith.constant 0 : index
    %122 = vector.load %arg7[%c0_40, %c0_41] : memref<32x32xbf16, #tpu.memory_space<vmem>>, vector<32x32xbf16>
    %cst_42 = arith.constant dense<0.000000e+00> : vector<8x32xf32>
    %123 = tpu.matmul %118, %122, %cst_42 {dimension_numbers = #tpu.dot_dimension_numbers<[1], [0], [0], [1], [0, 0, 1, 1], [], []>} : vector<8x32xbf16>, vector<32x32xbf16>, vector<8x32xf32> -> vector<8x32xf32>
    %124 = arith.addf %121, %123 : vector<8x32xf32>
    %c0_43 = arith.constant 0 : index
    %c0_44 = arith.constant 0 : index
    %c0_45 = arith.constant 0 : index
    %125 = vector.load %arg9[%c0_43, %c0_44, %c0_45] : memref<1x8x32xf32, #tpu.memory_space<vmem>>, vector<1x8x32xf32>
    %126 = vector.shape_cast %125 : vector<1x8x32xf32> to vector<8x32xf32>
    %127 = vector.shape_cast %124 : vector<8x32xf32> to vector<1x8x32xf32>
    tpu.vector_store %arg9[%c0_43, %c0_44, %c0_45], %127 {strides = array<i32>} : memref<1x8x32xf32, #tpu.memory_space<vmem>>, vector<1x8x32xf32>,
    return
  }
  func.func @transform_0(%arg0: i32) -> (i32, i32, i32) {
    %c0_i32 = arith.constant 0 : i32
    %c0_i32_0 = arith.constant 0 : i32
    %c0_i32_1 = arith.constant 0 : i32
    return %arg0, %c0_i32, %c0_i32_0 : i32, i32, i32
  }
  func.func @transform_1(%arg0: i32) -> (i32, i32) {
    %c0_i32 = arith.constant 0 : i32
    %c0_i32_0 = arith.constant 0 : i32
    %c0_i32_1 = arith.constant 0 : i32
    return %c0_i32, %c0_i32_0 : i32, i32
  }
  func.func @transform_2(%arg0: i32) -> (i32, i32) {
    %c0_i32 = arith.constant 0 : i32
    %c0_i32_0 = arith.constant 0 : i32
    %c0_i32_1 = arith.constant 0 : i32
    return %c0_i32, %c0_i32_0 : i32, i32
  }
  func.func @transform_3(%arg0: i32) -> (i32, i32) {
    %c0_i32 = arith.constant 0 : i32
    %c0_i32_0 = arith.constant 0 : i32
    %c0_i32_1 = arith.constant 0 : i32
    return %c0_i32, %c0_i32_0 : i32, i32
  }
  func.func @transform_4(%arg0: i32) -> (i32, i32) {
    %c0_i32 = arith.constant 0 : i32
    %c0_i32_0 = arith.constant 0 : i32
    %c0_i32_1 = arith.constant 0 : i32
    return %c0_i32, %c0_i32_0 : i32, i32
  }
  func.func @transform_5(%arg0: i32) -> (i32, i32, i32) {
    %c0_i32 = arith.constant 0 : i32
    %c0_i32_0 = arith.constant 0 : i32
    %c0_i32_1 = arith.constant 0 : i32
    return %arg0, %c0_i32, %c0_i32_0 : i32, i32, i32
  }
  func.func @transform_6(%arg0: i32) -> (i32, i32) {
    %c0_i32 = arith.constant 0 : i32
    %c0_i32_0 = arith.constant 0 : i32
    %c0_i32_1 = arith.constant 0 : i32
    return %c0_i32, %c0_i32_0 : i32, i32
  }
  func.func @transform_7(%arg0: i32) -> (i32, i32) {
    %c0_i32 = arith.constant 0 : i32
    %c0_i32_0 = arith.constant 0 : i32
    %c0_i32_1 = arith.constant 0 : i32
    return %c0_i32, %c0_i32_0 : i32, i32
  }
  func.func @transform_8(%arg0: i32) -> (i32, i32, i32) {
    %c0_i32 = arith.constant 0 : i32
    %c0_i32_0 = arith.constant 0 : i32
    %c0_i32_1 = arith.constant 0 : i32
    return %arg0, %c0_i32, %c0_i32_0 : i32, i32, i32
  }
}

module attributes {stable_mosaic.version = 11 : i64} {
  func.func @_ln_ffn_kernel(%arg0: i32, %arg1: i32, %arg2: memref<16x32xf32, #tpu.memory_space<vmem>>, %arg3: memref<1x32xf32, #tpu.memory_space<vmem>>, %arg4: memref<1x32xf32, #tpu.memory_space<vmem>>, %arg5: memref<32x64xbf16, #tpu.memory_space<vmem>>, %arg6: memref<1x64xf32, #tpu.memory_space<vmem>>, %arg7: memref<64x32xbf16, #tpu.memory_space<vmem>>, %arg8: memref<1x32xf32, #tpu.memory_space<vmem>>, %arg9: memref<16x32xf32, #tpu.memory_space<vmem>>, %arg10: memref<16x32xbf16, #tpu.memory_space<vmem>>, %arg11: memref<16x32xf32, #tpu.memory_space<vmem>>) attributes {dimension_semantics = [#tpu.dimension_semantics<parallel>, #tpu.dimension_semantics<arbitrary>], iteration_bounds = array<i64: 1, 1>, scalar_prefetch = 0 : i64, scratch_operands = 2 : i64, tpu.core_type = #tpu.core_type<tc>, window_params = [{transform_indices = @transform_0, window_bounds = array<i64: 16, 32>}, {pipeline_mode = #tpu.pipeline_mode<synchronous>, transform_indices = @transform_1, window_bounds = array<i64: 1, 32>}, {pipeline_mode = #tpu.pipeline_mode<synchronous>, transform_indices = @transform_2, window_bounds = array<i64: 1, 32>}, {transform_indices = @transform_3, window_bounds = array<i64: 32, 64>}, {transform_indices = @transform_4, window_bounds = array<i64: 1, 64>}, {transform_indices = @transform_5, window_bounds = array<i64: 64, 32>}, {pipeline_mode = #tpu.pipeline_mode<synchronous>, transform_indices = @transform_6, window_bounds = array<i64: 1, 32>}, {transform_indices = @transform_7, window_bounds = array<i64: 16, 32>}]} {
    %c0_i32 = arith.constant 0 : i32
    %0 = arith.cmpi eq, %arg1, %c0_i32 : i32
    %1 = arith.extui %0 : i1 to i32
    %c0_i32_0 = arith.constant 0 : i32
    %2 = arith.cmpi ne, %1, %c0_i32_0 : i32
    scf.if %2 {
      %c0_16 = arith.constant 0 : index
      %c0_17 = arith.constant 0 : index
      %20 = vector.load %arg2[%c0_16, %c0_17] : memref<16x32xf32, #tpu.memory_space<vmem>>, vector<16x32xf32>
      %c0_18 = arith.constant 0 : index
      %c0_19 = arith.constant 0 : index
      %21 = vector.load %arg3[%c0_18, %c0_19] : memref<1x32xf32, #tpu.memory_space<vmem>>, vector<1x32xf32>
      %c0_20 = arith.constant 0 : index
      %c0_21 = arith.constant 0 : index
      %22 = vector.load %arg4[%c0_20, %c0_21] : memref<1x32xf32, #tpu.memory_space<vmem>>, vector<1x32xf32>
      %cst_22 = arith.constant dense<0.000000e+00> : vector<16xf32>
      %23 = vector.multi_reduction <add>, %20, %cst_22 [1] : vector<16x32xf32> to vector<16xf32>
      %24 = vector.shape_cast %23 : vector<16xf32> to vector<16x1xf32>
      %cst_23 = arith.constant 3.200000e+01 : f32
      %25 = vector.broadcast %cst_23 : f32 to vector<16x1xf32>
      %26 = arith.divf %24, %25 : vector<16x1xf32>
      %27 = vector.broadcast %26 : vector<16x1xf32> to vector<16x32xf32>
      %28 = arith.subf %20, %27 : vector<16x32xf32>
      %29 = arith.mulf %28, %28 : vector<16x32xf32>
      %cst_24 = arith.constant dense<0.000000e+00> : vector<16xf32>
      %30 = vector.multi_reduction <add>, %29, %cst_24 [1] : vector<16x32xf32> to vector<16xf32>
      %31 = vector.shape_cast %30 : vector<16xf32> to vector<16x1xf32>
      %cst_25 = arith.constant 0.0322580636 : f32
      %32 = vector.broadcast %cst_25 : f32 to vector<16x1xf32>
      %33 = arith.mulf %31, %32 : vector<16x1xf32>
      %34 = vector.broadcast %21 : vector<1x32xf32> to vector<16x32xf32>
      %35 = arith.mulf %34, %28 : vector<16x32xf32>
      %36 = math.sqrt %33 : vector<16x1xf32>
      %cst_26 = arith.constant 9.99999997E-7 : f32
      %37 = vector.broadcast %cst_26 : f32 to vector<16x1xf32>
      %38 = arith.addf %36, %37 : vector<16x1xf32>
      %39 = vector.broadcast %38 : vector<16x1xf32> to vector<16x32xf32>
      %40 = arith.divf %35, %39 : vector<16x32xf32>
      %41 = vector.broadcast %22 : vector<1x32xf32> to vector<16x32xf32>
      %42 = arith.addf %40, %41 : vector<16x32xf32>
      %43 = arith.truncf %42 : vector<16x32xf32> to vector<16x32xbf16>
      %c0_27 = arith.constant 0 : index
      %c0_28 = arith.constant 0 : index
      %44 = vector.load %arg10[%c0_27, %c0_28] : memref<16x32xbf16, #tpu.memory_space<vmem>>, vector<16x32xbf16>
      tpu.vector_store %arg10[%c0_27, %c0_28], %43 {strides = array<i32>} : memref<16x32xbf16, #tpu.memory_space<vmem>>, vector<16x32xbf16>,
      %c0_29 = arith.constant 0 : index
      %c0_30 = arith.constant 0 : index
      %45 = vector.load %arg8[%c0_29, %c0_30] : memref<1x32xf32, #tpu.memory_space<vmem>>, vector<1x32xf32>
      %46 = vector.broadcast %45 : vector<1x32xf32> to vector<16x32xf32>
      %47 = arith.addf %20, %46 : vector<16x32xf32>
      %c0_31 = arith.constant 0 : index
      %c0_32 = arith.constant 0 : index
      %48 = vector.load %arg11[%c0_31, %c0_32] : memref<16x32xf32, #tpu.memory_space<vmem>>, vector<16x32xf32>
      tpu.vector_store %arg11[%c0_31, %c0_32], %47 {strides = array<i32>} : memref<16x32xf32, #tpu.memory_space<vmem>>, vector<16x32xf32>,
    } else {
    }
    %c0 = arith.constant 0 : index
    %c0_1 = arith.constant 0 : index
    %3 = vector.load %arg10[%c0, %c0_1] : memref<16x32xbf16, #tpu.memory_space<vmem>>, vector<16x32xbf16>
    %c0_2 = arith.constant 0 : index
    %c0_3 = arith.constant 0 : index
    %4 = vector.load %arg5[%c0_2, %c0_3] : memref<32x64xbf16, #tpu.memory_space<vmem>>, vector<32x64xbf16>
    %cst = arith.constant dense<0.000000e+00> : vector<16x64xf32>
    %5 = tpu.matmul %3, %4, %cst {dimension_numbers = #tpu.dot_dimension_numbers<[1], [0], [0], [1], [0, 0, 1, 1], [], []>} : vector<16x32xbf16>, vector<32x64xbf16>, vector<16x64xf32> -> vector<16x64xf32>
    %c0_4 = arith.constant 0 : index
    %c0_5 = arith.constant 0 : index
    %6 = vector.load %arg6[%c0_4, %c0_5] : memref<1x64xf32, #tpu.memory_space<vmem>>, vector<1x64xf32>
    %7 = vector.broadcast %6 : vector<1x64xf32> to vector<16x64xf32>
    %8 = arith.addf %5, %7 : vector<16x64xf32>
    %cst_6 = arith.constant 0.000000e+00 : f32
    %9 = vector.broadcast %cst_6 : f32 to vector<16x64xf32>
    %10 = arith.maximumf %8, %9 : vector<16x64xf32>
    %c0_7 = arith.constant 0 : index
    %c0_8 = arith.constant 0 : index
    %11 = vector.load %arg11[%c0_7, %c0_8] : memref<16x32xf32, #tpu.memory_space<vmem>>, vector<16x32xf32>
    %12 = arith.truncf %10 : vector<16x64xf32> to vector<16x64xbf16>
    %c0_9 = arith.constant 0 : index
    %c0_10 = arith.constant 0 : index
    %13 = vector.load %arg7[%c0_9, %c0_10] : memref<64x32xbf16, #tpu.memory_space<vmem>>, vector<64x32xbf16>
    %cst_11 = arith.constant dense<0.000000e+00> : vector<16x32xf32>
    %14 = tpu.matmul %12, %13, %cst_11 {dimension_numbers = #tpu.dot_dimension_numbers<[1], [0], [0], [1], [0, 0, 1, 1], [], []>} : vector<16x64xbf16>, vector<64x32xbf16>, vector<16x32xf32> -> vector<16x32xf32>
    %15 = arith.addf %11, %14 : vector<16x32xf32>
    %c0_12 = arith.constant 0 : index
    %c0_13 = arith.constant 0 : index
    %16 = vector.load %arg11[%c0_12, %c0_13] : memref<16x32xf32, #tpu.memory_space<vmem>>, vector<16x32xf32>
    tpu.vector_store %arg11[%c0_12, %c0_13], %15 {strides = array<i32>} : memref<16x32xf32, #tpu.memory_space<vmem>>, vector<16x32xf32>,
    %c0_i32_14 = arith.constant 0 : i32
    %17 = arith.cmpi eq, %arg1, %c0_i32_14 : i32
    %18 = arith.extui %17 : i1 to i32
    %c0_i32_15 = arith.constant 0 : i32
    %19 = arith.cmpi ne, %18, %c0_i32_15 : i32
    scf.if %19 {
      %c0_16 = arith.constant 0 : index
      %c0_17 = arith.constant 0 : index
      %20 = vector.load %arg11[%c0_16, %c0_17] : memref<16x32xf32, #tpu.memory_space<vmem>>, vector<16x32xf32>
      %c0_18 = arith.constant 0 : index
      %c0_19 = arith.constant 0 : index
      %21 = vector.load %arg9[%c0_18, %c0_19] : memref<16x32xf32, #tpu.memory_space<vmem>>, vector<16x32xf32>
      tpu.vector_store %arg9[%c0_18, %c0_19], %20 {strides = array<i32>} : memref<16x32xf32, #tpu.memory_space<vmem>>, vector<16x32xf32>,
    } else {
    }
    return
  }
  func.func @transform_0(%arg0: i32, %arg1: i32) -> (i32, i32) {
    %c0_i32 = arith.constant 0 : i32
    %c0_i32_0 = arith.constant 0 : i32
    return %arg0, %c0_i32 : i32, i32
  }
  func.func @transform_1(%arg0: i32, %arg1: i32) -> (i32, i32) {
    %c0_i32 = arith.constant 0 : i32
    %c0_i32_0 = arith.constant 0 : i32
    %c0_i32_1 = arith.constant 0 : i32
    return %c0_i32, %c0_i32_0 : i32, i32
  }
  func.func @transform_2(%arg0: i32, %arg1: i32) -> (i32, i32) {
    %c0_i32 = arith.constant 0 : i32
    %c0_i32_0 = arith.constant 0 : i32
    %c0_i32_1 = arith.constant 0 : i32
    return %c0_i32, %c0_i32_0 : i32, i32
  }
  func.func @transform_3(%arg0: i32, %arg1: i32) -> (i32, i32) {
    %c0_i32 = arith.constant 0 : i32
    %c0_i32_0 = arith.constant 0 : i32
    return %c0_i32, %arg1 : i32, i32
  }
  func.func @transform_4(%arg0: i32, %arg1: i32) -> (i32, i32) {
    %c0_i32 = arith.constant 0 : i32
    %c0_i32_0 = arith.constant 0 : i32
    return %c0_i32, %arg1 : i32, i32
  }
  func.func @transform_5(%arg0: i32, %arg1: i32) -> (i32, i32) {
    %c0_i32 = arith.constant 0 : i32
    %c0_i32_0 = arith.constant 0 : i32
    return %arg1, %c0_i32 : i32, i32
  }
  func.func @transform_6(%arg0: i32, %arg1: i32) -> (i32, i32) {
    %c0_i32 = arith.constant 0 : i32
    %c0_i32_0 = arith.constant 0 : i32
    %c0_i32_1 = arith.constant 0 : i32
    return %c0_i32, %c0_i32_0 : i32, i32
  }
  func.func @transform_7(%arg0: i32, %arg1: i32) -> (i32, i32) {
    %c0_i32 = arith.constant 0 : i32
    %c0_i32_0 = arith.constant 0 : i32
    return %arg0, %c0_i32 : i32, i32
  }
}

module attributes {stable_mosaic.version = 11 : i64} {
  func.func @_ln_ffn_kernel(%arg0: i32, %arg1: i32, %arg2: memref<16x32xf32, #tpu.memory_space<vmem>>, %arg3: memref<1x32xf32, #tpu.memory_space<vmem>>, %arg4: memref<1x32xf32, #tpu.memory_space<vmem>>, %arg5: memref<32x64xbf16, #tpu.memory_space<vmem>>, %arg6: memref<1x64xf32, #tpu.memory_space<vmem>>, %arg7: memref<64x32xbf16, #tpu.memory_space<vmem>>, %arg8: memref<1x32xf32, #tpu.memory_space<vmem>>, %arg9: memref<1x32xf32, #tpu.memory_space<vmem>>, %arg10: memref<1x32xf32, #tpu.memory_space<vmem>>, %arg11: memref<16x32xf32, #tpu.memory_space<vmem>>, %arg12: memref<16x32xbf16, #tpu.memory_space<vmem>>, %arg13: memref<16x32xf32, #tpu.memory_space<vmem>>) attributes {dimension_semantics = [#tpu.dimension_semantics<parallel>, #tpu.dimension_semantics<arbitrary>], iteration_bounds = array<i64: 1, 1>, scalar_prefetch = 0 : i64, scratch_operands = 2 : i64, tpu.core_type = #tpu.core_type<tc>, window_params = [{transform_indices = @transform_0, window_bounds = array<i64: 16, 32>}, {pipeline_mode = #tpu.pipeline_mode<synchronous>, transform_indices = @transform_1, window_bounds = array<i64: 1, 32>}, {pipeline_mode = #tpu.pipeline_mode<synchronous>, transform_indices = @transform_2, window_bounds = array<i64: 1, 32>}, {transform_indices = @transform_3, window_bounds = array<i64: 32, 64>}, {transform_indices = @transform_4, window_bounds = array<i64: 1, 64>}, {transform_indices = @transform_5, window_bounds = array<i64: 64, 32>}, {pipeline_mode = #tpu.pipeline_mode<synchronous>, transform_indices = @transform_6, window_bounds = array<i64: 1, 32>}, {pipeline_mode = #tpu.pipeline_mode<synchronous>, transform_indices = @transform_7, window_bounds = array<i64: 1, 32>}, {pipeline_mode = #tpu.pipeline_mode<synchronous>, transform_indices = @transform_8, window_bounds = array<i64: 1, 32>}, {transform_indices = @transform_9, window_bounds = array<i64: 16, 32>}]} {
    %c0_i32 = arith.constant 0 : i32
    %0 = arith.cmpi eq, %arg1, %c0_i32 : i32
    %1 = arith.extui %0 : i1 to i32
    %c0_i32_0 = arith.constant 0 : i32
    %2 = arith.cmpi ne, %1, %c0_i32_0 : i32
    scf.if %2 {
      %c0_16 = arith.constant 0 : index
      %c0_17 = arith.constant 0 : index
      %20 = vector.load %arg2[%c0_16, %c0_17] : memref<16x32xf32, #tpu.memory_space<vmem>>, vector<16x32xf32>
      %c0_18 = arith.constant 0 : index
      %c0_19 = arith.constant 0 : index
      %21 = vector.load %arg3[%c0_18, %c0_19] : memref<1x32xf32, #tpu.memory_space<vmem>>, vector<1x32xf32>
      %c0_20 = arith.constant 0 : index
      %c0_21 = arith.constant 0 : index
      %22 = vector.load %arg4[%c0_20, %c0_21] : memref<1x32xf32, #tpu.memory_space<vmem>>, vector<1x32xf32>
      %cst_22 = arith.constant dense<0.000000e+00> : vector<16xf32>
      %23 = vector.multi_reduction <add>, %20, %cst_22 [1] : vector<16x32xf32> to vector<16xf32>
      %24 = vector.shape_cast %23 : vector<16xf32> to vector<16x1xf32>
      %cst_23 = arith.constant 3.200000e+01 : f32
      %25 = vector.broadcast %cst_23 : f32 to vector<16x1xf32>
      %26 = arith.divf %24, %25 : vector<16x1xf32>
      %27 = vector.broadcast %26 : vector<16x1xf32> to vector<16x32xf32>
      %28 = arith.subf %20, %27 : vector<16x32xf32>
      %29 = arith.mulf %28, %28 : vector<16x32xf32>
      %cst_24 = arith.constant dense<0.000000e+00> : vector<16xf32>
      %30 = vector.multi_reduction <add>, %29, %cst_24 [1] : vector<16x32xf32> to vector<16xf32>
      %31 = vector.shape_cast %30 : vector<16xf32> to vector<16x1xf32>
      %cst_25 = arith.constant 0.0322580636 : f32
      %32 = vector.broadcast %cst_25 : f32 to vector<16x1xf32>
      %33 = arith.mulf %31, %32 : vector<16x1xf32>
      %34 = vector.broadcast %21 : vector<1x32xf32> to vector<16x32xf32>
      %35 = arith.mulf %34, %28 : vector<16x32xf32>
      %36 = math.sqrt %33 : vector<16x1xf32>
      %cst_26 = arith.constant 9.99999997E-7 : f32
      %37 = vector.broadcast %cst_26 : f32 to vector<16x1xf32>
      %38 = arith.addf %36, %37 : vector<16x1xf32>
      %39 = vector.broadcast %38 : vector<16x1xf32> to vector<16x32xf32>
      %40 = arith.divf %35, %39 : vector<16x32xf32>
      %41 = vector.broadcast %22 : vector<1x32xf32> to vector<16x32xf32>
      %42 = arith.addf %40, %41 : vector<16x32xf32>
      %43 = arith.truncf %42 : vector<16x32xf32> to vector<16x32xbf16>
      %c0_27 = arith.constant 0 : index
      %c0_28 = arith.constant 0 : index
      %44 = vector.load %arg12[%c0_27, %c0_28] : memref<16x32xbf16, #tpu.memory_space<vmem>>, vector<16x32xbf16>
      tpu.vector_store %arg12[%c0_27, %c0_28], %43 {strides = array<i32>} : memref<16x32xbf16, #tpu.memory_space<vmem>>, vector<16x32xbf16>,
      %c0_29 = arith.constant 0 : index
      %c0_30 = arith.constant 0 : index
      %45 = vector.load %arg8[%c0_29, %c0_30] : memref<1x32xf32, #tpu.memory_space<vmem>>, vector<1x32xf32>
      %46 = vector.broadcast %45 : vector<1x32xf32> to vector<16x32xf32>
      %47 = arith.addf %20, %46 : vector<16x32xf32>
      %c0_31 = arith.constant 0 : index
      %c0_32 = arith.constant 0 : index
      %48 = vector.load %arg13[%c0_31, %c0_32] : memref<16x32xf32, #tpu.memory_space<vmem>>, vector<16x32xf32>
      tpu.vector_store %arg13[%c0_31, %c0_32], %47 {strides = array<i32>} : memref<16x32xf32, #tpu.memory_space<vmem>>, vector<16x32xf32>,
    } else {
    }
    %c0 = arith.constant 0 : index
    %c0_1 = arith.constant 0 : index
    %3 = vector.load %arg12[%c0, %c0_1] : memref<16x32xbf16, #tpu.memory_space<vmem>>, vector<16x32xbf16>
    %c0_2 = arith.constant 0 : index
    %c0_3 = arith.constant 0 : index
    %4 = vector.load %arg5[%c0_2, %c0_3] : memref<32x64xbf16, #tpu.memory_space<vmem>>, vector<32x64xbf16>
    %cst = arith.constant dense<0.000000e+00> : vector<16x64xf32>
    %5 = tpu.matmul %3, %4, %cst {dimension_numbers = #tpu.dot_dimension_numbers<[1], [0], [0], [1], [0, 0, 1, 1], [], []>} : vector<16x32xbf16>, vector<32x64xbf16>, vector<16x64xf32> -> vector<16x64xf32>
    %c0_4 = arith.constant 0 : index
    %c0_5 = arith.constant 0 : index
    %6 = vector.load %arg6[%c0_4, %c0_5] : memref<1x64xf32, #tpu.memory_space<vmem>>, vector<1x64xf32>
    %7 = vector.broadcast %6 : vector<1x64xf32> to vector<16x64xf32>
    %8 = arith.addf %5, %7 : vector<16x64xf32>
    %cst_6 = arith.constant 0.000000e+00 : f32
    %9 = vector.broadcast %cst_6 : f32 to vector<16x64xf32>
    %10 = arith.maximumf %8, %9 : vector<16x64xf32>
    %c0_7 = arith.constant 0 : index
    %c0_8 = arith.constant 0 : index
    %11 = vector.load %arg13[%c0_7, %c0_8] : memref<16x32xf32, #tpu.memory_space<vmem>>, vector<16x32xf32>
    %12 = arith.truncf %10 : vector<16x64xf32> to vector<16x64xbf16>
    %c0_9 = arith.constant 0 : index
    %c0_10 = arith.constant 0 : index
    %13 = vector.load %arg7[%c0_9, %c0_10] : memref<64x32xbf16, #tpu.memory_space<vmem>>, vector<64x32xbf16>
    %cst_11 = arith.constant dense<0.000000e+00> : vector<16x32xf32>
    %14 = tpu.matmul %12, %13, %cst_11 {dimension_numbers = #tpu.dot_dimension_numbers<[1], [0], [0], [1], [0, 0, 1, 1], [], []>} : vector<16x64xbf16>, vector<64x32xbf16>, vector<16x32xf32> -> vector<16x32xf32>
    %15 = arith.addf %11, %14 : vector<16x32xf32>
    %c0_12 = arith.constant 0 : index
    %c0_13 = arith.constant 0 : index
    %16 = vector.load %arg13[%c0_12, %c0_13] : memref<16x32xf32, #tpu.memory_space<vmem>>, vector<16x32xf32>
    tpu.vector_store %arg13[%c0_12, %c0_13], %15 {strides = array<i32>} : memref<16x32xf32, #tpu.memory_space<vmem>>, vector<16x32xf32>,
    %c0_i32_14 = arith.constant 0 : i32
    %17 = arith.cmpi eq, %arg1, %c0_i32_14 : i32
    %18 = arith.extui %17 : i1 to i32
    %c0_i32_15 = arith.constant 0 : i32
    %19 = arith.cmpi ne, %18, %c0_i32_15 : i32
    scf.if %19 {
      %c0_16 = arith.constant 0 : index
      %c0_17 = arith.constant 0 : index
      %20 = vector.load %arg13[%c0_16, %c0_17] : memref<16x32xf32, #tpu.memory_space<vmem>>, vector<16x32xf32>
      %c0_18 = arith.constant 0 : index
      %c0_19 = arith.constant 0 : index
      %21 = vector.load %arg9[%c0_18, %c0_19] : memref<1x32xf32, #tpu.memory_space<vmem>>, vector<1x32xf32>
      %c0_20 = arith.constant 0 : index
      %c0_21 = arith.constant 0 : index
      %22 = vector.load %arg10[%c0_20, %c0_21] : memref<1x32xf32, #tpu.memory_space<vmem>>, vector<1x32xf32>
      %cst_22 = arith.constant dense<0.000000e+00> : vector<16xf32>
      %23 = vector.multi_reduction <add>, %20, %cst_22 [1] : vector<16x32xf32> to vector<16xf32>
      %24 = vector.shape_cast %23 : vector<16xf32> to vector<16x1xf32>
      %cst_23 = arith.constant 3.200000e+01 : f32
      %25 = vector.broadcast %cst_23 : f32 to vector<16x1xf32>
      %26 = arith.divf %24, %25 : vector<16x1xf32>
      %27 = vector.broadcast %26 : vector<16x1xf32> to vector<16x32xf32>
      %28 = arith.subf %20, %27 : vector<16x32xf32>
      %29 = arith.mulf %28, %28 : vector<16x32xf32>
      %cst_24 = arith.constant dense<0.000000e+00> : vector<16xf32>
      %30 = vector.multi_reduction <add>, %29, %cst_24 [1] : vector<16x32xf32> to vector<16xf32>
      %31 = vector.shape_cast %30 : vector<16xf32> to vector<16x1xf32>
      %cst_25 = arith.constant 0.0322580636 : f32
      %32 = vector.broadcast %cst_25 : f32 to vector<16x1xf32>
      %33 = arith.mulf %31, %32 : vector<16x1xf32>
      %34 = vector.broadcast %21 : vector<1x32xf32> to vector<16x32xf32>
      %35 = arith.mulf %34, %28 : vector<16x32xf32>
      %36 = math.sqrt %33 : vector<16x1xf32>
      %cst_26 = arith.constant 9.99999997E-7 : f32
      %37 = vector.broadcast %cst_26 : f32 to vector<16x1xf32>
      %38 = arith.addf %36, %37 : vector<16x1xf32>
      %39 = vector.broadcast %38 : vector<16x1xf32> to vector<16x32xf32>
      %40 = arith.divf %35, %39 : vector<16x32xf32>
      %41 = vector.broadcast %22 : vector<1x32xf32> to vector<16x32xf32>
      %42 = arith.addf %40, %41 : vector<16x32xf32>
      %c0_27 = arith.constant 0 : index
      %c0_28 = arith.constant 0 : index
      %43 = vector.load %arg11[%c0_27, %c0_28] : memref<16x32xf32, #tpu.memory_space<vmem>>, vector<16x32xf32>
      tpu.vector_store %arg11[%c0_27, %c0_28], %42 {strides = array<i32>} : memref<16x32xf32, #tpu.memory_space<vmem>>, vector<16x32xf32>,
    } else {
    }
    return
  }
  func.func @transform_0(%arg0: i32, %arg1: i32) -> (i32, i32) {
    %c0_i32 = arith.constant 0 : i32
    %c0_i32_0 = arith.constant 0 : i32
    return %arg0, %c0_i32 : i32, i32
  }
  func.func @transform_1(%arg0: i32, %arg1: i32) -> (i32, i32) {
    %c0_i32 = arith.constant 0 : i32
    %c0_i32_0 = arith.constant 0 : i32
    %c0_i32_1 = arith.constant 0 : i32
    return %c0_i32, %c0_i32_0 : i32, i32
  }
  func.func @transform_2(%arg0: i32, %arg1: i32) -> (i32, i32) {
    %c0_i32 = arith.constant 0 : i32
    %c0_i32_0 = arith.constant 0 : i32
    %c0_i32_1 = arith.constant 0 : i32
    return %c0_i32, %c0_i32_0 : i32, i32
  }
  func.func @transform_3(%arg0: i32, %arg1: i32) -> (i32, i32) {
    %c0_i32 = arith.constant 0 : i32
    %c0_i32_0 = arith.constant 0 : i32
    return %c0_i32, %arg1 : i32, i32
  }
  func.func @transform_4(%arg0: i32, %arg1: i32) -> (i32, i32) {
    %c0_i32 = arith.constant 0 : i32
    %c0_i32_0 = arith.constant 0 : i32
    return %c0_i32, %arg1 : i32, i32
  }
  func.func @transform_5(%arg0: i32, %arg1: i32) -> (i32, i32) {
    %c0_i32 = arith.constant 0 : i32
    %c0_i32_0 = arith.constant 0 : i32
    return %arg1, %c0_i32 : i32, i32
  }
  func.func @transform_6(%arg0: i32, %arg1: i32) -> (i32, i32) {
    %c0_i32 = arith.constant 0 : i32
    %c0_i32_0 = arith.constant 0 : i32
    %c0_i32_1 = arith.constant 0 : i32
    return %c0_i32, %c0_i32_0 : i32, i32
  }
  func.func @transform_7(%arg0: i32, %arg1: i32) -> (i32, i32) {
    %c0_i32 = arith.constant 0 : i32
    %c0_i32_0 = arith.constant 0 : i32
    %c0_i32_1 = arith.constant 0 : i32
    return %c0_i32, %c0_i32_0 : i32, i32
  }
  func.func @transform_8(%arg0: i32, %arg1: i32) -> (i32, i32) {
    %c0_i32 = arith.constant 0 : i32
    %c0_i32_0 = arith.constant 0 : i32
    %c0_i32_1 = arith.constant 0 : i32
    return %c0_i32, %c0_i32_0 : i32, i32
  }
  func.func @transform_9(%arg0: i32, %arg1: i32) -> (i32, i32) {
    %c0_i32 = arith.constant 0 : i32
    %c0_i32_0 = arith.constant 0 : i32
    return %arg0, %c0_i32 : i32, i32
  }
}

</mosaic_0001>

<llo_original>
// kernel: _lambda_.4
$region0: #{_lambda_.4}
  #allocation0 [shape = 'u32[]', space=smem, size = 0x4, offset = 0x4, fixed_abs, tag = 'smem constant byte address 0x4 - core index']
  #allocation1 [shape = 'u32[144,128]{1,0:T(1,128)}', space=vmem, size = 0x12000, scoped, tag = 'internal scratch']
  %s0 = inlined_call_operand.vmem [shape: f32[2,8,32], index: 0, kind: input, shape index: {}]
  %s1 = inlined_call_operand.hbm [shape: f32[1,32], index: 1, kind: input, shape index: {}]
  %s2 = inlined_call_operand.hbm [shape: f32[1,32], index: 2, kind: input, shape index: {}]
  %s3 = inlined_call_operand.vmem [shape: bf16[32,96], index: 3, kind: input, shape index: {}]
  %s4 = inlined_call_operand.hbm [shape: f32[1,96], index: 4, kind: input, shape index: {}]
  %s5 = inlined_call_operand.vmem [shape: f32[2,1,8], index: 5, kind: input, shape index: {}]
  %s6 = inlined_call_operand.hbm [shape: bf16[32,32], index: 6, kind: input, shape index: {}]
  %s7 = inlined_call_operand.hbm [shape: f32[1,32], index: 7, kind: input, shape index: {}]
  %s8 = inlined_call_operand.vmem [shape: f32[2,8,32], index: 8, kind: output, shape index: {}]
  %s9 = sld [smem:[#allocation0]]
  $region85: #{_lambda_.4} parent=0
    _
  %s11 = ssub.s32 1, %s9
  %s12 = scalar_select 0, %s11, %s9
  $region1: #{_lambda_.4} parent=0
    #allocation2 [shape = 'u8[512]{0}', space=vmem, size = 0x400, scoped, tag = 'input window, operand 1, single buffered']
    #allocation3 [shape = 's32[2]{0}', space=sflag, size = 0x8, scoped, tag = 'scoped memory for _lambda_.4']
    #allocation4 [shape = 'u8[512]{0}', space=vmem, size = 0x400, scoped, tag = 'input window, operand 2, single buffered']
    #allocation5 [shape = 's32[1]{0}', space=sflag, size = 0x4, scoped, tag = 'scoped memory for _lambda_.4']
    #allocation6 [shape = 'u8[512]{0}', space=vmem, size = 0x400, scoped, tag = 'input window, operand 4, single buffered']
    #allocation7 [shape = 'u8[8192]{0}', space=vmem, size = 0x2000, scoped, tag = 'input window, operand 6, single buffered']
    #allocation8 [shape = 's32[1]{0}', space=sflag, size = 0x4, scoped, tag = 'scoped memory for _lambda_.4']
    #allocation9 [shape = 'u8[512]{0}', space=vmem, size = 0x400, scoped, tag = 'input window, operand 7, single buffered']
    %13 = vsyncpa [#allocation3], 0
    %14 = vsyncpa [#allocation5], 0
    %15 = vsyncpa [#allocation8], 0
    loop: start=0, step=1, limit=4
    $region2: #{_lambda_.4} parent=1 // loop_pre_header
      _
    $region3: #{_lambda_.4} parent=1 // loop_header
      %s17 = sphi 0, %s21
      %p18 = scmp.ge.s32.totalorder %s17, 4
      %s27 = sphi 0, %s29
      %s30 = sphi 0, %s27
      %s31 = sphi 0, %s30
      %s47 = sphi 0, %s31
      %s51 = sphi 0, %s51
      %s53 = sphi 0, %s51
      %s54 = sphi 0, %s53
      %s68 = sphi 0, %s54
      %s72 = sphi 0, %s72
      %s74 = sphi 0, %s72
      %s75 = sphi 0, %s74
      %s89 = sphi 0, %s75
      %s93 = sphi 0, %s93
      %s95 = sphi 0, %s93
      %s96 = sphi 0, %s95
      %s110 = sphi 0, %s96
      %s114 = sphi 0, %s114
      %s116 = sphi 0, %s114
      %s117 = sphi 0, %s116
      %s131 = sphi 0, %s117
      %s137 = sphi 0, %s139
      %s140 = sphi 0, %s137
      %s141 = sphi 0, %s140
      %s157 = sphi 0, %s141
      %s161 = sphi 0, %s161
      %s163 = sphi 0, %s161
      %s164 = sphi 0, %s163
      %s178 = sphi 0, %s164
      %s182 = sphi 0, %s182
      %s184 = sphi 0, %s182
      %s185 = sphi 0, %s184
      %s199 = sphi 0, %s185
      %s205 = sphi 0, %s207
      %s208 = sphi 0, %s205
      %s209 = sphi 0, %s208
      %s225 = sphi 0, %s209
    $region4: #{_lambda_.4} parent=1 // loop_header_branch
      %20 = sbr.rel (%p18) target = $region8
    $region5: #{_lambda_.4} parent=1 // loop_body
      %s22 = ssub.s32 %s17, 1
      %s23 = ssub.s32 %s17, 2
      %s24 = sadd.s32 %s17, 1
      %s25 = ssub.s32 %s17, %s24
      %p26 = scmp.eq.s32.totalorder %s25, 0
      %s28 = sadd.s32 %s27, 1
      %s29 = scalar_select %p26, %s27, %s28
      %p32 = pneg %p26
      %p33 = scmp.eq.s32.totalorder %s17, 1
      %p34 = por %p32, %p33
      %p35 = scmp.ne.s32.totalorder %s27, %s30
      %p36 = scmp.eq.s32.totalorder %s17, 0
      %p37 = por %p35, %p36
      %p38 = scmp.ne.s32.totalorder %s27, %s30
      %p39 = scmp.eq.s32.totalorder %s22, 1
      %p40 = por %p38, %p39
      %p41 = scmp.ne.s32.totalorder %s30, %s31
      %p42 = scmp.eq.s32.totalorder %s22, 0
      %p43 = por %p41, %p42
      %p44 = scmp.ne.s32.totalorder %s30, %s31
      %p45 = scmp.eq.s32.totalorder %s23, 1
      %p46 = por %p44, %p45
      %p48 = scmp.ne.s32.totalorder %s31, %s47
      %p49 = scmp.eq.s32.totalorder %s23, 0
      %p50 = por %p48, %p49
      %s52 = sadd.s32 %s51, 1
      %p55 = scmp.eq.s32.totalorder %s17, 1
      %p56 = scmp.ne.s32.totalorder %s51, %s53
      %p57 = scmp.eq.s32.totalorder %s17, 0
      %p58 = por %p56, %p57
      %p59 = scmp.ne.s32.totalorder %s51, %s53
      %p60 = scmp.eq.s32.totalorder %s22, 1
      %p61 = por %p59, %p60
      %p62 = scmp.ne.s32.totalorder %s53, %s54
      %p63 = scmp.eq.s32.totalorder %s22, 0
      %p64 = por %p62, %p63
      %p65 = scmp.ne.s32.totalorder %s53, %s54
      %p66 = scmp.eq.s32.totalorder %s23, 1
      %p67 = por %p65, %p66
      %p69 = scmp.ne.s32.totalorder %s54, %s68
      %p70 = scmp.eq.s32.totalorder %s23, 0
      %p71 = por %p69, %p70
      %s73 = sadd.s32 %s72, 1
      %p76 = scmp.eq.s32.totalorder %s17, 1
      %p77 = scmp.ne.s32.totalorder %s72, %s74
      %p78 = scmp.eq.s32.totalorder %s17, 0
      %p79 = por %p77, %p78
      %p80 = scmp.ne.s32.totalorder %s72, %s74
      %p81 = scmp.eq.s32.totalorder %s22, 1
      %p82 = por %p80, %p81
      %p83 = scmp.ne.s32.totalorder %s74, %s75
      %p84 = scmp.eq.s32.totalorder %s22, 0
      %p85 = por %p83, %p84
      %p86 = scmp.ne.s32.totalorder %s74, %s75
      %p87 = scmp.eq.s32.totalorder %s23, 1
      %p88 = por %p86, %p87
      %p90 = scmp.ne.s32.totalorder %s75, %s89
      %p91 = scmp.eq.s32.totalorder %s23, 0
      %p92 = por %p90, %p91
      %s94 = sadd.s32 %s93, 1
      %p97 = scmp.eq.s32.totalorder %s17, 1
      %p98 = scmp.ne.s32.totalorder %s93, %s95
      %p99 = scmp.eq.s32.totalorder %s17, 0
      %p100 = por %p98, %p99
      %p101 = scmp.ne.s32.totalorder %s93, %s95
      %p102 = scmp.eq.s32.totalorder %s22, 1
      %p103 = por %p101, %p102
      %p104 = scmp.ne.s32.totalorder %s95, %s96
      %p105 = scmp.eq.s32.totalorder %s22, 0
      %p106 = por %p104, %p105
      %p107 = scmp.ne.s32.totalorder %s95, %s96
      %p108 = scmp.eq.s32.totalorder %s23, 1
      %p109 = por %p107, %p108
      %p111 = scmp.ne.s32.totalorder %s96, %s110
      %p112 = scmp.eq.s32.totalorder %s23, 0
      %p113 = por %p111, %p112
      %s115 = sadd.s32 %s114, 1
      %p118 = scmp.eq.s32.totalorder %s17, 1
      %p119 = scmp.ne.s32.totalorder %s114, %s116
      %p120 = scmp.eq.s32.totalorder %s17, 0
      %p121 = por %p119, %p120
      %p122 = scmp.ne.s32.totalorder %s114, %s116
      %p123 = scmp.eq.s32.totalorder %s22, 1
      %p124 = por %p122, %p123
      %p125 = scmp.ne.s32.totalorder %s116, %s117
      %p126 = scmp.eq.s32.totalorder %s22, 0
      %p127 = por %p125, %p126
      %p128 = scmp.ne.s32.totalorder %s116, %s117
      %p129 = scmp.eq.s32.totalorder %s23, 1
      %p130 = por %p128, %p129
      %p132 = scmp.ne.s32.totalorder %s117, %s131
      %p133 = scmp.eq.s32.totalorder %s23, 0
      %p134 = por %p132, %p133
      %s135 = ssub.s32 %s17, %s24
      %p136 = scmp.eq.s32.totalorder %s135, 0
      %s138 = sadd.s32 %s137, 1
      %s139 = scalar_select %p136, %s137, %s138
      %p142 = pneg %p136
      %p143 = scmp.eq.s32.totalorder %s17, 1
      %p144 = por %p142, %p143
      %p145 = scmp.ne.s32.totalorder %s137, %s140
      %p146 = scmp.eq.s32.totalorder %s17, 0
      %p147 = por %p145, %p146
      %p148 = scmp.ne.s32.totalorder %s137, %s140
      %p149 = scmp.eq.s32.totalorder %s22, 1
      %p150 = por %p148, %p149
      %p151 = scmp.ne.s32.totalorder %s140, %s141
      %p152 = scmp.eq.s32.totalorder %s22, 0
      %p153 = por %p151, %p152
      %p154 = scmp.ne.s32.totalorder %s140, %s141
      %p155 = scmp.eq.s32.totalorder %s23, 1
      %p156 = por %p154, %p155
      %p158 = scmp.ne.s32.totalorder %s141, %s157
      %p159 = scmp.eq.s32.totalorder %s23, 0
      %p160 = por %p158, %p159
      %s162 = sadd.s32 %s161, 1
      %p165 = scmp.eq.s32.totalorder %s17, 1
      %p166 = scmp.ne.s32.totalorder %s161, %s163
      %p167 = scmp.eq.s32.totalorder %s17, 0
      %p168 = por %p166, %p167
      %p169 = scmp.ne.s32.totalorder %s161, %s163
      %p170 = scmp.eq.s32.totalorder %s22, 1
      %p171 = por %p169, %p170
      %p172 = scmp.ne.s32.totalorder %s163, %s164
      %p173 = scmp.eq.s32.totalorder %s22, 0
      %p174 = por %p172, %p173
      %p175 = scmp.ne.s32.totalorder %s163, %s164
      %p176 = scmp.eq.s32.totalorder %s23, 1
      %p177 = por %p175, %p176
      %p179 = scmp.ne.s32.totalorder %s164, %s178
      %p180 = scmp.eq.s32.totalorder %s23, 0
      %p181 = por %p179, %p180
      %s183 = sadd.s32 %s182, 1
      %p186 = scmp.eq.s32.totalorder %s17, 1
      %p187 = scmp.ne.s32.totalorder %s182, %s184
      %p188 = scmp.eq.s32.totalorder %s17, 0
      %p189 = por %p187, %p188
      %p190 = scmp.ne.s32.totalorder %s182, %s184
      %p191 = scmp.eq.s32.totalorder %s22, 1
      %p192 = por %p190, %p191
      %p193 = scmp.ne.s32.totalorder %s184, %s185
      %p194 = scmp.eq.s32.totalorder %s22, 0
      %p195 = por %p193, %p194
      %p196 = scmp.ne.s32.totalorder %s184, %s185
      %p197 = scmp.eq.s32.totalorder %s23, 1
      %p198 = por %p196, %p197
      %p200 = scmp.ne.s32.totalorder %s185, %s199
      %p201 = scmp.eq.s32.totalorder %s23, 0
      %p202 = por %p200, %p201
      %s203 = ssub.s32 %s17, %s24
      %p204 = scmp.eq.s32.totalorder %s203, 0
      %s206 = sadd.s32 %s205, 1
      %s207 = scalar_select %p204, %s205, %s206
      %p210 = pneg %p204
      %p211 = scmp.eq.s32.totalorder %s17, 1
      %p212 = por %p210, %p211
      %p213 = scmp.ne.s32.totalorder %s205, %s208
      %p214 = scmp.eq.s32.totalorder %s17, 0
      %p215 = por %p213, %p214
      %p216 = scmp.ne.s32.totalorder %s205, %s208
      %p217 = scmp.eq.s32.totalorder %s22, 1
      %p218 = por %p216, %p217
      %p219 = scmp.ne.s32.totalorder %s208, %s209
      %p220 = scmp.eq.s32.totalorder %s22, 0
      %p221 = por %p219, %p220
      %p222 = scmp.ne.s32.totalorder %s208, %s209
      %p223 = scmp.eq.s32.totalorder %s23, 1
      %p224 = por %p222, %p223
      %p226 = scmp.ne.s32.totalorder %s209, %s225
      %p227 = scmp.eq.s32.totalorder %s23, 0
      %p228 = por %p226, %p227
      %p229 = scmp.le.s32.totalorder 1, %s17
      %p230 = scmp.lt.s32.totalorder %s17, 3
      %p231 = pnand %p229, %p230
      %p232 = pneg %p231
      // Predicated region
      $region9: #{_lambda_.4} parent=5 // pred_check
        _
      $region10: #{_lambda_.4} parent=5 // pred_check_branch
        %234 = sbr.rel (%p231) target = $region12
      $region11: #{_lambda_.4} parent=5 // pred_region
        %s235 = ssub.s32 %s17, 1
        // Predicated region
        $region13: #{_lambda_.4} parent=11 // pred_check
          %p236 = pneg %p64
        $region14: #{_lambda_.4} parent=11 // pred_check_branch
          %238 = sbr.rel (%p236) target = $region16
        $region15: #{_lambda_.4} parent=11 // pred_region
          %s240 = ssub.s32 16, 16
          %241 = vsyncadd [#allocation3], %s240
          %s243 = sshll.u32 [#allocation2], 4
          %s244 = int_to_ptr.vmem [resolvable:$true] %s243
          %246 = dma.hbm_to_vmem [thread:$0]  %s1, 16, %s244, [#allocation3]
        $region16: #{_lambda_.4} parent=11 // pred_fallthru
          _
        // Predicated region
        $region17: #{_lambda_.4} parent=11 // pred_check
          %p247 = pneg %p85
        $region18: #{_lambda_.4} parent=11 // pred_check_branch
          %249 = sbr.rel (%p247) target = $region20
        $region19: #{_lambda_.4} parent=11 // pred_region
          %s251 = ssub.s32 16, 16
          %252 = vsyncadd [#allocation5], %s251
          %s254 = sshll.u32 [#allocation4], 4
          %s255 = int_to_ptr.vmem [resolvable:$true] %s254
          %257 = dma.hbm_to_vmem [thread:$0]  %s2, 16, %s255, [#allocation5]
        $region20: #{_lambda_.4} parent=11 // pred_fallthru
          _
        // Predicated region
        $region21: #{_lambda_.4} parent=11 // pred_check
          %p258 = pneg %p106
        $region22: #{_lambda_.4} parent=11 // pred_check_branch
          %260 = sbr.rel (%p258) target = $region24
        $region23: #{_lambda_.4} parent=11 // pred_region
          _
        $region24: #{_lambda_.4} parent=11 // pred_fallthru
          _
        // Predicated region
        $region25: #{_lambda_.4} parent=11 // pred_check
          %p261 = pneg %p127
        $region26: #{_lambda_.4} parent=11 // pred_check_branch
          %263 = sbr.rel (%p261) target = $region28
        $region27: #{_lambda_.4} parent=11 // pred_region
          %s265 = ssub.s32 16, 16
          %266 = vsyncadd [#allocation5], %s265
          %s268 = sshll.u32 [#allocation6], 4
          %s269 = int_to_ptr.vmem [resolvable:$true] %s268
          %271 = dma.hbm_to_vmem [thread:$0]  %s4, 16, %s269, [#allocation5]
        $region28: #{_lambda_.4} parent=11 // pred_fallthru
          _
        // Predicated region
        $region29: #{_lambda_.4} parent=11 // pred_check
          %p272 = pneg %p174
        $region30: #{_lambda_.4} parent=11 // pred_check_branch
          %274 = sbr.rel (%p272) target = $region32
        $region31: #{_lambda_.4} parent=11 // pred_region
          %s276 = ssub.s32 256, 256
          %277 = vsyncadd [#allocation8], %s276
          %s278 = sshll.u32 [#allocation7], 4
          %s279 = int_to_ptr.vmem [resolvable:$true] %s278
          %284 = dma.hbm_to_vmem [thread:$0]  %s6, 256, %s279, [#allocation8], 64, 64, 4
        $region32: #{_lambda_.4} parent=11 // pred_fallthru
          _
        // Predicated region
        $region33: #{_lambda_.4} parent=11 // pred_check
          %p285 = pneg %p195
        $region34: #{_lambda_.4} parent=11 // pred_check_branch
          %287 = sbr.rel (%p285) target = $region36
        $region35: #{_lambda_.4} parent=11 // pred_region
          %s289 = ssub.s32 16, 16
          %290 = vsyncadd [#allocation8], %s289
          %s292 = sshll.u32 [#allocation9], 4
          %s293 = int_to_ptr.vmem [resolvable:$true] %s292
          %295 = dma.hbm_to_vmem [thread:$0]  %s7, 16, %s293, [#allocation8]
        $region36: #{_lambda_.4} parent=11 // pred_fallthru
          _
      $region12: #{_lambda_.4} parent=5 // pred_fallthru
        _
      %p296 = scmp.lt.s32.totalorder %s17, 2
      // Predicated region
      $region37: #{_lambda_.4} parent=5 // pred_check
        %p297 = pneg %p296
      $region38: #{_lambda_.4} parent=5 // pred_check_branch
        %299 = sbr.rel (%p297) target = $region40
      $region39: #{_lambda_.4} parent=5 // pred_region
        // Predicated region
        $region41: #{_lambda_.4} parent=39 // pred_check
          %p300 = pneg %p37
        $region42: #{_lambda_.4} parent=39 // pred_check_branch
          %302 = sbr.rel (%p300) target = $region44
        $region43: #{_lambda_.4} parent=39 // pred_region
          %p303 = scmp.lt.s32.totalorder %s17, 1
          %s304 = scalar_select %p303, %s17, 1
          %s305 = smul.addr %s304, 8
          %s306 = scalar_lea.vmem %s0, %s305
        $region44: #{_lambda_.4} parent=39 // pred_fallthru
          _
        // Predicated region
        $region45: #{_lambda_.4} parent=39 // pred_check
          %p307 = pneg %p147
        $region46: #{_lambda_.4} parent=39 // pred_check_branch
          %309 = sbr.rel (%p307) target = $region48
        $region47: #{_lambda_.4} parent=39 // pred_region
          %p310 = scmp.lt.s32.totalorder %s17, 1
          %s311 = scalar_select %p310, %s17, 1
          %s312 = scalar_lea.vmem %s5, %s311
        $region48: #{_lambda_.4} parent=39 // pred_fallthru
          _
      $region40: #{_lambda_.4} parent=5 // pred_fallthru
        _
      %p313 = scmp.le.s32.totalorder 1, %s17
      %p314 = scmp.lt.s32.totalorder %s17, 3
      %p315 = pnand %p313, %p314
      %p316 = pneg %p315
      // Predicated region
      $region49: #{_lambda_.4} parent=5 // pred_check
        _
      $region50: #{_lambda_.4} parent=5 // pred_check_branch
        %318 = sbr.rel (%p315) target = $region52
      $region51: #{_lambda_.4} parent=5 // pred_region
        %s319 = ssub.s32 %s17, 1
        // Predicated region
        $region53: #{_lambda_.4} parent=51 // pred_check
          %p320 = pneg %p64
        $region54: #{_lambda_.4} parent=51 // pred_check_branch
          %322 = sbr.rel (%p320) target = $region56
        $region55: #{_lambda_.4} parent=51 // pred_region
          %323 = dma.done [#allocation3], 16
        $region56: #{_lambda_.4} parent=51 // pred_fallthru
          _
        // Predicated region
        $region57: #{_lambda_.4} parent=51 // pred_check
          %p324 = pneg %p85
        $region58: #{_lambda_.4} parent=51 // pred_check_branch
          %326 = sbr.rel (%p324) target = $region60
        $region59: #{_lambda_.4} parent=51 // pred_region
          %327 = dma.done [#allocation5], 16
        $region60: #{_lambda_.4} parent=51 // pred_fallthru
          _
        // Predicated region
        $region61: #{_lambda_.4} parent=51 // pred_check
          %p328 = pneg %p127
        $region62: #{_lambda_.4} parent=51 // pred_check_branch
          %330 = sbr.rel (%p328) target = $region64
        $region63: #{_lambda_.4} parent=51 // pred_region
          %331 = dma.done [#allocation5], 16
        $region64: #{_lambda_.4} parent=51 // pred_fallthru
          _
        // Predicated region
        $region65: #{_lambda_.4} parent=51 // pred_check
          %p332 = pneg %p174
        $region66: #{_lambda_.4} parent=51 // pred_check_branch
          %334 = sbr.rel (%p332) target = $region68
        $region67: #{_lambda_.4} parent=51 // pred_region
          %335 = dma.done [#allocation8], 256
        $region68: #{_lambda_.4} parent=51 // pred_fallthru
          _
        // Predicated region
        $region69: #{_lambda_.4} parent=51 // pred_check
          %p336 = pneg %p195
        $region70: #{_lambda_.4} parent=51 // pred_check_branch
          %338 = sbr.rel (%p336) target = $region72
        $region71: #{_lambda_.4} parent=51 // pred_region
          %339 = dma.done [#allocation8], 16
        $region72: #{_lambda_.4} parent=51 // pred_fallthru
          _
        %p340 = scmp.lt.s32.totalorder %s22, 1
        %s341 = scalar_select %p340, %s22, 1
        %s342 = smul.addr %s341, 8
        %s343 = scalar_lea.vmem %s0, %s342
        %p344 = pneg %p43
        %p345 = pneg %p40
        %p346 = pneg %p64
        %p347 = pneg %p61
        %p348 = pneg %p85
        %p349 = pneg %p82
        %p350 = pneg %p106
        %p351 = pneg %p103
        %p352 = pneg %p127
        %p353 = pneg %p124
        %p354 = scmp.lt.s32.totalorder %s22, 1
        %s355 = scalar_select %p354, %s22, 1
        %s356 = scalar_lea.vmem %s5, %s355
        %p357 = pneg %p153
        %p358 = pneg %p150
        %p359 = pneg %p174
        %p360 = pneg %p171
        %p361 = pneg %p195
        %p362 = pneg %p192
        %p363 = pneg %p221
        %p364 = pneg %p218
        %p365 = scmp.lt.s32.totalorder %s22, 1
        %s366 = scalar_select %p365, %s22, 1
        %s367 = smul.addr %s366, 8
        %s368 = scalar_lea.vmem %s8, %s367
        %p369 = scmp.lt.s32.totalorder %s22, 1
        %s370 = scalar_select %p369, %s22, 1
        %s371 = smul.addr %s370, 8
        %s372 = scalar_lea.vmem %s0, %s371
        %p373 = scmp.lt.s32.totalorder %s22, 1
        %s374 = scalar_select %p373, %s22, 1
        %s375 = scalar_lea.vmem %s5, %s374
        %p376 = scmp.lt.s32.totalorder %s22, 1
        %s377 = scalar_select %p376, %s22, 1
        %s378 = smul.addr %s377, 8
        %s379 = scalar_lea.vmem %s8, %s378
        %v381 = vld [vmem:[%s372] sm:$0xff]
        %v382 = vld [vmem:[#allocation2] sm:$0x1]
        %v383 = vld [vmem:[#allocation4] sm:$0x1]
        %vm384 = vcmask 261120
        %v385 = vsel %vm384, %v381, 0.0
        %386 = vadd.xlane.f32.xlu0 %v385
        %v387 = vpop.xlane.xlu0 %386
        %v388 = vrcp.pop 32.0
        %v389 = vmul.f32 %v387, %v388
        %v390 = vsub.f32 %v381, %v389
        %v391 = vmul.f32 %v390, %v390
        %v392 = vsel %vm384, %v391, 0.0
        %393 = vadd.xlane.f32.xlu0 %v392
        %v394 = vpop.xlane.xlu0 %393
        %v395 = vmul.f32 %v394, 0.032258064
        %v397 = vlaneseq
        %v398 = vshrl.u32 %v397, 7
        %v399 = vsub.s32 0, %v398
        %v400 = vrot.slane %v382, %v399
        %v402 = vmul.f32 %v400, %v390
        %v403 = vrsqrt.pop %v395
        %v404 = vmul.f32 %v395, %v403
        %vm405 = vcmp.eq.f32.partialorder %v395, inf
        %v406 = vsel %vm405, %v395, %v404
        %vm407 = vcmp.eq.f32.partialorder %v395, 0.0
        %v408 = vand.u32 %v395, 2147483648
        %v409 = vsel %vm407, %v408, %v406
        %v410 = vadd.f32 %v409, 1e-06
        %v411 = vrcp.pop %v410
        %v412 = vmul.f32 %v402, %v411
        %v414 = vlaneseq
        %v415 = vshrl.u32 %v414, 7
        %v416 = vsub.s32 0, %v415
        %v417 = vrot.slane %v383, %v416
        %v419 = vadd.f32 %v412, %v417
        %v420 = vpack.c.bf16 %v419, %v419
        %v421 = vld [vmem:[%s3] sm:$0xf]
        %v422 = vld [vmem:[%s3 + $0x4] sm:$0xf]
        %v423 = vld [vmem:[%s3 + $0x8] sm:$0xf]
        %v424 = vld [vmem:[%s3 + $0xc] sm:$0xf]
        %v425 = vld [vmem:[#allocation6] sm:$0x1]
        %v427 = vlaneseq
        %v428 = vshrl.u32 %v427, 7
        %v429 = vsub.s32 0, %v428
        %v430 = vrot.slane %v425, %v429
        %v436 = vunpack.c.l.b16 %v421
        %v437 = vunpack.c.l.b16 %v422
        %v438 = vunpack.c.l.b16 %v423
        %v439 = vunpack.c.l.b16 %v424
        %v440 = vpack.c.b16 %v437, %v436
        %v441 = vpack.c.b16 %v439, %v438
        %v445 = vsel %vm384, %v420, 0
        %447 = vmatprep.subr.bf16.mxu0 0
        %448 = vmatpush1.bf16.msra.mxu0 0
        %449 = vmatprep.subr.bf16.mxu0 0
        %450 = vmatpush1.bf16.msra.mxu0 0
        %451 = vmatprep.subr.bf16.mxu0 0
        %452 = vmatpush1.bf16.msra.mxu0 0
        %453 = vmatprep.subr.bf16.mxu0 0
        %454 = vmatpush1.bf16.msra.mxu0 0
        %455 = vmatprep.subr.bf16.mxu0 0
        %456 = vmatpush1.bf16.msra.mxu0 0
        %457 = vmatprep.subr.bf16.mxu0 0
        %458 = vmatpush1.bf16.msra.mxu0 0
        %459 = vmatprep.subr.bf16.mxu0 0
        %460 = vmatpush1.bf16.msra.mxu0 %v441
        %461 = vmatprep.subr.bf16.mxu0 0
        %462 = vmatpush1.bf16.msra.mxu0 %v440
        %463 = vmatprep.subr.bf16.mxu0 0
        %464 = vmatpush2.bf16.msra.mxu0 0
        %465 = vmatprep.subr.bf16.mxu0 0
        %466 = vmatpush2.bf16.msra.mxu0 0
        %467 = vmatprep.subr.bf16.mxu0 0
        %468 = vmatpush2.bf16.msra.mxu0 0
        %469 = vmatprep.subr.bf16.mxu0 0
        %470 = vmatpush2.bf16.msra.mxu0 0
        %471 = vmatprep.subr.bf16.mxu0 0
        %472 = vmatpush2.bf16.msra.mxu0 0
        %473 = vmatprep.subr.bf16.mxu0 0
        %474 = vmatpush2.bf16.msra.mxu0 0
        %475 = vmatprep.subr.bf16.mxu0 0
        %476 = vmatpush2.bf16.msra.mxu0 0
        %477 = vmatprep.subr.bf16.mxu0 0
        %478 = vmatpush2.bf16.msra.mxu0 0
        %479 = vmatprep.mubr.bf16.mxu0 0
        %480 = vmatmul.mubr.bf16.gmra.mxu0 %v445
        %v481 = vpop.f32.mrf.mxu0
        %v482 = vadd.f32 %v430, %v481
        %v483 = vpop.f32.mrf.mxu0
        %v484 = vpop.f32.mrf.mxu0
        %v485 = vpop.f32.mrf.mxu0
        %486 = vdwg.mxu0
        %v487 = vld [vmem:[%s375] sm:$0x1]
        %vm488 = vcmp.eq.f32.partialorder %v487, 0.0
        %v489 = vsel %vm488, -1e+09, 0.0
        %v490 = vmul.f32 %v482, 0.35355338
        %v491 = vpack.c.bf16 %v490, %v490
        %v492 = vpack.c.bf16 %v482, %v482
        %v494 = vlaneseq
        %v495 = vshrl.u32 %v494, 7
        %v496 = vsub.s32 0, %v495
        %v497 = vrot.slane %v489, %v496
        %500 = vrot.lane.b32.xlu0 %v492, 96
        %v501 = vpop.permute.xlu0 %500
        %vm502 = vcmask 64512
        %v504 = vsel %vm502, %v491, 0
        %v507 = vsel %vm502, %v501, 0
        %509 = vmatprep.subr.bf16.mxu0 0
        %510 = vmatpush1.bf16.xpose.msra.mxu0 0
        %511 = vmatprep.subr.bf16.mxu0 0
        %512 = vmatpush1.bf16.xpose.msra.mxu0 0
        %513 = vmatprep.subr.bf16.mxu0 0
        %514 = vmatpush1.bf16.xpose.msra.mxu0 0
        %515 = vmatprep.subr.bf16.mxu0 0
        %516 = vmatpush1.bf16.xpose.msra.mxu0 0
        %517 = vmatprep.subr.bf16.mxu0 0
        %518 = vmatpush1.bf16.xpose.msra.mxu0 0
        %519 = vmatprep.subr.bf16.mxu0 0
        %520 = vmatpush1.bf16.xpose.msra.mxu0 0
        %521 = vmatprep.subr.bf16.mxu0 0
        %522 = vmatpush1.bf16.xpose.msra.mxu0 0
        %523 = vmatprep.subr.bf16.mxu0 0
        %524 = vmatpush1.bf16.xpose.msra.mxu0 %v507
        %525 = vmatprep.subr.bf16.mxu0 0
        %526 = vmatpush2.bf16.xpose.msra.mxu0 0
        %527 = vmatprep.subr.bf16.mxu0 0
        %528 = vmatpush2.bf16.xpose.msra.mxu0 0
        %529 = vmatprep.subr.bf16.mxu0 0
        %530 = vmatpush2.bf16.xpose.msra.mxu0 0
        %531 = vmatprep.subr.bf16.mxu0 0
        %532 = vmatpush2.bf16.xpose.msra.mxu0 0
        %533 = vmatprep.subr.bf16.mxu0 0
        %534 = vmatpush2.bf16.xpose.msra.mxu0 0
        %535 = vmatprep.subr.bf16.mxu0 0
        %536 = vmatpush2.bf16.xpose.msra.mxu0 0
        %537 = vmatprep.subr.bf16.mxu0 0
        %538 = vmatpush2.bf16.xpose.msra.mxu0 0
        %539 = vmatprep.subr.bf16.mxu0 0
        %540 = vmatpush2.bf16.xpose.msra.mxu0 0
        %541 = vmatprep.mubr.bf16.mxu0 0
        %542 = vmatmul.mubr.bf16.gmra.mxu0 %v504
        %v543 = vpop.f32.mrf.mxu0
        %v544 = vadd.f32 %v497, %v543
        %v545 = vpop.f32.mrf.mxu0
        %v546 = vpop.f32.mrf.mxu0
        %v547 = vpop.f32.mrf.mxu0
        %548 = vdwg.mxu0
        %v549 = vsel %vm502, %v544, -inf
        %550 = vmax.xlane.f32.xlu0 %v549
        %v551 = vpop.xlane.xlu0 %550
        %v552 = vsub.f32 %v544, %v551
        %v553 = vmul.f32 %v552, 1.442695
        %v554 = vpow.pop %v553
        %v555 = vsel %vm502, %v554, 0.0
        %556 = vadd.xlane.f32.xlu0 %v555
        %v557 = vpop.xlane.xlu0 %556
        %v558 = vrcp.pop %v557
        %v559 = vmul.f32 %v554, %v558
        %v560 = vpack.c.bf16 %v559, %v559
        %561 = vrot.lane.b32.xlu0 %v492, 64
        %v562 = vpop.permute.xlu0 %561
        %v564 = vsel %vm502, %v560, 0
        %vm566 = vcmask 1043456
        %v568 = vsel %vm566, %v562, 0
        %570 = vmatprep.subr.bf16.mxu0 0
        %571 = vmatpush1.bf16.msra.mxu0 0
        %572 = vmatprep.subr.bf16.mxu0 0
        %573 = vmatpush1.bf16.msra.mxu0 0
        %574 = vmatprep.subr.bf16.mxu0 0
        %575 = vmatpush1.bf16.msra.mxu0 0
        %576 = vmatprep.subr.bf16.mxu0 0
        %577 = vmatpush1.bf16.msra.mxu0 0
        %578 = vmatprep.subr.bf16.mxu0 0
        %579 = vmatpush1.bf16.msra.mxu0 0
        %580 = vmatprep.subr.bf16.mxu0 0
        %581 = vmatpush1.bf16.msra.mxu0 0
        %582 = vmatprep.subr.bf16.mxu0 0
        %583 = vmatpush1.bf16.msra.mxu0 0
        %584 = vmatprep.subr.bf16.mxu0 0
        %585 = vmatpush1.bf16.msra.mxu0 %v568
        %586 = vmatprep.subr.bf16.mxu0 0
        %587 = vmatpush2.bf16.msra.mxu0 0
        %588 = vmatprep.subr.bf16.mxu0 0
        %589 = vmatpush2.bf16.msra.mxu0 0
        %590 = vmatprep.subr.bf16.mxu0 0
        %591 = vmatpush2.bf16.msra.mxu0 0
        %592 = vmatprep.subr.bf16.mxu0 0
        %593 = vmatpush2.bf16.msra.mxu0 0
        %594 = vmatprep.subr.bf16.mxu0 0
        %595 = vmatpush2.bf16.msra.mxu0 0
        %596 = vmatprep.subr.bf16.mxu0 0
        %597 = vmatpush2.bf16.msra.mxu0 0
        %598 = vmatprep.subr.bf16.mxu0 0
        %599 = vmatpush2.bf16.msra.mxu0 0
        %600 = vmatprep.subr.bf16.mxu0 0
        %601 = vmatpush2.bf16.msra.mxu0 0
        %602 = vmatprep.mubr.bf16.mxu0 0
        %603 = vmatmul.mubr.bf16.gmra.mxu0 %v564
        %v604 = vpop.f32.mrf.mxu0
        %v605 = vadd.f32 0.0, %v604
        %v606 = vpop.f32.mrf.mxu0
        %v607 = vpop.f32.mrf.mxu0
        %v608 = vpop.f32.mrf.mxu0
        %609 = vdwg.mxu0
        %611 = vrot.lane.b32.xlu0 %v491, 120
        %v612 = vpop.permute.xlu0 %611
        %613 = vrot.lane.b32.xlu0 %v492, 88
        %v614 = vpop.permute.xlu0 %613
        %v616 = vsel %vm502, %v612, 0
        %v619 = vsel %vm502, %v614, 0
        %621 = vmatprep.subr.bf16.mxu0 0
        %622 = vmatpush1.bf16.xpose.msra.mxu0 0
        %623 = vmatprep.subr.bf16.mxu0 0
        %624 = vmatpush1.bf16.xpose.msra.mxu0 0
        %625 = vmatprep.subr.bf16.mxu0 0
        %626 = vmatpush1.bf16.xpose.msra.mxu0 0
        %627 = vmatprep.subr.bf16.mxu0 0
        %628 = vmatpush1.bf16.xpose.msra.mxu0 0
        %629 = vmatprep.subr.bf16.mxu0 0
        %630 = vmatpush1.bf16.xpose.msra.mxu0 0
        %631 = vmatprep.subr.bf16.mxu0 0
        %632 = vmatpush1.bf16.xpose.msra.mxu0 0
        %633 = vmatprep.subr.bf16.mxu0 0
        %634 = vmatpush1.bf16.xpose.msra.mxu0 0
        %635 = vmatprep.subr.bf16.mxu0 0
        %636 = vmatpush1.bf16.xpose.msra.mxu0 %v619
        %637 = vmatprep.subr.bf16.mxu0 0
        %638 = vmatpush2.bf16.xpose.msra.mxu0 0
        %639 = vmatprep.subr.bf16.mxu0 0
        %640 = vmatpush2.bf16.xpose.msra.mxu0 0
        %641 = vmatprep.subr.bf16.mxu0 0
        %642 = vmatpush2.bf16.xpose.msra.mxu0 0
        %643 = vmatprep.subr.bf16.mxu0 0
        %644 = vmatpush2.bf16.xpose.msra.mxu0 0
        %645 = vmatprep.subr.bf16.mxu0 0
        %646 = vmatpush2.bf16.xpose.msra.mxu0 0
        %647 = vmatprep.subr.bf16.mxu0 0
        %648 = vmatpush2.bf16.xpose.msra.mxu0 0
        %649 = vmatprep.subr.bf16.mxu0 0
        %650 = vmatpush2.bf16.xpose.msra.mxu0 0
        %651 = vmatprep.subr.bf16.mxu0 0
        %652 = vmatpush2.bf16.xpose.msra.mxu0 0
        %653 = vmatprep.mubr.bf16.mxu0 0
        %654 = vmatmul.mubr.bf16.gmra.mxu0 %v616
        %v655 = vpop.f32.mrf.mxu0
        %v656 = vadd.f32 %v497, %v655
        %v657 = vpop.f32.mrf.mxu0
        %v658 = vpop.f32.mrf.mxu0
        %v659 = vpop.f32.mrf.mxu0
        %660 = vdwg.mxu0
        %v661 = vsel %vm502, %v656, -inf
        %662 = vmax.xlane.f32.xlu0 %v661
        %v663 = vpop.xlane.xlu0 %662
        %v664 = vsub.f32 %v656, %v663
        %v665 = vmul.f32 %v664, 1.442695
        %v666 = vpow.pop %v665
        %v667 = vsel %vm502, %v666, 0.0
        %668 = vadd.xlane.f32.xlu0 %v667
        %v669 = vpop.xlane.xlu0 %668
        %v670 = vrcp.pop %v669
        %v671 = vmul.f32 %v666, %v670
        %v672 = vpack.c.bf16 %v671, %v671
        %673 = vrot.lane.b32.xlu0 %v492, 56
        %v674 = vpop.permute.xlu0 %673
        %v676 = vsel %vm502, %v672, 0
        %v679 = vsel %vm566, %v674, 0
        %681 = vmatprep.subr.bf16.mxu0 0
        %682 = vmatpush1.bf16.msra.mxu0 0
        %683 = vmatprep.subr.bf16.mxu0 0
        %684 = vmatpush1.bf16.msra.mxu0 0
        %685 = vmatprep.subr.bf16.mxu0 0
        %686 = vmatpush1.bf16.msra.mxu0 0
        %687 = vmatprep.subr.bf16.mxu0 0
        %688 = vmatpush1.bf16.msra.mxu0 0
        %689 = vmatprep.subr.bf16.mxu0 0
        %690 = vmatpush1.bf16.msra.mxu0 0
        %691 = vmatprep.subr.bf16.mxu0 0
        %692 = vmatpush1.bf16.msra.mxu0 0
        %693 = vmatprep.subr.bf16.mxu0 0
        %694 = vmatpush1.bf16.msra.mxu0 0
        %695 = vmatprep.subr.bf16.mxu0 0
        %696 = vmatpush1.bf16.msra.mxu0 %v679
        %697 = vmatprep.subr.bf16.mxu0 0
        %698 = vmatpush2.bf16.msra.mxu0 0
        %699 = vmatprep.subr.bf16.mxu0 0
        %700 = vmatpush2.bf16.msra.mxu0 0
        %701 = vmatprep.subr.bf16.mxu0 0
        %702 = vmatpush2.bf16.msra.mxu0 0
        %703 = vmatprep.subr.bf16.mxu0 0
        %704 = vmatpush2.bf16.msra.mxu0 0
        %705 = vmatprep.subr.bf16.mxu0 0
        %706 = vmatpush2.bf16.msra.mxu0 0
        %707 = vmatprep.subr.bf16.mxu0 0
        %708 = vmatpush2.bf16.msra.mxu0 0
        %709 = vmatprep.subr.bf16.mxu0 0
        %710 = vmatpush2.bf16.msra.mxu0 0
        %711 = vmatprep.subr.bf16.mxu0 0
        %712 = vmatpush2.bf16.msra.mxu0 0
        %713 = vmatprep.mubr.bf16.mxu0 0
        %714 = vmatmul.mubr.bf16.gmra.mxu0 %v676
        %v715 = vpop.f32.mrf.mxu0
        %v716 = vadd.f32 0.0, %v715
        %v717 = vpop.f32.mrf.mxu0
        %v718 = vpop.f32.mrf.mxu0
        %v719 = vpop.f32.mrf.mxu0
        %720 = vdwg.mxu0
        %721 = vrot.lane.b32.xlu0 %v491, 112
        %v722 = vpop.permute.xlu0 %721
        %723 = vrot.lane.b32.xlu0 %v492, 80
        %v724 = vpop.permute.xlu0 %723
        %v726 = vsel %vm502, %v722, 0
        %v729 = vsel %vm502, %v724, 0
        %731 = vmatprep.subr.bf16.mxu0 0
        %732 = vmatpush1.bf16.xpose.msra.mxu0 0
        %733 = vmatprep.subr.bf16.mxu0 0
        %734 = vmatpush1.bf16.xpose.msra.mxu0 0
        %735 = vmatprep.subr.bf16.mxu0 0
        %736 = vmatpush1.bf16.xpose.msra.mxu0 0
        %737 = vmatprep.subr.bf16.mxu0 0
        %738 = vmatpush1.bf16.xpose.msra.mxu0 0
        %739 = vmatprep.subr.bf16.mxu0 0
        %740 = vmatpush1.bf16.xpose.msra.mxu0 0
        %741 = vmatprep.subr.bf16.mxu0 0
        %742 = vmatpush1.bf16.xpose.msra.mxu0 0
        %743 = vmatprep.subr.bf16.mxu0 0
        %744 = vmatpush1.bf16.xpose.msra.mxu0 0
        %745 = vmatprep.subr.bf16.mxu0 0
        %746 = vmatpush1.bf16.xpose.msra.mxu0 %v729
        %747 = vmatprep.subr.bf16.mxu0 0
        %748 = vmatpush2.bf16.xpose.msra.mxu0 0
        %749 = vmatprep.subr.bf16.mxu0 0
        %750 = vmatpush2.bf16.xpose.msra.mxu0 0
        %751 = vmatprep.subr.bf16.mxu0 0
        %752 = vmatpush2.bf16.xpose.msra.mxu0 0
        %753 = vmatprep.subr.bf16.mxu0 0
        %754 = vmatpush2.bf16.xpose.msra.mxu0 0
        %755 = vmatprep.subr.bf16.mxu0 0
        %756 = vmatpush2.bf16.xpose.msra.mxu0 0
        %757 = vmatprep.subr.bf16.mxu0 0
        %758 = vmatpush2.bf16.xpose.msra.mxu0 0
        %759 = vmatprep.subr.bf16.mxu0 0
        %760 = vmatpush2.bf16.xpose.msra.mxu0 0
        %761 = vmatprep.subr.bf16.mxu0 0
        %762 = vmatpush2.bf16.xpose.msra.mxu0 0
        %763 = vmatprep.mubr.bf16.mxu0 0
        %764 = vmatmul.mubr.bf16.gmra.mxu0 %v726
        %v765 = vpop.f32.mrf.mxu0
        %v766 = vadd.f32 %v497, %v765
        %v767 = vpop.f32.mrf.mxu0
        %v768 = vpop.f32.mrf.mxu0
        %v769 = vpop.f32.mrf.mxu0
        %770 = vdwg.mxu0
        %v771 = vsel %vm502, %v766, -inf
        %772 = vmax.xlane.f32.xlu0 %v771
        %v773 = vpop.xlane.xlu0 %772
        %v774 = vsub.f32 %v766, %v773
        %v775 = vmul.f32 %v774, 1.442695
        %v776 = vpow.pop %v775
        %v777 = vsel %vm502, %v776, 0.0
        %778 = vadd.xlane.f32.xlu0 %v777
        %v779 = vpop.xlane.xlu0 %778
        %v780 = vrcp.pop %v779
        %v781 = vmul.f32 %v776, %v780
        %v782 = vpack.c.bf16 %v781, %v781
        %783 = vrot.lane.b32.xlu0 %v492, 48
        %v784 = vpop.permute.xlu0 %783
        %v786 = vsel %vm502, %v782, 0
        %v789 = vsel %vm566, %v784, 0
        %791 = vmatprep.subr.bf16.mxu0 0
        %792 = vmatpush1.bf16.msra.mxu0 0
        %793 = vmatprep.subr.bf16.mxu0 0
        %794 = vmatpush1.bf16.msra.mxu0 0
        %795 = vmatprep.subr.bf16.mxu0 0
        %796 = vmatpush1.bf16.msra.mxu0 0
        %797 = vmatprep.subr.bf16.mxu0 0
        %798 = vmatpush1.bf16.msra.mxu0 0
        %799 = vmatprep.subr.bf16.mxu0 0
        %800 = vmatpush1.bf16.msra.mxu0 0
        %801 = vmatprep.subr.bf16.mxu0 0
        %802 = vmatpush1.bf16.msra.mxu0 0
        %803 = vmatprep.subr.bf16.mxu0 0
        %804 = vmatpush1.bf16.msra.mxu0 0
        %805 = vmatprep.subr.bf16.mxu0 0
        %806 = vmatpush1.bf16.msra.mxu0 %v789
        %807 = vmatprep.subr.bf16.mxu0 0
        %808 = vmatpush2.bf16.msra.mxu0 0
        %809 = vmatprep.subr.bf16.mxu0 0
        %810 = vmatpush2.bf16.msra.mxu0 0
        %811 = vmatprep.subr.bf16.mxu0 0
        %812 = vmatpush2.bf16.msra.mxu0 0
        %813 = vmatprep.subr.bf16.mxu0 0
        %814 = vmatpush2.bf16.msra.mxu0 0
        %815 = vmatprep.subr.bf16.mxu0 0
        %816 = vmatpush2.bf16.msra.mxu0 0
        %817 = vmatprep.subr.bf16.mxu0 0
        %818 = vmatpush2.bf16.msra.mxu0 0
        %819 = vmatprep.subr.bf16.mxu0 0
        %820 = vmatpush2.bf16.msra.mxu0 0
        %821 = vmatprep.subr.bf16.mxu0 0
        %822 = vmatpush2.bf16.msra.mxu0 0
        %823 = vmatprep.mubr.bf16.mxu0 0
        %824 = vmatmul.mubr.bf16.gmra.mxu0 %v786
        %v825 = vpop.f32.mrf.mxu0
        %v826 = vadd.f32 0.0, %v825
        %v827 = vpop.f32.mrf.mxu0
        %v828 = vpop.f32.mrf.mxu0
        %v829 = vpop.f32.mrf.mxu0
        %830 = vdwg.mxu0
        %831 = vrot.lane.b32.xlu0 %v491, 104
        %v832 = vpop.permute.xlu0 %831
        %833 = vrot.lane.b32.xlu0 %v492, 72
        %v834 = vpop.permute.xlu0 %833
        %v836 = vsel %vm502, %v832, 0
        %v839 = vsel %vm502, %v834, 0
        %841 = vmatprep.subr.bf16.mxu0 0
        %842 = vmatpush1.bf16.xpose.msra.mxu0 0
        %843 = vmatprep.subr.bf16.mxu0 0
        %844 = vmatpush1.bf16.xpose.msra.mxu0 0
        %845 = vmatprep.subr.bf16.mxu0 0
        %846 = vmatpush1.bf16.xpose.msra.mxu0 0
        %847 = vmatprep.subr.bf16.mxu0 0
        %848 = vmatpush1.bf16.xpose.msra.mxu0 0
        %849 = vmatprep.subr.bf16.mxu0 0
        %850 = vmatpush1.bf16.xpose.msra.mxu0 0
        %851 = vmatprep.subr.bf16.mxu0 0
        %852 = vmatpush1.bf16.xpose.msra.mxu0 0
        %853 = vmatprep.subr.bf16.mxu0 0
        %854 = vmatpush1.bf16.xpose.msra.mxu0 0
        %855 = vmatprep.subr.bf16.mxu0 0
        %856 = vmatpush1.bf16.xpose.msra.mxu0 %v839
        %857 = vmatprep.subr.bf16.mxu0 0
        %858 = vmatpush2.bf16.xpose.msra.mxu0 0
        %859 = vmatprep.subr.bf16.mxu0 0
        %860 = vmatpush2.bf16.xpose.msra.mxu0 0
        %861 = vmatprep.subr.bf16.mxu0 0
        %862 = vmatpush2.bf16.xpose.msra.mxu0 0
        %863 = vmatprep.subr.bf16.mxu0 0
        %864 = vmatpush2.bf16.xpose.msra.mxu0 0
        %865 = vmatprep.subr.bf16.mxu0 0
        %866 = vmatpush2.bf16.xpose.msra.mxu0 0
        %867 = vmatprep.subr.bf16.mxu0 0
        %868 = vmatpush2.bf16.xpose.msra.mxu0 0
        %869 = vmatprep.subr.bf16.mxu0 0
        %870 = vmatpush2.bf16.xpose.msra.mxu0 0
        %871 = vmatprep.subr.bf16.mxu0 0
        %872 = vmatpush2.bf16.xpose.msra.mxu0 0
        %873 = vmatprep.mubr.bf16.mxu0 0
        %874 = vmatmul.mubr.bf16.gmra.mxu0 %v836
        %v875 = vpop.f32.mrf.mxu0
        %v876 = vadd.f32 %v497, %v875
        %v877 = vpop.f32.mrf.mxu0
        %v878 = vpop.f32.mrf.mxu0
        %v879 = vpop.f32.mrf.mxu0
        %880 = vdwg.mxu0
        %v881 = vsel %vm502, %v876, -inf
        %882 = vmax.xlane.f32.xlu0 %v881
        %v883 = vpop.xlane.xlu0 %882
        %v884 = vsub.f32 %v876, %v883
        %v885 = vmul.f32 %v884, 1.442695
        %v886 = vpow.pop %v885
        %v887 = vsel %vm502, %v886, 0.0
        %888 = vadd.xlane.f32.xlu0 %v887
        %v889 = vpop.xlane.xlu0 %888
        %v890 = vrcp.pop %v889
        %v891 = vmul.f32 %v886, %v890
        %v892 = vpack.c.bf16 %v891, %v891
        %893 = vrot.lane.b32.xlu0 %v492, 40
        %v894 = vpop.permute.xlu0 %893
        %v896 = vsel %vm502, %v892, 0
        %v899 = vsel %vm566, %v894, 0
        %901 = vmatprep.subr.bf16.mxu0 0
        %902 = vmatpush1.bf16.msra.mxu0 0
        %903 = vmatprep.subr.bf16.mxu0 0
        %904 = vmatpush1.bf16.msra.mxu0 0
        %905 = vmatprep.subr.bf16.mxu0 0
        %906 = vmatpush1.bf16.msra.mxu0 0
        %907 = vmatprep.subr.bf16.mxu0 0
        %908 = vmatpush1.bf16.msra.mxu0 0
        %909 = vmatprep.subr.bf16.mxu0 0
        %910 = vmatpush1.bf16.msra.mxu0 0
        %911 = vmatprep.subr.bf16.mxu0 0
        %912 = vmatpush1.bf16.msra.mxu0 0
        %913 = vmatprep.subr.bf16.mxu0 0
        %914 = vmatpush1.bf16.msra.mxu0 0
        %915 = vmatprep.subr.bf16.mxu0 0
        %916 = vmatpush1.bf16.msra.mxu0 %v899
        %917 = vmatprep.subr.bf16.mxu0 0
        %918 = vmatpush2.bf16.msra.mxu0 0
        %919 = vmatprep.subr.bf16.mxu0 0
        %920 = vmatpush2.bf16.msra.mxu0 0
        %921 = vmatprep.subr.bf16.mxu0 0
        %922 = vmatpush2.bf16.msra.mxu0 0
        %923 = vmatprep.subr.bf16.mxu0 0
        %924 = vmatpush2.bf16.msra.mxu0 0
        %925 = vmatprep.subr.bf16.mxu0 0
        %926 = vmatpush2.bf16.msra.mxu0 0
        %927 = vmatprep.subr.bf16.mxu0 0
        %928 = vmatpush2.bf16.msra.mxu0 0
        %929 = vmatprep.subr.bf16.mxu0 0
        %930 = vmatpush2.bf16.msra.mxu0 0
        %931 = vmatprep.subr.bf16.mxu0 0
        %932 = vmatpush2.bf16.msra.mxu0 0
        %933 = vmatprep.mubr.bf16.mxu0 0
        %934 = vmatmul.mubr.bf16.gmra.mxu0 %v896
        %v935 = vpop.f32.mrf.mxu0
        %v936 = vadd.f32 0.0, %v935
        %v937 = vpop.f32.mrf.mxu0
        %v938 = vpop.f32.mrf.mxu0
        %v939 = vpop.f32.mrf.mxu0
        %940 = vdwg.mxu0
        %942 = vrot.lane.b32.xlu0 %v716, 8
        %v943 = vpop.permute.xlu0 %942
        %946 = vrot.lane.b32.xlu0 %v826, 16
        %v947 = vpop.permute.xlu0 %946
        %950 = vrot.lane.b32.xlu0 %v936, 24
        %v951 = vpop.permute.xlu0 %950
        %v953 = vsel %vm502, %v605, %v943
        %vm954 = vcmask 130048
        %v955 = vsel %vm954, %v953, %v947
        %vm956 = vcmask 195584
        %v957 = vsel %vm956, %v955, %v951
        %v958 = vpack.c.bf16 %v957, %v957
        %v959 = vld [vmem:[#allocation9] sm:$0x1]
        %v961 = vlaneseq
        %v962 = vshrl.u32 %v961, 7
        %v963 = vsub.s32 0, %v962
        %v964 = vrot.slane %v959, %v963
        %v966 = vadd.f32 %v381, %v964
        %v967 = vld [vmem:[#allocation7] sm:$0xf]
        %v968 = vld [vmem:[#allocation7 + $0x4] sm:$0xf]
        %v969 = vld [vmem:[#allocation7 + $0x8] sm:$0xf]
        %v970 = vld [vmem:[#allocation7 + $0xc] sm:$0xf]
        %v975 = vunpack.c.l.b16 %v967
        %v976 = vunpack.c.l.b16 %v968
        %v977 = vunpack.c.l.b16 %v969
        %v978 = vunpack.c.l.b16 %v970
        %v979 = vpack.c.b16 %v976, %v975
        %v980 = vpack.c.b16 %v978, %v977
        %v984 = vsel %vm384, %v958, 0
        %986 = vmatprep.subr.bf16.mxu0 0
        %987 = vmatpush1.bf16.msra.mxu0 0
        %988 = vmatprep.subr.bf16.mxu0 0
        %989 = vmatpush1.bf16.msra.mxu0 0
        %990 = vmatprep.subr.bf16.mxu0 0
        %991 = vmatpush1.bf16.msra.mxu0 0
        %992 = vmatprep.subr.bf16.mxu0 0
        %993 = vmatpush1.bf16.msra.mxu0 0
        %994 = vmatprep.subr.bf16.mxu0 0
        %995 = vmatpush1.bf16.msra.mxu0 0
        %996 = vmatprep.subr.bf16.mxu0 0
        %997 = vmatpush1.bf16.msra.mxu0 0
        %998 = vmatprep.subr.bf16.mxu0 0
        %999 = vmatpush1.bf16.msra.mxu0 %v980
        %1000 = vmatprep.subr.bf16.mxu0 0
        %1001 = vmatpush1.bf16.msra.mxu0 %v979
        %1002 = vmatprep.subr.bf16.mxu0 0
        %1003 = vmatpush2.bf16.msra.mxu0 0
        %1004 = vmatprep.subr.bf16.mxu0 0
        %1005 = vmatpush2.bf16.msra.mxu0 0
        %1006 = vmatprep.subr.bf16.mxu0 0
        %1007 = vmatpush2.bf16.msra.mxu0 0
        %1008 = vmatprep.subr.bf16.mxu0 0
        %1009 = vmatpush2.bf16.msra.mxu0 0
        %1010 = vmatprep.subr.bf16.mxu0 0
        %1011 = vmatpush2.bf16.msra.mxu0 0
        %1012 = vmatprep.subr.bf16.mxu0 0
        %1013 = vmatpush2.bf16.msra.mxu0 0
        %1014 = vmatprep.subr.bf16.mxu0 0
        %1015 = vmatpush2.bf16.msra.mxu0 0
        %1016 = vmatprep.subr.bf16.mxu0 0
        %1017 = vmatpush2.bf16.msra.mxu0 0
        %1018 = vmatprep.mubr.bf16.mxu0 0
        %1019 = vmatmul.mubr.bf16.gmra.mxu0 %v984
        %v1020 = vpop.f32.mrf.mxu0
        %v1021 = vadd.f32 0.0, %v1020
        %v1022 = vpop.f32.mrf.mxu0
        %v1023 = vpop.f32.mrf.mxu0
        %v1024 = vpop.f32.mrf.mxu0
        %1025 = vdwg.mxu0
        %v1026 = vadd.f32 %v966, %v1021
        %1027 = vst.msk [vmem:[%s379] sm:$0xff] %vm384, %v1026
        %p1028 = scmp.lt.s32.totalorder %s22, 1
        %s1029 = scalar_select %p1028, %s22, 1
        %s1030 = smul.addr %s1029, 8
        %s1031 = scalar_lea.vmem %s8, %s1030
        // Predicated region
        $region73: #{_lambda_.4} parent=51 // pred_check
          %p1032 = pneg %p218
        $region74: #{_lambda_.4} parent=51 // pred_check_branch
          %1034 = sbr.rel (%p1032) target = $region76
        $region75: #{_lambda_.4} parent=51 // pred_region
          _
        $region76: #{_lambda_.4} parent=51 // pred_fallthru
          _
      $region52: #{_lambda_.4} parent=5 // pred_fallthru
        _
      %p1035 = scmp.le.s32.totalorder 2, %s17
      // Predicated region
      $region77: #{_lambda_.4} parent=5 // pred_check
        %p1036 = pneg %p1035
      $region78: #{_lambda_.4} parent=5 // pred_check_branch
        %1038 = sbr.rel (%p1036) target = $region80
      $region79: #{_lambda_.4} parent=5 // pred_region
        %s1039 = ssub.s32 %s17, 2
        // Predicated region
        $region81: #{_lambda_.4} parent=79 // pred_check
          %p1040 = pneg %p224
        $region82: #{_lambda_.4} parent=79 // pred_check_branch
          %1042 = sbr.rel (%p1040) target = $region84
        $region83: #{_lambda_.4} parent=79 // pred_region
          %p1043 = scmp.lt.s32.totalorder %s23, 1
          %s1044 = scalar_select %p1043, %s23, 1
          %s1045 = smul.addr %s1044, 8
          %s1046 = scalar_lea.vmem %s8, %s1045
        $region84: #{_lambda_.4} parent=79 // pred_fallthru
          _
      $region80: #{_lambda_.4} parent=5 // pred_fallthru
        _
    $region6: #{_lambda_.4} parent=1 // loop_footer
      %s21 = sadd.s32 1, %s17
    $region7: #{_lambda_.4} parent=1 // loop_footer_branch
      %16 = sbr.rel target = $region3
    $region8: #{_lambda_.4} parent=1 // loop_exit
      _
    %1047 = vsyncpa [#allocation3], 1
    %s1048 = scalar_lea.sflag [#allocation3], 1
    %1049 = vsyncpa %s1048, 1
    %1050 = vsyncpa [#allocation5], 1
    %1051 = vsyncpa [#allocation8], 1

// kernel: _lambda_.5
$region0: #{_lambda_.5}
  #allocation0 [shape = 'u32[]', space=smem, size = 0x4, offset = 0x4, fixed_abs, tag = 'smem constant byte address 0x4 - core index']
  #allocation1 [shape = 'u32[144,128]{1,0:T(1,128)}', space=vmem, size = 0x12000, scoped, tag = 'internal scratch']
  #allocation2 [shape = 'bf16[16,32]{1,0:T(8,128)(2,1)}', space=vmem, size = 0x1000, scoped, tag = 'scratch operand']
  #allocation3 [shape = 'f32[16,32]{1,0:T(8,128)}', space=vmem, size = 0x2000, scoped, tag = 'scratch operand']
  %s0 = inlined_call_operand.vmem [shape: f32[16,32], index: 0, kind: input, shape index: {}]
  %s1 = inlined_call_operand.vmem [shape: f32[1,32], index: 1, kind: input, shape index: {}]
  %s2 = inlined_call_operand.vmem [shape: f32[1,32], index: 2, kind: input, shape index: {}]
  %s3 = inlined_call_operand.vmem [shape: bf16[32,64], index: 3, kind: input, shape index: {}]
  %s4 = inlined_call_operand.vmem [shape: f32[1,64], index: 4, kind: input, shape index: {}]
  %s5 = inlined_call_operand.vmem [shape: bf16[64,32], index: 5, kind: input, shape index: {}]
  %s6 = inlined_call_operand.vmem [shape: f32[1,32], index: 6, kind: input, shape index: {}]
  %s7 = inlined_call_operand.vmem [shape: f32[16,32], index: 7, kind: output, shape index: {}]
  %s8 = sld [smem:[#allocation0]]
  $region46: #{_lambda_.5} parent=0
    _
  %s10 = ssub.s32 1, %s8
  %s11 = scalar_select 0, %s10, %s8
  // Predicated region
  $region2: #{_lambda_.5} parent=0 // pred_check
    _
  $region3: #{_lambda_.5} parent=0 // pred_check_branch
    %13 = sbr.rel (0) target = $region5
  $region4: #{_lambda_.5} parent=0 // pred_region
    _
  $region5: #{_lambda_.5} parent=0 // pred_fallthru
    _
  // Predicated region
  $region6: #{_lambda_.5} parent=0 // pred_check
    _
  $region7: #{_lambda_.5} parent=0 // pred_check_branch
    %15 = sbr.rel (0) target = $region9
  $region8: #{_lambda_.5} parent=0 // pred_region
    _
  $region9: #{_lambda_.5} parent=0 // pred_fallthru
    _
  // Predicated region
  $region10: #{_lambda_.5} parent=0 // pred_check
    _
  $region11: #{_lambda_.5} parent=0 // pred_check_branch
    %17 = sbr.rel (0) target = $region13
  $region12: #{_lambda_.5} parent=0 // pred_region
    _
  $region13: #{_lambda_.5} parent=0 // pred_fallthru
    _
  // Predicated region
  $region14: #{_lambda_.5} parent=0 // pred_check
    _
  $region15: #{_lambda_.5} parent=0 // pred_check_branch
    %19 = sbr.rel (0) target = $region17
  $region16: #{_lambda_.5} parent=0 // pred_region
    _
  $region17: #{_lambda_.5} parent=0 // pred_fallthru
    _
  // Predicated region
  $region18: #{_lambda_.5} parent=0 // pred_check
    _
  $region19: #{_lambda_.5} parent=0 // pred_check_branch
    %21 = sbr.rel (0) target = $region21
  $region20: #{_lambda_.5} parent=0 // pred_region
    _
  $region21: #{_lambda_.5} parent=0 // pred_fallthru
    _
  // Predicated region
  $region22: #{_lambda_.5} parent=0 // pred_check
    _
  $region23: #{_lambda_.5} parent=0 // pred_check_branch
    %23 = sbr.rel (0) target = $region25
  $region24: #{_lambda_.5} parent=0 // pred_region
    _
  $region25: #{_lambda_.5} parent=0 // pred_fallthru
    _
  // Predicated region
  $region26: #{_lambda_.5} parent=0 // pred_check
    _
  $region27: #{_lambda_.5} parent=0 // pred_check_branch
    %25 = sbr.rel (0) target = $region29
  $region28: #{_lambda_.5} parent=0 // pred_region
    _
  $region29: #{_lambda_.5} parent=0 // pred_fallthru
    _
  %p27 = scmp.eq.s32.totalorder 0, 0
  // Predicated region
  $region30: #{_lambda_.5} parent=0 // pred_check
    %p28 = pneg %p27
  $region31: #{_lambda_.5} parent=0 // pred_check_branch
    %30 = sbr.rel (%p28) target = $region33
  $region32: #{_lambda_.5} parent=0 // pred_region
    %v31 = vld [vmem:[%s0] sm:$0xff]
    %v32 = vld [vmem:[%s0 + $0x8] sm:$0xff]
    %v33 = vld [vmem:[%s1] sm:$0x1]
    %v34 = vld [vmem:[%s2] sm:$0x1]
    %vm35 = vcmask 261120
    %v36 = vsel %vm35, %v31, 0.0
    %37 = vadd.xlane.f32.xlu0 %v36
    %v38 = vpop.xlane.xlu0 %37
    %v39 = vsel %vm35, %v32, 0.0
    %40 = vadd.xlane.f32.xlu0 %v39
    %v41 = vpop.xlane.xlu0 %40
    %v42 = vrcp.pop 32.0
    %v43 = vmul.f32 %v38, %v42
    %v44 = vmul.f32 %v41, %v42
    %v45 = vsub.f32 %v31, %v43
    %v46 = vsub.f32 %v32, %v44
    %v47 = vmul.f32 %v45, %v45
    %v48 = vmul.f32 %v46, %v46
    %v49 = vsel %vm35, %v47, 0.0
    %50 = vadd.xlane.f32.xlu0 %v49
    %v51 = vpop.xlane.xlu0 %50
    %v52 = vsel %vm35, %v48, 0.0
    %53 = vadd.xlane.f32.xlu0 %v52
    %v54 = vpop.xlane.xlu0 %53
    %v55 = vmul.f32 %v51, 0.032258064
    %v56 = vmul.f32 %v54, 0.032258064
    %v58 = vlaneseq
    %v59 = vshrl.u32 %v58, 7
    %v60 = vsub.s32 0, %v59
    %v61 = vrot.slane %v33, %v60
    %v63 = vmul.f32 %v61, %v45
    %v64 = vmul.f32 %v61, %v46
    %v65 = vrsqrt.pop %v55
    %v66 = vmul.f32 %v55, %v65
    %vm67 = vcmp.eq.f32.partialorder %v55, inf
    %v68 = vsel %vm67, %v55, %v66
    %vm69 = vcmp.eq.f32.partialorder %v55, 0.0
    %v70 = vand.u32 %v55, 2147483648
    %v71 = vsel %vm69, %v70, %v68
    %v72 = vrsqrt.pop %v56
    %v73 = vmul.f32 %v56, %v72
    %vm74 = vcmp.eq.f32.partialorder %v56, inf
    %v75 = vsel %vm74, %v56, %v73
    %vm76 = vcmp.eq.f32.partialorder %v56, 0.0
    %v77 = vand.u32 %v56, 2147483648
    %v78 = vsel %vm76, %v77, %v75
    %v79 = vadd.f32 %v71, 1e-06
    %v80 = vadd.f32 %v78, 1e-06
    %v81 = vrcp.pop %v79
    %v82 = vmul.f32 %v63, %v81
    %v83 = vrcp.pop %v80
    %v84 = vmul.f32 %v64, %v83
    %v86 = vlaneseq
    %v87 = vshrl.u32 %v86, 7
    %v88 = vsub.s32 0, %v87
    %v89 = vrot.slane %v34, %v88
    %v91 = vadd.f32 %v82, %v89
    %v92 = vadd.f32 %v84, %v89
    %v93 = vpack.c.bf16 %v92, %v91
    %v95 = vunpack.c.l.b16 %v93
    %v96 = vunpack.c.h.b16 %v93
    %v97 = vpack.c.b16 %v95, %v95
    %v98 = vpack.c.b16 %v96, %v96
    %vm101 = vcmask 257024
    %102 = vst.msk [vmem:[#allocation2] sm:$0xf] %vm101, %v97
    %103 = vst.msk [vmem:[#allocation2 + $0x4] sm:$0xf] %vm101, %v98
    %v104 = vld [vmem:[%s6] sm:$0x1]
    %v106 = vlaneseq
    %v107 = vshrl.u32 %v106, 7
    %v108 = vsub.s32 0, %v107
    %v109 = vrot.slane %v104, %v108
    %v111 = vadd.f32 %v31, %v109
    %v112 = vadd.f32 %v32, %v109
    %113 = vst.msk [vmem:[#allocation3] sm:$0xff] %vm35, %v111
    %114 = vst.msk [vmem:[#allocation3 + $0x8] sm:$0xff] %vm35, %v112
  $region33: #{_lambda_.5} parent=0 // pred_fallthru
    _
  %v115 = vld [vmem:[#allocation2] sm:$0xf]
  %v116 = vld [vmem:[#allocation2 + $0x4] sm:$0xf]
  %v117 = vld [vmem:[%s3] sm:$0xf]
  %v118 = vld [vmem:[%s3 + $0x4] sm:$0xf]
  %v119 = vld [vmem:[%s3 + $0x8] sm:$0xf]
  %v120 = vld [vmem:[%s3 + $0xc] sm:$0xf]
  %v121 = vld [vmem:[%s4] sm:$0x1]
  %v123 = vlaneseq
  %v124 = vshrl.u32 %v123, 7
  %v125 = vsub.s32 0, %v124
  %v126 = vrot.slane %v121, %v125
  %v130 = vunpack.c.l.b16 %v115
  %v131 = vunpack.c.l.b16 %v116
  %v132 = vpack.c.b16 %v131, %v130
  %v137 = vunpack.c.l.b16 %v117
  %v138 = vunpack.c.l.b16 %v118
  %v139 = vunpack.c.l.b16 %v119
  %v140 = vunpack.c.l.b16 %v120
  %v141 = vpack.c.b16 %v138, %v137
  %v142 = vpack.c.b16 %v140, %v139
  %vm145 = vcmask 261120
  %v147 = vsel %vm145, %v132, 0
  %149 = vmatprep.subr.bf16.mxu0 0
  %150 = vmatpush1.bf16.msra.mxu0 0
  %151 = vmatprep.subr.bf16.mxu0 0
  %152 = vmatpush1.bf16.msra.mxu0 0
  %153 = vmatprep.subr.bf16.mxu0 0
  %154 = vmatpush1.bf16.msra.mxu0 0
  %155 = vmatprep.subr.bf16.mxu0 0
  %156 = vmatpush1.bf16.msra.mxu0 0
  %157 = vmatprep.subr.bf16.mxu0 0
  %158 = vmatpush1.bf16.msra.mxu0 0
  %159 = vmatprep.subr.bf16.mxu0 0
  %160 = vmatpush1.bf16.msra.mxu0 0
  %161 = vmatprep.subr.bf16.mxu0 0
  %162 = vmatpush1.bf16.msra.mxu0 %v142
  %163 = vmatprep.subr.bf16.mxu0 0
  %164 = vmatpush1.bf16.msra.mxu0 %v141
  %165 = vmatprep.subr.bf16.mxu0 0
  %166 = vmatpush2.bf16.msra.mxu0 0
  %167 = vmatprep.subr.bf16.mxu0 0
  %168 = vmatpush2.bf16.msra.mxu0 0
  %169 = vmatprep.subr.bf16.mxu0 0
  %170 = vmatpush2.bf16.msra.mxu0 0
  %171 = vmatprep.subr.bf16.mxu0 0
  %172 = vmatpush2.bf16.msra.mxu0 0
  %173 = vmatprep.subr.bf16.mxu0 0
  %174 = vmatpush2.bf16.msra.mxu0 0
  %175 = vmatprep.subr.bf16.mxu0 0
  %176 = vmatpush2.bf16.msra.mxu0 0
  %177 = vmatprep.subr.bf16.mxu0 0
  %178 = vmatpush2.bf16.msra.mxu0 0
  %179 = vmatprep.subr.bf16.mxu0 0
  %180 = vmatpush2.bf16.msra.mxu0 0
  %181 = vmatprep.mubr.bf16.mxu0 0
  %182 = vmatmul.mubr.bf16.gmra.mxu0 %v147
  %v183 = vpop.f32.mrf.mxu0
  %v184 = vadd.f32 %v126, %v183
  %v185 = vpop.f32.mrf.mxu0
  %v186 = vpop.f32.mrf.mxu0
  %v187 = vadd.f32 %v126, %v186
  %v188 = vpop.f32.mrf.mxu0
  %189 = vdwg.mxu0
  %v190 = vmax.f32 %v184, 0.0
  %v191 = vmax.f32 %v187, 0.0
  %v192 = vld [vmem:[#allocation3] sm:$0xff]
  %v193 = vld [vmem:[#allocation3 + $0x8] sm:$0xff]
  %v194 = vpack.c.bf16 %v191, %v190
  %v195 = vld [vmem:[%s5] sm:$0xf]
  %v196 = vld [vmem:[%s5 + $0x4] sm:$0xf]
  %v197 = vld [vmem:[%s5 + $0x8] sm:$0xf]
  %v198 = vld [vmem:[%s5 + $0xc] sm:$0xf]
  %v199 = vld [vmem:[%s5 + $0x10] sm:$0xf]
  %v200 = vld [vmem:[%s5 + $0x14] sm:$0xf]
  %v201 = vld [vmem:[%s5 + $0x18] sm:$0xf]
  %v202 = vld [vmem:[%s5 + $0x1c] sm:$0xf]
  %v211 = vunpack.c.l.b16 %v195
  %v212 = vunpack.c.l.b16 %v196
  %v213 = vunpack.c.l.b16 %v197
  %v214 = vunpack.c.l.b16 %v198
  %v215 = vunpack.c.l.b16 %v199
  %v216 = vunpack.c.l.b16 %v200
  %v217 = vunpack.c.l.b16 %v201
  %v218 = vunpack.c.l.b16 %v202
  %v219 = vpack.c.b16 %v212, %v211
  %v220 = vpack.c.b16 %v214, %v213
  %v221 = vpack.c.b16 %v216, %v215
  %v222 = vpack.c.b16 %v218, %v217
  %vm227 = vcmask 523264
  %v229 = vsel %vm227, %v194, 0
  %231 = vmatprep.subr.bf16.mxu0 0
  %232 = vmatpush1.bf16.msra.mxu0 0
  %233 = vmatprep.subr.bf16.mxu0 0
  %234 = vmatpush1.bf16.msra.mxu0 0
  %235 = vmatprep.subr.bf16.mxu0 0
  %236 = vmatpush1.bf16.msra.mxu0 0
  %237 = vmatprep.subr.bf16.mxu0 0
  %238 = vmatpush1.bf16.msra.mxu0 0
  %239 = vmatprep.subr.bf16.mxu0 0
  %240 = vmatpush1.bf16.msra.mxu0 %v222
  %241 = vmatprep.subr.bf16.mxu0 0
  %242 = vmatpush1.bf16.msra.mxu0 %v221
  %243 = vmatprep.subr.bf16.mxu0 0
  %244 = vmatpush1.bf16.msra.mxu0 %v220
  %245 = vmatprep.subr.bf16.mxu0 0
  %246 = vmatpush1.bf16.msra.mxu0 %v219
  %247 = vmatprep.subr.bf16.mxu0 0
  %248 = vmatpush2.bf16.msra.mxu0 0
  %249 = vmatprep.subr.bf16.mxu0 0
  %250 = vmatpush2.bf16.msra.mxu0 0
  %251 = vmatprep.subr.bf16.mxu0 0
  %252 = vmatpush2.bf16.msra.mxu0 0
  %253 = vmatprep.subr.bf16.mxu0 0
  %254 = vmatpush2.bf16.msra.mxu0 0
  %255 = vmatprep.subr.bf16.mxu0 0
  %256 = vmatpush2.bf16.msra.mxu0 0
  %257 = vmatprep.subr.bf16.mxu0 0
  %258 = vmatpush2.bf16.msra.mxu0 0
  %259 = vmatprep.subr.bf16.mxu0 0
  %260 = vmatpush2.bf16.msra.mxu0 0
  %261 = vmatprep.subr.bf16.mxu0 0
  %262 = vmatpush2.bf16.msra.mxu0 0
  %263 = vmatprep.mubr.bf16.mxu0 0
  %264 = vmatmul.mubr.bf16.gmra.mxu0 %v229
  %v265 = vpop.f32.mrf.mxu0
  %v266 = vadd.f32 0.0, %v265
  %v267 = vpop.f32.mrf.mxu0
  %v268 = vpop.f32.mrf.mxu0
  %v269 = vadd.f32 0.0, %v268
  %v270 = vpop.f32.mrf.mxu0
  %271 = vdwg.mxu0
  %v272 = vadd.f32 %v192, %v266
  %v273 = vadd.f32 %v193, %v269
  %274 = vst.msk [vmem:[#allocation3] sm:$0xff] %vm145, %v272
  %275 = vst.msk [vmem:[#allocation3 + $0x8] sm:$0xff] %vm145, %v273
  // Predicated region
  $region34: #{_lambda_.5} parent=0 // pred_check
    %p276 = pneg %p27
  $region35: #{_lambda_.5} parent=0 // pred_check_branch
    %278 = sbr.rel (%p276) target = $region37
  $region36: #{_lambda_.5} parent=0 // pred_region
    %v279 = vld [vmem:[#allocation3] sm:$0xff]
    %v280 = vld [vmem:[#allocation3 + $0x8] sm:$0xff]
    %281 = vst.msk [vmem:[%s7] sm:$0xff] %vm145, %v279
    %282 = vst.msk [vmem:[%s7 + $0x8] sm:$0xff] %vm145, %v280
  $region37: #{_lambda_.5} parent=0 // pred_fallthru
    _
  // Predicated region
  $region38: #{_lambda_.5} parent=0 // pred_check
    _
  $region39: #{_lambda_.5} parent=0 // pred_check_branch
    %284 = sbr.rel (0) target = $region41
  $region40: #{_lambda_.5} parent=0 // pred_region
    _
  $region41: #{_lambda_.5} parent=0 // pred_fallthru
    _
  // Predicated region
  $region42: #{_lambda_.5} parent=0 // pred_check
    _
  $region43: #{_lambda_.5} parent=0 // pred_check_branch
    %286 = sbr.rel (0) target = $region45
  $region44: #{_lambda_.5} parent=0 // pred_region
    _
  $region45: #{_lambda_.5} parent=0 // pred_fallthru
    _

// kernel: _lambda_.6
$region0: #{_lambda_.6}
  #allocation0 [shape = 'u32[]', space=smem, size = 0x4, offset = 0x4, fixed_abs, tag = 'smem constant byte address 0x4 - core index']
  #allocation1 [shape = 'u32[144,128]{1,0:T(1,128)}', space=vmem, size = 0x12000, scoped, tag = 'internal scratch']
  %s0 = inlined_call_operand.vmem [shape: f32[2,8,32], index: 0, kind: input, shape index: {}]
  %s1 = inlined_call_operand.vmem [shape: f32[1,32], index: 1, kind: input, shape index: {}]
  %s2 = inlined_call_operand.vmem [shape: f32[1,32], index: 2, kind: input, shape index: {}]
  %s3 = inlined_call_operand.vmem [shape: bf16[32,96], index: 3, kind: input, shape index: {}]
  %s4 = inlined_call_operand.vmem [shape: f32[1,96], index: 4, kind: input, shape index: {}]
  %s5 = inlined_call_operand.vmem [shape: f32[2,1,8], index: 5, kind: input, shape index: {}]
  %s6 = inlined_call_operand.vmem [shape: bf16[32,32], index: 6, kind: input, shape index: {}]
  %s7 = inlined_call_operand.vmem [shape: f32[1,32], index: 7, kind: input, shape index: {}]
  %s8 = inlined_call_operand.vmem [shape: f32[2,8,32], index: 8, kind: output, shape index: {}]
  %s9 = sld [smem:[#allocation0]]
  $region65: #{_lambda_.6} parent=0
    _
  %s11 = ssub.s32 1, %s9
  %s12 = scalar_select 0, %s11, %s9
  loop: start=0, step=1, limit=4
  $region2: #{_lambda_.6} parent=0 // loop_pre_header
    _
  $region3: #{_lambda_.6} parent=0 // loop_header
    %s14 = sphi 0, %s18
    %p15 = scmp.ge.s32.totalorder %s14, 4
    %s24 = sphi 0, %s26
    %s27 = sphi 0, %s24
    %s28 = sphi 0, %s27
    %s44 = sphi 0, %s28
    %s48 = sphi 0, %s48
    %s50 = sphi 0, %s48
    %s51 = sphi 0, %s50
    %s65 = sphi 0, %s51
    %s69 = sphi 0, %s69
    %s71 = sphi 0, %s69
    %s72 = sphi 0, %s71
    %s86 = sphi 0, %s72
    %s90 = sphi 0, %s90
    %s92 = sphi 0, %s90
    %s93 = sphi 0, %s92
    %s107 = sphi 0, %s93
    %s111 = sphi 0, %s111
    %s113 = sphi 0, %s111
    %s114 = sphi 0, %s113
    %s128 = sphi 0, %s114
    %s134 = sphi 0, %s136
    %s137 = sphi 0, %s134
    %s138 = sphi 0, %s137
    %s154 = sphi 0, %s138
    %s158 = sphi 0, %s158
    %s160 = sphi 0, %s158
    %s161 = sphi 0, %s160
    %s175 = sphi 0, %s161
    %s179 = sphi 0, %s179
    %s181 = sphi 0, %s179
    %s182 = sphi 0, %s181
    %s196 = sphi 0, %s182
    %s202 = sphi 0, %s204
    %s205 = sphi 0, %s202
    %s206 = sphi 0, %s205
    %s222 = sphi 0, %s206
  $region4: #{_lambda_.6} parent=0 // loop_header_branch
    %17 = sbr.rel (%p15) target = $region8
  $region5: #{_lambda_.6} parent=0 // loop_body
    %s19 = ssub.s32 %s14, 1
    %s20 = ssub.s32 %s14, 2
    %s21 = sadd.s32 %s14, 1
    %s22 = ssub.s32 %s14, %s21
    %p23 = scmp.eq.s32.totalorder %s22, 0
    %s25 = sadd.s32 %s24, 1
    %s26 = scalar_select %p23, %s24, %s25
    %p29 = pneg %p23
    %p30 = scmp.eq.s32.totalorder %s14, 1
    %p31 = por %p29, %p30
    %p32 = scmp.ne.s32.totalorder %s24, %s27
    %p33 = scmp.eq.s32.totalorder %s14, 0
    %p34 = por %p32, %p33
    %p35 = scmp.ne.s32.totalorder %s24, %s27
    %p36 = scmp.eq.s32.totalorder %s19, 1
    %p37 = por %p35, %p36
    %p38 = scmp.ne.s32.totalorder %s27, %s28
    %p39 = scmp.eq.s32.totalorder %s19, 0
    %p40 = por %p38, %p39
    %p41 = scmp.ne.s32.totalorder %s27, %s28
    %p42 = scmp.eq.s32.totalorder %s20, 1
    %p43 = por %p41, %p42
    %p45 = scmp.ne.s32.totalorder %s28, %s44
    %p46 = scmp.eq.s32.totalorder %s20, 0
    %p47 = por %p45, %p46
    %s49 = sadd.s32 %s48, 1
    %p52 = scmp.eq.s32.totalorder %s14, 1
    %p53 = scmp.ne.s32.totalorder %s48, %s50
    %p54 = scmp.eq.s32.totalorder %s14, 0
    %p55 = por %p53, %p54
    %p56 = scmp.ne.s32.totalorder %s48, %s50
    %p57 = scmp.eq.s32.totalorder %s19, 1
    %p58 = por %p56, %p57
    %p59 = scmp.ne.s32.totalorder %s50, %s51
    %p60 = scmp.eq.s32.totalorder %s19, 0
    %p61 = por %p59, %p60
    %p62 = scmp.ne.s32.totalorder %s50, %s51
    %p63 = scmp.eq.s32.totalorder %s20, 1
    %p64 = por %p62, %p63
    %p66 = scmp.ne.s32.totalorder %s51, %s65
    %p67 = scmp.eq.s32.totalorder %s20, 0
    %p68 = por %p66, %p67
    %s70 = sadd.s32 %s69, 1
    %p73 = scmp.eq.s32.totalorder %s14, 1
    %p74 = scmp.ne.s32.totalorder %s69, %s71
    %p75 = scmp.eq.s32.totalorder %s14, 0
    %p76 = por %p74, %p75
    %p77 = scmp.ne.s32.totalorder %s69, %s71
    %p78 = scmp.eq.s32.totalorder %s19, 1
    %p79 = por %p77, %p78
    %p80 = scmp.ne.s32.totalorder %s71, %s72
    %p81 = scmp.eq.s32.totalorder %s19, 0
    %p82 = por %p80, %p81
    %p83 = scmp.ne.s32.totalorder %s71, %s72
    %p84 = scmp.eq.s32.totalorder %s20, 1
    %p85 = por %p83, %p84
    %p87 = scmp.ne.s32.totalorder %s72, %s86
    %p88 = scmp.eq.s32.totalorder %s20, 0
    %p89 = por %p87, %p88
    %s91 = sadd.s32 %s90, 1
    %p94 = scmp.eq.s32.totalorder %s14, 1
    %p95 = scmp.ne.s32.totalorder %s90, %s92
    %p96 = scmp.eq.s32.totalorder %s14, 0
    %p97 = por %p95, %p96
    %p98 = scmp.ne.s32.totalorder %s90, %s92
    %p99 = scmp.eq.s32.totalorder %s19, 1
    %p100 = por %p98, %p99
    %p101 = scmp.ne.s32.totalorder %s92, %s93
    %p102 = scmp.eq.s32.totalorder %s19, 0
    %p103 = por %p101, %p102
    %p104 = scmp.ne.s32.totalorder %s92, %s93
    %p105 = scmp.eq.s32.totalorder %s20, 1
    %p106 = por %p104, %p105
    %p108 = scmp.ne.s32.totalorder %s93, %s107
    %p109 = scmp.eq.s32.totalorder %s20, 0
    %p110 = por %p108, %p109
    %s112 = sadd.s32 %s111, 1
    %p115 = scmp.eq.s32.totalorder %s14, 1
    %p116 = scmp.ne.s32.totalorder %s111, %s113
    %p117 = scmp.eq.s32.totalorder %s14, 0
    %p118 = por %p116, %p117
    %p119 = scmp.ne.s32.totalorder %s111, %s113
    %p120 = scmp.eq.s32.totalorder %s19, 1
    %p121 = por %p119, %p120
    %p122 = scmp.ne.s32.totalorder %s113, %s114
    %p123 = scmp.eq.s32.totalorder %s19, 0
    %p124 = por %p122, %p123
    %p125 = scmp.ne.s32.totalorder %s113, %s114
    %p126 = scmp.eq.s32.totalorder %s20, 1
    %p127 = por %p125, %p126
    %p129 = scmp.ne.s32.totalorder %s114, %s128
    %p130 = scmp.eq.s32.totalorder %s20, 0
    %p131 = por %p129, %p130
    %s132 = ssub.s32 %s14, %s21
    %p133 = scmp.eq.s32.totalorder %s132, 0
    %s135 = sadd.s32 %s134, 1
    %s136 = scalar_select %p133, %s134, %s135
    %p139 = pneg %p133
    %p140 = scmp.eq.s32.totalorder %s14, 1
    %p141 = por %p139, %p140
    %p142 = scmp.ne.s32.totalorder %s134, %s137
    %p143 = scmp.eq.s32.totalorder %s14, 0
    %p144 = por %p142, %p143
    %p145 = scmp.ne.s32.totalorder %s134, %s137
    %p146 = scmp.eq.s32.totalorder %s19, 1
    %p147 = por %p145, %p146
    %p148 = scmp.ne.s32.totalorder %s137, %s138
    %p149 = scmp.eq.s32.totalorder %s19, 0
    %p150 = por %p148, %p149
    %p151 = scmp.ne.s32.totalorder %s137, %s138
    %p152 = scmp.eq.s32.totalorder %s20, 1
    %p153 = por %p151, %p152
    %p155 = scmp.ne.s32.totalorder %s138, %s154
    %p156 = scmp.eq.s32.totalorder %s20, 0
    %p157 = por %p155, %p156
    %s159 = sadd.s32 %s158, 1
    %p162 = scmp.eq.s32.totalorder %s14, 1
    %p163 = scmp.ne.s32.totalorder %s158, %s160
    %p164 = scmp.eq.s32.totalorder %s14, 0
    %p165 = por %p163, %p164
    %p166 = scmp.ne.s32.totalorder %s158, %s160
    %p167 = scmp.eq.s32.totalorder %s19, 1
    %p168 = por %p166, %p167
    %p169 = scmp.ne.s32.totalorder %s160, %s161
    %p170 = scmp.eq.s32.totalorder %s19, 0
    %p171 = por %p169, %p170
    %p172 = scmp.ne.s32.totalorder %s160, %s161
    %p173 = scmp.eq.s32.totalorder %s20, 1
    %p174 = por %p172, %p173
    %p176 = scmp.ne.s32.totalorder %s161, %s175
    %p177 = scmp.eq.s32.totalorder %s20, 0
    %p178 = por %p176, %p177
    %s180 = sadd.s32 %s179, 1
    %p183 = scmp.eq.s32.totalorder %s14, 1
    %p184 = scmp.ne.s32.totalorder %s179, %s181
    %p185 = scmp.eq.s32.totalorder %s14, 0
    %p186 = por %p184, %p185
    %p187 = scmp.ne.s32.totalorder %s179, %s181
    %p188 = scmp.eq.s32.totalorder %s19, 1
    %p189 = por %p187, %p188
    %p190 = scmp.ne.s32.totalorder %s181, %s182
    %p191 = scmp.eq.s32.totalorder %s19, 0
    %p192 = por %p190, %p191
    %p193 = scmp.ne.s32.totalorder %s181, %s182
    %p194 = scmp.eq.s32.totalorder %s20, 1
    %p195 = por %p193, %p194
    %p197 = scmp.ne.s32.totalorder %s182, %s196
    %p198 = scmp.eq.s32.totalorder %s20, 0
    %p199 = por %p197, %p198
    %s200 = ssub.s32 %s14, %s21
    %p201 = scmp.eq.s32.totalorder %s200, 0
    %s203 = sadd.s32 %s202, 1
    %s204 = scalar_select %p201, %s202, %s203
    %p207 = pneg %p201
    %p208 = scmp.eq.s32.totalorder %s14, 1
    %p209 = por %p207, %p208
    %p210 = scmp.ne.s32.totalorder %s202, %s205
    %p211 = scmp.eq.s32.totalorder %s14, 0
    %p212 = por %p210, %p211
    %p213 = scmp.ne.s32.totalorder %s202, %s205
    %p214 = scmp.eq.s32.totalorder %s19, 1
    %p215 = por %p213, %p214
    %p216 = scmp.ne.s32.totalorder %s205, %s206
    %p217 = scmp.eq.s32.totalorder %s19, 0
    %p218 = por %p216, %p217
    %p219 = scmp.ne.s32.totalorder %s205, %s206
    %p220 = scmp.eq.s32.totalorder %s20, 1
    %p221 = por %p219, %p220
    %p223 = scmp.ne.s32.totalorder %s206, %s222
    %p224 = scmp.eq.s32.totalorder %s20, 0
    %p225 = por %p223, %p224
    %p226 = scmp.le.s32.totalorder 1, %s14
    %p227 = scmp.lt.s32.totalorder %s14, 3
    %p228 = pnand %p226, %p227
    %p229 = pneg %p228
    // Predicated region
    $region9: #{_lambda_.6} parent=5 // pred_check
      _
    $region10: #{_lambda_.6} parent=5 // pred_check_branch
      %231 = sbr.rel (%p228) target = $region12
    $region11: #{_lambda_.6} parent=5 // pred_region
      %s232 = ssub.s32 %s14, 1
      // Predicated region
      $region13: #{_lambda_.6} parent=11 // pred_check
        %p233 = pneg %p61
      $region14: #{_lambda_.6} parent=11 // pred_check_branch
        %235 = sbr.rel (%p233) target = $region16
      $region15: #{_lambda_.6} parent=11 // pred_region
        _
      $region16: #{_lambda_.6} parent=11 // pred_fallthru
        _
      // Predicated region
      $region17: #{_lambda_.6} parent=11 // pred_check
        %p236 = pneg %p82
      $region18: #{_lambda_.6} parent=11 // pred_check_branch
        %238 = sbr.rel (%p236) target = $region20
      $region19: #{_lambda_.6} parent=11 // pred_region
        _
      $region20: #{_lambda_.6} parent=11 // pred_fallthru
        _
      // Predicated region
      $region21: #{_lambda_.6} parent=11 // pred_check
        %p239 = pneg %p103
      $region22: #{_lambda_.6} parent=11 // pred_check_branch
        %241 = sbr.rel (%p239) target = $region24
      $region23: #{_lambda_.6} parent=11 // pred_region
        _
      $region24: #{_lambda_.6} parent=11 // pred_fallthru
        _
      // Predicated region
      $region25: #{_lambda_.6} parent=11 // pred_check
        %p242 = pneg %p124
      $region26: #{_lambda_.6} parent=11 // pred_check_branch
        %244 = sbr.rel (%p242) target = $region28
      $region27: #{_lambda_.6} parent=11 // pred_region
        _
      $region28: #{_lambda_.6} parent=11 // pred_fallthru
        _
      // Predicated region
      $region29: #{_lambda_.6} parent=11 // pred_check
        %p245 = pneg %p171
      $region30: #{_lambda_.6} parent=11 // pred_check_branch
        %247 = sbr.rel (%p245) target = $region32
      $region31: #{_lambda_.6} parent=11 // pred_region
        _
      $region32: #{_lambda_.6} parent=11 // pred_fallthru
        _
      // Predicated region
      $region33: #{_lambda_.6} parent=11 // pred_check
        %p248 = pneg %p192
      $region34: #{_lambda_.6} parent=11 // pred_check_branch
        %250 = sbr.rel (%p248) target = $region36
      $region35: #{_lambda_.6} parent=11 // pred_region
        _
      $region36: #{_lambda_.6} parent=11 // pred_fallthru
        _
    $region12: #{_lambda_.6} parent=5 // pred_fallthru
      _
    %p251 = scmp.lt.s32.totalorder %s14, 2
    // Predicated region
    $region37: #{_lambda_.6} parent=5 // pred_check
      %p252 = pneg %p251
    $region38: #{_lambda_.6} parent=5 // pred_check_branch
      %254 = sbr.rel (%p252) target = $region40
    $region39: #{_lambda_.6} parent=5 // pred_region
      // Predicated region
      $region41: #{_lambda_.6} parent=39 // pred_check
        %p255 = pneg %p34
      $region42: #{_lambda_.6} parent=39 // pred_check_branch
        %257 = sbr.rel (%p255) target = $region44
      $region43: #{_lambda_.6} parent=39 // pred_region
        %p258 = scmp.lt.s32.totalorder %s14, 1
        %s259 = scalar_select %p258, %s14, 1
        %s260 = smul.addr %s259, 8
        %s261 = scalar_lea.vmem %s0, %s260
      $region44: #{_lambda_.6} parent=39 // pred_fallthru
        _
      // Predicated region
      $region45: #{_lambda_.6} parent=39 // pred_check
        %p262 = pneg %p144
      $region46: #{_lambda_.6} parent=39 // pred_check_branch
        %264 = sbr.rel (%p262) target = $region48
      $region47: #{_lambda_.6} parent=39 // pred_region
        %p265 = scmp.lt.s32.totalorder %s14, 1
        %s266 = scalar_select %p265, %s14, 1
        %s267 = scalar_lea.vmem %s5, %s266
      $region48: #{_lambda_.6} parent=39 // pred_fallthru
        _
    $region40: #{_lambda_.6} parent=5 // pred_fallthru
      _
    %p268 = scmp.le.s32.totalorder 1, %s14
    %p269 = scmp.lt.s32.totalorder %s14, 3
    %p270 = pnand %p268, %p269
    %p271 = pneg %p270
    // Predicated region
    $region49: #{_lambda_.6} parent=5 // pred_check
      _
    $region50: #{_lambda_.6} parent=5 // pred_check_branch
      %273 = sbr.rel (%p270) target = $region52
    $region51: #{_lambda_.6} parent=5 // pred_region
      %s274 = ssub.s32 %s14, 1
      %p275 = scmp.lt.s32.totalorder %s19, 1
      %s276 = scalar_select %p275, %s19, 1
      %s277 = smul.addr %s276, 8
      %s278 = scalar_lea.vmem %s0, %s277
      %p279 = pneg %p40
      %p280 = pneg %p37
      %p281 = pneg %p61
      %p282 = pneg %p58
      %p283 = pneg %p82
      %p284 = pneg %p79
      %p285 = pneg %p103
      %p286 = pneg %p100
      %p287 = pneg %p124
      %p288 = pneg %p121
      %p289 = scmp.lt.s32.totalorder %s19, 1
      %s290 = scalar_select %p289, %s19, 1
      %s291 = scalar_lea.vmem %s5, %s290
      %p292 = pneg %p150
      %p293 = pneg %p147
      %p294 = pneg %p171
      %p295 = pneg %p168
      %p296 = pneg %p192
      %p297 = pneg %p189
      %p298 = pneg %p218
      %p299 = pneg %p215
      %p300 = scmp.lt.s32.totalorder %s19, 1
      %s301 = scalar_select %p300, %s19, 1
      %s302 = smul.addr %s301, 8
      %s303 = scalar_lea.vmem %s8, %s302
      %p304 = scmp.lt.s32.totalorder %s19, 1
      %s305 = scalar_select %p304, %s19, 1
      %s306 = smul.addr %s305, 8
      %s307 = scalar_lea.vmem %s0, %s306
      %p308 = scmp.lt.s32.totalorder %s19, 1
      %s309 = scalar_select %p308, %s19, 1
      %s310 = scalar_lea.vmem %s5, %s309
      %p311 = scmp.lt.s32.totalorder %s19, 1
      %s312 = scalar_select %p311, %s19, 1
      %s313 = smul.addr %s312, 8
      %s314 = scalar_lea.vmem %s8, %s313
      %v316 = vld [vmem:[%s307] sm:$0xff]
      %v317 = vld [vmem:[%s1] sm:$0x1]
      %v318 = vld [vmem:[%s2] sm:$0x1]
      %vm319 = vcmask 261120
      %v320 = vsel %vm319, %v316, 0.0
      %321 = vadd.xlane.f32.xlu0 %v320
      %v322 = vpop.xlane.xlu0 %321
      %v323 = vrcp.pop 32.0
      %v324 = vmul.f32 %v322, %v323
      %v325 = vsub.f32 %v316, %v324
      %v326 = vmul.f32 %v325, %v325
      %v327 = vsel %vm319, %v326, 0.0
      %328 = vadd.xlane.f32.xlu0 %v327
      %v329 = vpop.xlane.xlu0 %328
      %v330 = vmul.f32 %v329, 0.032258064
      %v332 = vlaneseq
      %v333 = vshrl.u32 %v332, 7
      %v334 = vsub.s32 0, %v333
      %v335 = vrot.slane %v317, %v334
      %v337 = vmul.f32 %v335, %v325
      %v338 = vrsqrt.pop %v330
      %v339 = vmul.f32 %v330, %v338
      %vm340 = vcmp.eq.f32.partialorder %v330, inf
      %v341 = vsel %vm340, %v330, %v339
      %vm342 = vcmp.eq.f32.partialorder %v330, 0.0
      %v343 = vand.u32 %v330, 2147483648
      %v344 = vsel %vm342, %v343, %v341
      %v345 = vadd.f32 %v344, 1e-06
      %v346 = vrcp.pop %v345
      %v347 = vmul.f32 %v337, %v346
      %v349 = vlaneseq
      %v350 = vshrl.u32 %v349, 7
      %v351 = vsub.s32 0, %v350
      %v352 = vrot.slane %v318, %v351
      %v354 = vadd.f32 %v347, %v352
      %v355 = vpack.c.bf16 %v354, %v354
      %v356 = vld [vmem:[%s3] sm:$0xf]
      %v357 = vld [vmem:[%s3 + $0x4] sm:$0xf]
      %v358 = vld [vmem:[%s3 + $0x8] sm:$0xf]
      %v359 = vld [vmem:[%s3 + $0xc] sm:$0xf]
      %v360 = vld [vmem:[%s4] sm:$0x1]
      %v362 = vlaneseq
      %v363 = vshrl.u32 %v362, 7
      %v364 = vsub.s32 0, %v363
      %v365 = vrot.slane %v360, %v364
      %v371 = vunpack.c.l.b16 %v356
      %v372 = vunpack.c.l.b16 %v357
      %v373 = vunpack.c.l.b16 %v358
      %v374 = vunpack.c.l.b16 %v359
      %v375 = vpack.c.b16 %v372, %v371
      %v376 = vpack.c.b16 %v374, %v373
      %v380 = vsel %vm319, %v355, 0
      %382 = vmatprep.subr.bf16.mxu0 0
      %383 = vmatpush1.bf16.msra.mxu0 0
      %384 = vmatprep.subr.bf16.mxu0 0
      %385 = vmatpush1.bf16.msra.mxu0 0
      %386 = vmatprep.subr.bf16.mxu0 0
      %387 = vmatpush1.bf16.msra.mxu0 0
      %388 = vmatprep.subr.bf16.mxu0 0
      %389 = vmatpush1.bf16.msra.mxu0 0
      %390 = vmatprep.subr.bf16.mxu0 0
      %391 = vmatpush1.bf16.msra.mxu0 0
      %392 = vmatprep.subr.bf16.mxu0 0
      %393 = vmatpush1.bf16.msra.mxu0 0
      %394 = vmatprep.subr.bf16.mxu0 0
      %395 = vmatpush1.bf16.msra.mxu0 %v376
      %396 = vmatprep.subr.bf16.mxu0 0
      %397 = vmatpush1.bf16.msra.mxu0 %v375
      %398 = vmatprep.subr.bf16.mxu0 0
      %399 = vmatpush2.bf16.msra.mxu0 0
      %400 = vmatprep.subr.bf16.mxu0 0
      %401 = vmatpush2.bf16.msra.mxu0 0
      %402 = vmatprep.subr.bf16.mxu0 0
      %403 = vmatpush2.bf16.msra.mxu0 0
      %404 = vmatprep.subr.bf16.mxu0 0
      %405 = vmatpush2.bf16.msra.mxu0 0
      %406 = vmatprep.subr.bf16.mxu0 0
      %407 = vmatpush2.bf16.msra.mxu0 0
      %408 = vmatprep.subr.bf16.mxu0 0
      %409 = vmatpush2.bf16.msra.mxu0 0
      %410 = vmatprep.subr.bf16.mxu0 0
      %411 = vmatpush2.bf16.msra.mxu0 0
      %412 = vmatprep.subr.bf16.mxu0 0
      %413 = vmatpush2.bf16.msra.mxu0 0
      %414 = vmatprep.mubr.bf16.mxu0 0
      %415 = vmatmul.mubr.bf16.gmra.mxu0 %v380
      %v416 = vpop.f32.mrf.mxu0
      %v417 = vadd.f32 %v365, %v416
      %v418 = vpop.f32.mrf.mxu0
      %v419 = vpop.f32.mrf.mxu0
      %v420 = vpop.f32.mrf.mxu0
      %421 = vdwg.mxu0
      %v422 = vld [vmem:[%s310] sm:$0x1]
      %vm423 = vcmp.eq.f32.partialorder %v422, 0.0
      %v424 = vsel %vm423, -1e+09, 0.0
      %v425 = vmul.f32 %v417, 0.35355338
      %v426 = vpack.c.bf16 %v425, %v425
      %v427 = vpack.c.bf16 %v417, %v417
      %v429 = vlaneseq
      %v430 = vshrl.u32 %v429, 7
      %v431 = vsub.s32 0, %v430
      %v432 = vrot.slane %v424, %v431
      %435 = vrot.lane.b32.xlu0 %v427, 96
      %v436 = vpop.permute.xlu0 %435
      %vm437 = vcmask 64512
      %v439 = vsel %vm437, %v426, 0
      %v442 = vsel %vm437, %v436, 0
      %444 = vmatprep.subr.bf16.mxu0 0
      %445 = vmatpush1.bf16.xpose.msra.mxu0 0
      %446 = vmatprep.subr.bf16.mxu0 0
      %447 = vmatpush1.bf16.xpose.msra.mxu0 0
      %448 = vmatprep.subr.bf16.mxu0 0
      %449 = vmatpush1.bf16.xpose.msra.mxu0 0
      %450 = vmatprep.subr.bf16.mxu0 0
      %451 = vmatpush1.bf16.xpose.msra.mxu0 0
      %452 = vmatprep.subr.bf16.mxu0 0
      %453 = vmatpush1.bf16.xpose.msra.mxu0 0
      %454 = vmatprep.subr.bf16.mxu0 0
      %455 = vmatpush1.bf16.xpose.msra.mxu0 0
      %456 = vmatprep.subr.bf16.mxu0 0
      %457 = vmatpush1.bf16.xpose.msra.mxu0 0
      %458 = vmatprep.subr.bf16.mxu0 0
      %459 = vmatpush1.bf16.xpose.msra.mxu0 %v442
      %460 = vmatprep.subr.bf16.mxu0 0
      %461 = vmatpush2.bf16.xpose.msra.mxu0 0
      %462 = vmatprep.subr.bf16.mxu0 0
      %463 = vmatpush2.bf16.xpose.msra.mxu0 0
      %464 = vmatprep.subr.bf16.mxu0 0
      %465 = vmatpush2.bf16.xpose.msra.mxu0 0
      %466 = vmatprep.subr.bf16.mxu0 0
      %467 = vmatpush2.bf16.xpose.msra.mxu0 0
      %468 = vmatprep.subr.bf16.mxu0 0
      %469 = vmatpush2.bf16.xpose.msra.mxu0 0
      %470 = vmatprep.subr.bf16.mxu0 0
      %471 = vmatpush2.bf16.xpose.msra.mxu0 0
      %472 = vmatprep.subr.bf16.mxu0 0
      %473 = vmatpush2.bf16.xpose.msra.mxu0 0
      %474 = vmatprep.subr.bf16.mxu0 0
      %475 = vmatpush2.bf16.xpose.msra.mxu0 0
      %476 = vmatprep.mubr.bf16.mxu0 0
      %477 = vmatmul.mubr.bf16.gmra.mxu0 %v439
      %v478 = vpop.f32.mrf.mxu0
      %v479 = vadd.f32 %v432, %v478
      %v480 = vpop.f32.mrf.mxu0
      %v481 = vpop.f32.mrf.mxu0
      %v482 = vpop.f32.mrf.mxu0
      %483 = vdwg.mxu0
      %v484 = vsel %vm437, %v479, -inf
      %485 = vmax.xlane.f32.xlu0 %v484
      %v486 = vpop.xlane.xlu0 %485
      %v487 = vsub.f32 %v479, %v486
      %v488 = vmul.f32 %v487, 1.442695
      %v489 = vpow.pop %v488
      %v490 = vsel %vm437, %v489, 0.0
      %491 = vadd.xlane.f32.xlu0 %v490
      %v492 = vpop.xlane.xlu0 %491
      %v493 = vrcp.pop %v492
      %v494 = vmul.f32 %v489, %v493
      %v495 = vpack.c.bf16 %v494, %v494
      %496 = vrot.lane.b32.xlu0 %v427, 64
      %v497 = vpop.permute.xlu0 %496
      %v499 = vsel %vm437, %v495, 0
      %vm501 = vcmask 1043456
      %v503 = vsel %vm501, %v497, 0
      %505 = vmatprep.subr.bf16.mxu0 0
      %506 = vmatpush1.bf16.msra.mxu0 0
      %507 = vmatprep.subr.bf16.mxu0 0
      %508 = vmatpush1.bf16.msra.mxu0 0
      %509 = vmatprep.subr.bf16.mxu0 0
      %510 = vmatpush1.bf16.msra.mxu0 0
      %511 = vmatprep.subr.bf16.mxu0 0
      %512 = vmatpush1.bf16.msra.mxu0 0
      %513 = vmatprep.subr.bf16.mxu0 0
      %514 = vmatpush1.bf16.msra.mxu0 0
      %515 = vmatprep.subr.bf16.mxu0 0
      %516 = vmatpush1.bf16.msra.mxu0 0
      %517 = vmatprep.subr.bf16.mxu0 0
      %518 = vmatpush1.bf16.msra.mxu0 0
      %519 = vmatprep.subr.bf16.mxu0 0
      %520 = vmatpush1.bf16.msra.mxu0 %v503
      %521 = vmatprep.subr.bf16.mxu0 0
      %522 = vmatpush2.bf16.msra.mxu0 0
      %523 = vmatprep.subr.bf16.mxu0 0
      %524 = vmatpush2.bf16.msra.mxu0 0
      %525 = vmatprep.subr.bf16.mxu0 0
      %526 = vmatpush2.bf16.msra.mxu0 0
      %527 = vmatprep.subr.bf16.mxu0 0
      %528 = vmatpush2.bf16.msra.mxu0 0
      %529 = vmatprep.subr.bf16.mxu0 0
      %530 = vmatpush2.bf16.msra.mxu0 0
      %531 = vmatprep.subr.bf16.mxu0 0
      %532 = vmatpush2.bf16.msra.mxu0 0
      %533 = vmatprep.subr.bf16.mxu0 0
      %534 = vmatpush2.bf16.msra.mxu0 0
      %535 = vmatprep.subr.bf16.mxu0 0
      %536 = vmatpush2.bf16.msra.mxu0 0
      %537 = vmatprep.mubr.bf16.mxu0 0
      %538 = vmatmul.mubr.bf16.gmra.mxu0 %v499
      %v539 = vpop.f32.mrf.mxu0
      %v540 = vadd.f32 0.0, %v539
      %v541 = vpop.f32.mrf.mxu0
      %v542 = vpop.f32.mrf.mxu0
      %v543 = vpop.f32.mrf.mxu0
      %544 = vdwg.mxu0
      %546 = vrot.lane.b32.xlu0 %v426, 120
      %v547 = vpop.permute.xlu0 %546
      %548 = vrot.lane.b32.xlu0 %v427, 88
      %v549 = vpop.permute.xlu0 %548
      %v551 = vsel %vm437, %v547, 0
      %v554 = vsel %vm437, %v549, 0
      %556 = vmatprep.subr.bf16.mxu0 0
      %557 = vmatpush1.bf16.xpose.msra.mxu0 0
      %558 = vmatprep.subr.bf16.mxu0 0
      %559 = vmatpush1.bf16.xpose.msra.mxu0 0
      %560 = vmatprep.subr.bf16.mxu0 0
      %561 = vmatpush1.bf16.xpose.msra.mxu0 0
      %562 = vmatprep.subr.bf16.mxu0 0
      %563 = vmatpush1.bf16.xpose.msra.mxu0 0
      %564 = vmatprep.subr.bf16.mxu0 0
      %565 = vmatpush1.bf16.xpose.msra.mxu0 0
      %566 = vmatprep.subr.bf16.mxu0 0
      %567 = vmatpush1.bf16.xpose.msra.mxu0 0
      %568 = vmatprep.subr.bf16.mxu0 0
      %569 = vmatpush1.bf16.xpose.msra.mxu0 0
      %570 = vmatprep.subr.bf16.mxu0 0
      %571 = vmatpush1.bf16.xpose.msra.mxu0 %v554
      %572 = vmatprep.subr.bf16.mxu0 0
      %573 = vmatpush2.bf16.xpose.msra.mxu0 0
      %574 = vmatprep.subr.bf16.mxu0 0
      %575 = vmatpush2.bf16.xpose.msra.mxu0 0
      %576 = vmatprep.subr.bf16.mxu0 0
      %577 = vmatpush2.bf16.xpose.msra.mxu0 0
      %578 = vmatprep.subr.bf16.mxu0 0
      %579 = vmatpush2.bf16.xpose.msra.mxu0 0
      %580 = vmatprep.subr.bf16.mxu0 0
      %581 = vmatpush2.bf16.xpose.msra.mxu0 0
      %582 = vmatprep.subr.bf16.mxu0 0
      %583 = vmatpush2.bf16.xpose.msra.mxu0 0
      %584 = vmatprep.subr.bf16.mxu0 0
      %585 = vmatpush2.bf16.xpose.msra.mxu0 0
      %586 = vmatprep.subr.bf16.mxu0 0
      %587 = vmatpush2.bf16.xpose.msra.mxu0 0
      %588 = vmatprep.mubr.bf16.mxu0 0
      %589 = vmatmul.mubr.bf16.gmra.mxu0 %v551
      %v590 = vpop.f32.mrf.mxu0
      %v591 = vadd.f32 %v432, %v590
      %v592 = vpop.f32.mrf.mxu0
      %v593 = vpop.f32.mrf.mxu0
      %v594 = vpop.f32.mrf.mxu0
      %595 = vdwg.mxu0
      %v596 = vsel %vm437, %v591, -inf
      %597 = vmax.xlane.f32.xlu0 %v596
      %v598 = vpop.xlane.xlu0 %597
      %v599 = vsub.f32 %v591, %v598
      %v600 = vmul.f32 %v599, 1.442695
      %v601 = vpow.pop %v600
      %v602 = vsel %vm437, %v601, 0.0
      %603 = vadd.xlane.f32.xlu0 %v602
      %v604 = vpop.xlane.xlu0 %603
      %v605 = vrcp.pop %v604
      %v606 = vmul.f32 %v601, %v605
      %v607 = vpack.c.bf16 %v606, %v606
      %608 = vrot.lane.b32.xlu0 %v427, 56
      %v609 = vpop.permute.xlu0 %608
      %v611 = vsel %vm437, %v607, 0
      %v614 = vsel %vm501, %v609, 0
      %616 = vmatprep.subr.bf16.mxu0 0
      %617 = vmatpush1.bf16.msra.mxu0 0
      %618 = vmatprep.subr.bf16.mxu0 0
      %619 = vmatpush1.bf16.msra.mxu0 0
      %620 = vmatprep.subr.bf16.mxu0 0
      %621 = vmatpush1.bf16.msra.mxu0 0
      %622 = vmatprep.subr.bf16.mxu0 0
      %623 = vmatpush1.bf16.msra.mxu0 0
      %624 = vmatprep.subr.bf16.mxu0 0
      %625 = vmatpush1.bf16.msra.mxu0 0
      %626 = vmatprep.subr.bf16.mxu0 0
      %627 = vmatpush1.bf16.msra.mxu0 0
      %628 = vmatprep.subr.bf16.mxu0 0
      %629 = vmatpush1.bf16.msra.mxu0 0
      %630 = vmatprep.subr.bf16.mxu0 0
      %631 = vmatpush1.bf16.msra.mxu0 %v614
      %632 = vmatprep.subr.bf16.mxu0 0
      %633 = vmatpush2.bf16.msra.mxu0 0
      %634 = vmatprep.subr.bf16.mxu0 0
      %635 = vmatpush2.bf16.msra.mxu0 0
      %636 = vmatprep.subr.bf16.mxu0 0
      %637 = vmatpush2.bf16.msra.mxu0 0
      %638 = vmatprep.subr.bf16.mxu0 0
      %639 = vmatpush2.bf16.msra.mxu0 0
      %640 = vmatprep.subr.bf16.mxu0 0
      %641 = vmatpush2.bf16.msra.mxu0 0
      %642 = vmatprep.subr.bf16.mxu0 0
      %643 = vmatpush2.bf16.msra.mxu0 0
      %644 = vmatprep.subr.bf16.mxu0 0
      %645 = vmatpush2.bf16.msra.mxu0 0
      %646 = vmatprep.subr.bf16.mxu0 0
      %647 = vmatpush2.bf16.msra.mxu0 0
      %648 = vmatprep.mubr.bf16.mxu0 0
      %649 = vmatmul.mubr.bf16.gmra.mxu0 %v611
      %v650 = vpop.f32.mrf.mxu0
      %v651 = vadd.f32 0.0, %v650
      %v652 = vpop.f32.mrf.mxu0
      %v653 = vpop.f32.mrf.mxu0
      %v654 = vpop.f32.mrf.mxu0
      %655 = vdwg.mxu0
      %656 = vrot.lane.b32.xlu0 %v426, 112
      %v657 = vpop.permute.xlu0 %656
      %658 = vrot.lane.b32.xlu0 %v427, 80
      %v659 = vpop.permute.xlu0 %658
      %v661 = vsel %vm437, %v657, 0
      %v664 = vsel %vm437, %v659, 0
      %666 = vmatprep.subr.bf16.mxu0 0
      %667 = vmatpush1.bf16.xpose.msra.mxu0 0
      %668 = vmatprep.subr.bf16.mxu0 0
      %669 = vmatpush1.bf16.xpose.msra.mxu0 0
      %670 = vmatprep.subr.bf16.mxu0 0
      %671 = vmatpush1.bf16.xpose.msra.mxu0 0
      %672 = vmatprep.subr.bf16.mxu0 0
      %673 = vmatpush1.bf16.xpose.msra.mxu0 0
      %674 = vmatprep.subr.bf16.mxu0 0
      %675 = vmatpush1.bf16.xpose.msra.mxu0 0
      %676 = vmatprep.subr.bf16.mxu0 0
      %677 = vmatpush1.bf16.xpose.msra.mxu0 0
      %678 = vmatprep.subr.bf16.mxu0 0
      %679 = vmatpush1.bf16.xpose.msra.mxu0 0
      %680 = vmatprep.subr.bf16.mxu0 0
      %681 = vmatpush1.bf16.xpose.msra.mxu0 %v664
      %682 = vmatprep.subr.bf16.mxu0 0
      %683 = vmatpush2.bf16.xpose.msra.mxu0 0
      %684 = vmatprep.subr.bf16.mxu0 0
      %685 = vmatpush2.bf16.xpose.msra.mxu0 0
      %686 = vmatprep.subr.bf16.mxu0 0
      %687 = vmatpush2.bf16.xpose.msra.mxu0 0
      %688 = vmatprep.subr.bf16.mxu0 0
      %689 = vmatpush2.bf16.xpose.msra.mxu0 0
      %690 = vmatprep.subr.bf16.mxu0 0
      %691 = vmatpush2.bf16.xpose.msra.mxu0 0
      %692 = vmatprep.subr.bf16.mxu0 0
      %693 = vmatpush2.bf16.xpose.msra.mxu0 0
      %694 = vmatprep.subr.bf16.mxu0 0
      %695 = vmatpush2.bf16.xpose.msra.mxu0 0
      %696 = vmatprep.subr.bf16.mxu0 0
      %697 = vmatpush2.bf16.xpose.msra.mxu0 0
      %698 = vmatprep.mubr.bf16.mxu0 0
      %699 = vmatmul.mubr.bf16.gmra.mxu0 %v661
      %v700 = vpop.f32.mrf.mxu0
      %v701 = vadd.f32 %v432, %v700
      %v702 = vpop.f32.mrf.mxu0
      %v703 = vpop.f32.mrf.mxu0
      %v704 = vpop.f32.mrf.mxu0
      %705 = vdwg.mxu0
      %v706 = vsel %vm437, %v701, -inf
      %707 = vmax.xlane.f32.xlu0 %v706
      %v708 = vpop.xlane.xlu0 %707
      %v709 = vsub.f32 %v701, %v708
      %v710 = vmul.f32 %v709, 1.442695
      %v711 = vpow.pop %v710
      %v712 = vsel %vm437, %v711, 0.0
      %713 = vadd.xlane.f32.xlu0 %v712
      %v714 = vpop.xlane.xlu0 %713
      %v715 = vrcp.pop %v714
      %v716 = vmul.f32 %v711, %v715
      %v717 = vpack.c.bf16 %v716, %v716
      %718 = vrot.lane.b32.xlu0 %v427, 48
      %v719 = vpop.permute.xlu0 %718
      %v721 = vsel %vm437, %v717, 0
      %v724 = vsel %vm501, %v719, 0
      %726 = vmatprep.subr.bf16.mxu0 0
      %727 = vmatpush1.bf16.msra.mxu0 0
      %728 = vmatprep.subr.bf16.mxu0 0
      %729 = vmatpush1.bf16.msra.mxu0 0
      %730 = vmatprep.subr.bf16.mxu0 0
      %731 = vmatpush1.bf16.msra.mxu0 0
      %732 = vmatprep.subr.bf16.mxu0 0
      %733 = vmatpush1.bf16.msra.mxu0 0
      %734 = vmatprep.subr.bf16.mxu0 0
      %735 = vmatpush1.bf16.msra.mxu0 0
      %736 = vmatprep.subr.bf16.mxu0 0
      %737 = vmatpush1.bf16.msra.mxu0 0
      %738 = vmatprep.subr.bf16.mxu0 0
      %739 = vmatpush1.bf16.msra.mxu0 0
      %740 = vmatprep.subr.bf16.mxu0 0
      %741 = vmatpush1.bf16.msra.mxu0 %v724
      %742 = vmatprep.subr.bf16.mxu0 0
      %743 = vmatpush2.bf16.msra.mxu0 0
      %744 = vmatprep.subr.bf16.mxu0 0
      %745 = vmatpush2.bf16.msra.mxu0 0
      %746 = vmatprep.subr.bf16.mxu0 0
      %747 = vmatpush2.bf16.msra.mxu0 0
      %748 = vmatprep.subr.bf16.mxu0 0
      %749 = vmatpush2.bf16.msra.mxu0 0
      %750 = vmatprep.subr.bf16.mxu0 0
      %751 = vmatpush2.bf16.msra.mxu0 0
      %752 = vmatprep.subr.bf16.mxu0 0
      %753 = vmatpush2.bf16.msra.mxu0 0
      %754 = vmatprep.subr.bf16.mxu0 0
      %755 = vmatpush2.bf16.msra.mxu0 0
      %756 = vmatprep.subr.bf16.mxu0 0
      %757 = vmatpush2.bf16.msra.mxu0 0
      %758 = vmatprep.mubr.bf16.mxu0 0
      %759 = vmatmul.mubr.bf16.gmra.mxu0 %v721
      %v760 = vpop.f32.mrf.mxu0
      %v761 = vadd.f32 0.0, %v760
      %v762 = vpop.f32.mrf.mxu0
      %v763 = vpop.f32.mrf.mxu0
      %v764 = vpop.f32.mrf.mxu0
      %765 = vdwg.mxu0
      %766 = vrot.lane.b32.xlu0 %v426, 104
      %v767 = vpop.permute.xlu0 %766
      %768 = vrot.lane.b32.xlu0 %v427, 72
      %v769 = vpop.permute.xlu0 %768
      %v771 = vsel %vm437, %v767, 0
      %v774 = vsel %vm437, %v769, 0
      %776 = vmatprep.subr.bf16.mxu0 0
      %777 = vmatpush1.bf16.xpose.msra.mxu0 0
      %778 = vmatprep.subr.bf16.mxu0 0
      %779 = vmatpush1.bf16.xpose.msra.mxu0 0
      %780 = vmatprep.subr.bf16.mxu0 0
      %781 = vmatpush1.bf16.xpose.msra.mxu0 0
      %782 = vmatprep.subr.bf16.mxu0 0
      %783 = vmatpush1.bf16.xpose.msra.mxu0 0
      %784 = vmatprep.subr.bf16.mxu0 0
      %785 = vmatpush1.bf16.xpose.msra.mxu0 0
      %786 = vmatprep.subr.bf16.mxu0 0
      %787 = vmatpush1.bf16.xpose.msra.mxu0 0
      %788 = vmatprep.subr.bf16.mxu0 0
      %789 = vmatpush1.bf16.xpose.msra.mxu0 0
      %790 = vmatprep.subr.bf16.mxu0 0
      %791 = vmatpush1.bf16.xpose.msra.mxu0 %v774
      %792 = vmatprep.subr.bf16.mxu0 0
      %793 = vmatpush2.bf16.xpose.msra.mxu0 0
      %794 = vmatprep.subr.bf16.mxu0 0
      %795 = vmatpush2.bf16.xpose.msra.mxu0 0
      %796 = vmatprep.subr.bf16.mxu0 0
      %797 = vmatpush2.bf16.xpose.msra.mxu0 0
      %798 = vmatprep.subr.bf16.mxu0 0
      %799 = vmatpush2.bf16.xpose.msra.mxu0 0
      %800 = vmatprep.subr.bf16.mxu0 0
      %801 = vmatpush2.bf16.xpose.msra.mxu0 0
      %802 = vmatprep.subr.bf16.mxu0 0
      %803 = vmatpush2.bf16.xpose.msra.mxu0 0
      %804 = vmatprep.subr.bf16.mxu0 0
      %805 = vmatpush2.bf16.xpose.msra.mxu0 0
      %806 = vmatprep.subr.bf16.mxu0 0
      %807 = vmatpush2.bf16.xpose.msra.mxu0 0
      %808 = vmatprep.mubr.bf16.mxu0 0
      %809 = vmatmul.mubr.bf16.gmra.mxu0 %v771
      %v810 = vpop.f32.mrf.mxu0
      %v811 = vadd.f32 %v432, %v810
      %v812 = vpop.f32.mrf.mxu0
      %v813 = vpop.f32.mrf.mxu0
      %v814 = vpop.f32.mrf.mxu0
      %815 = vdwg.mxu0
      %v816 = vsel %vm437, %v811, -inf
      %817 = vmax.xlane.f32.xlu0 %v816
      %v818 = vpop.xlane.xlu0 %817
      %v819 = vsub.f32 %v811, %v818
      %v820 = vmul.f32 %v819, 1.442695
      %v821 = vpow.pop %v820
      %v822 = vsel %vm437, %v821, 0.0
      %823 = vadd.xlane.f32.xlu0 %v822
      %v824 = vpop.xlane.xlu0 %823
      %v825 = vrcp.pop %v824
      %v826 = vmul.f32 %v821, %v825
      %v827 = vpack.c.bf16 %v826, %v826
      %828 = vrot.lane.b32.xlu0 %v427, 40
      %v829 = vpop.permute.xlu0 %828
      %v831 = vsel %vm437, %v827, 0
      %v834 = vsel %vm501, %v829, 0
      %836 = vmatprep.subr.bf16.mxu0 0
      %837 = vmatpush1.bf16.msra.mxu0 0
      %838 = vmatprep.subr.bf16.mxu0 0
      %839 = vmatpush1.bf16.msra.mxu0 0
      %840 = vmatprep.subr.bf16.mxu0 0
      %841 = vmatpush1.bf16.msra.mxu0 0
      %842 = vmatprep.subr.bf16.mxu0 0
      %843 = vmatpush1.bf16.msra.mxu0 0
      %844 = vmatprep.subr.bf16.mxu0 0
      %845 = vmatpush1.bf16.msra.mxu0 0
      %846 = vmatprep.subr.bf16.mxu0 0
      %847 = vmatpush1.bf16.msra.mxu0 0
      %848 = vmatprep.subr.bf16.mxu0 0
      %849 = vmatpush1.bf16.msra.mxu0 0
      %850 = vmatprep.subr.bf16.mxu0 0
      %851 = vmatpush1.bf16.msra.mxu0 %v834
      %852 = vmatprep.subr.bf16.mxu0 0
      %853 = vmatpush2.bf16.msra.mxu0 0
      %854 = vmatprep.subr.bf16.mxu0 0
      %855 = vmatpush2.bf16.msra.mxu0 0
      %856 = vmatprep.subr.bf16.mxu0 0
      %857 = vmatpush2.bf16.msra.mxu0 0
      %858 = vmatprep.subr.bf16.mxu0 0
      %859 = vmatpush2.bf16.msra.mxu0 0
      %860 = vmatprep.subr.bf16.mxu0 0
      %861 = vmatpush2.bf16.msra.mxu0 0
      %862 = vmatprep.subr.bf16.mxu0 0
      %863 = vmatpush2.bf16.msra.mxu0 0
      %864 = vmatprep.subr.bf16.mxu0 0
      %865 = vmatpush2.bf16.msra.mxu0 0
      %866 = vmatprep.subr.bf16.mxu0 0
      %867 = vmatpush2.bf16.msra.mxu0 0
      %868 = vmatprep.mubr.bf16.mxu0 0
      %869 = vmatmul.mubr.bf16.gmra.mxu0 %v831
      %v870 = vpop.f32.mrf.mxu0
      %v871 = vadd.f32 0.0, %v870
      %v872 = vpop.f32.mrf.mxu0
      %v873 = vpop.f32.mrf.mxu0
      %v874 = vpop.f32.mrf.mxu0
      %875 = vdwg.mxu0
      %877 = vrot.lane.b32.xlu0 %v651, 8
      %v878 = vpop.permute.xlu0 %877
      %881 = vrot.lane.b32.xlu0 %v761, 16
      %v882 = vpop.permute.xlu0 %881
      %885 = vrot.lane.b32.xlu0 %v871, 24
      %v886 = vpop.permute.xlu0 %885
      %v888 = vsel %vm437, %v540, %v878
      %vm889 = vcmask 130048
      %v890 = vsel %vm889, %v888, %v882
      %vm891 = vcmask 195584
      %v892 = vsel %vm891, %v890, %v886
      %v893 = vpack.c.bf16 %v892, %v892
      %v894 = vld [vmem:[%s7] sm:$0x1]
      %v896 = vlaneseq
      %v897 = vshrl.u32 %v896, 7
      %v898 = vsub.s32 0, %v897
      %v899 = vrot.slane %v894, %v898
      %v901 = vadd.f32 %v316, %v899
      %v902 = vld [vmem:[%s6] sm:$0xf]
      %v903 = vld [vmem:[%s6 + $0x4] sm:$0xf]
      %v904 = vld [vmem:[%s6 + $0x8] sm:$0xf]
      %v905 = vld [vmem:[%s6 + $0xc] sm:$0xf]
      %v910 = vunpack.c.l.b16 %v902
      %v911 = vunpack.c.l.b16 %v903
      %v912 = vunpack.c.l.b16 %v904
      %v913 = vunpack.c.l.b16 %v905
      %v914 = vpack.c.b16 %v911, %v910
      %v915 = vpack.c.b16 %v913, %v912
      %v919 = vsel %vm319, %v893, 0
      %921 = vmatprep.subr.bf16.mxu0 0
      %922 = vmatpush1.bf16.msra.mxu0 0
      %923 = vmatprep.subr.bf16.mxu0 0
      %924 = vmatpush1.bf16.msra.mxu0 0
      %925 = vmatprep.subr.bf16.mxu0 0
      %926 = vmatpush1.bf16.msra.mxu0 0
      %927 = vmatprep.subr.bf16.mxu0 0
      %928 = vmatpush1.bf16.msra.mxu0 0
      %929 = vmatprep.subr.bf16.mxu0 0
      %930 = vmatpush1.bf16.msra.mxu0 0
      %931 = vmatprep.subr.bf16.mxu0 0
      %932 = vmatpush1.bf16.msra.mxu0 0
      %933 = vmatprep.subr.bf16.mxu0 0
      %934 = vmatpush1.bf16.msra.mxu0 %v915
      %935 = vmatprep.subr.bf16.mxu0 0
      %936 = vmatpush1.bf16.msra.mxu0 %v914
      %937 = vmatprep.subr.bf16.mxu0 0
      %938 = vmatpush2.bf16.msra.mxu0 0
      %939 = vmatprep.subr.bf16.mxu0 0
      %940 = vmatpush2.bf16.msra.mxu0 0
      %941 = vmatprep.subr.bf16.mxu0 0
      %942 = vmatpush2.bf16.msra.mxu0 0
      %943 = vmatprep.subr.bf16.mxu0 0
      %944 = vmatpush2.bf16.msra.mxu0 0
      %945 = vmatprep.subr.bf16.mxu0 0
      %946 = vmatpush2.bf16.msra.mxu0 0
      %947 = vmatprep.subr.bf16.mxu0 0
      %948 = vmatpush2.bf16.msra.mxu0 0
      %949 = vmatprep.subr.bf16.mxu0 0
      %950 = vmatpush2.bf16.msra.mxu0 0
      %951 = vmatprep.subr.bf16.mxu0 0
      %952 = vmatpush2.bf16.msra.mxu0 0
      %953 = vmatprep.mubr.bf16.mxu0 0
      %954 = vmatmul.mubr.bf16.gmra.mxu0 %v919
      %v955 = vpop.f32.mrf.mxu0
      %v956 = vadd.f32 0.0, %v955
      %v957 = vpop.f32.mrf.mxu0
      %v958 = vpop.f32.mrf.mxu0
      %v959 = vpop.f32.mrf.mxu0
      %960 = vdwg.mxu0
      %v961 = vadd.f32 %v901, %v956
      %962 = vst.msk [vmem:[%s314] sm:$0xff] %vm319, %v961
      %p963 = scmp.lt.s32.totalorder %s19, 1
      %s964 = scalar_select %p963, %s19, 1
      %s965 = smul.addr %s964, 8
      %s966 = scalar_lea.vmem %s8, %s965
      // Predicated region
      $region53: #{_lambda_.6} parent=51 // pred_check
        %p967 = pneg %p215
      $region54: #{_lambda_.6} parent=51 // pred_check_branch
        %969 = sbr.rel (%p967) target = $region56
      $region55: #{_lambda_.6} parent=51 // pred_region
        _
      $region56: #{_lambda_.6} parent=51 // pred_fallthru
        _
    $region52: #{_lambda_.6} parent=5 // pred_fallthru
      _
    %p970 = scmp.le.s32.totalorder 2, %s14
    // Predicated region
    $region57: #{_lambda_.6} parent=5 // pred_check
      %p971 = pneg %p970
    $region58: #{_lambda_.6} parent=5 // pred_check_branch
      %973 = sbr.rel (%p971) target = $region60
    $region59: #{_lambda_.6} parent=5 // pred_region
      %s974 = ssub.s32 %s14, 2
      // Predicated region
      $region61: #{_lambda_.6} parent=59 // pred_check
        %p975 = pneg %p221
      $region62: #{_lambda_.6} parent=59 // pred_check_branch
        %977 = sbr.rel (%p975) target = $region64
      $region63: #{_lambda_.6} parent=59 // pred_region
        %p978 = scmp.lt.s32.totalorder %s20, 1
        %s979 = scalar_select %p978, %s20, 1
        %s980 = smul.addr %s979, 8
        %s981 = scalar_lea.vmem %s8, %s980
      $region64: #{_lambda_.6} parent=59 // pred_fallthru
        _
    $region60: #{_lambda_.6} parent=5 // pred_fallthru
      _
  $region6: #{_lambda_.6} parent=0 // loop_footer
    %s18 = sadd.s32 1, %s14
  $region7: #{_lambda_.6} parent=0 // loop_footer_branch
    %13 = sbr.rel target = $region3
  $region8: #{_lambda_.6} parent=0 // loop_exit
    _

// kernel: _lambda_.7
$region0: #{_lambda_.7}
  #allocation0 [shape = 'u32[]', space=smem, size = 0x4, offset = 0x4, fixed_abs, tag = 'smem constant byte address 0x4 - core index']
  #allocation1 [shape = 'u32[144,128]{1,0:T(1,128)}', space=vmem, size = 0x12000, scoped, tag = 'internal scratch']
  #allocation2 [shape = 'bf16[16,32]{1,0:T(8,128)(2,1)}', space=vmem, size = 0x1000, scoped, tag = 'scratch operand']
  #allocation3 [shape = 'f32[16,32]{1,0:T(8,128)}', space=vmem, size = 0x2000, scoped, tag = 'scratch operand']
  %s0 = inlined_call_operand.vmem [shape: f32[16,32], index: 0, kind: input, shape index: {}]
  %s1 = inlined_call_operand.vmem [shape: f32[1,32], index: 1, kind: input, shape index: {}]
  %s2 = inlined_call_operand.vmem [shape: f32[1,32], index: 2, kind: input, shape index: {}]
  %s3 = inlined_call_operand.vmem [shape: bf16[32,64], index: 3, kind: input, shape index: {}]
  %s4 = inlined_call_operand.vmem [shape: f32[1,64], index: 4, kind: input, shape index: {}]
  %s5 = inlined_call_operand.vmem [shape: bf16[64,32], index: 5, kind: input, shape index: {}]
  %s6 = inlined_call_operand.vmem [shape: f32[1,32], index: 6, kind: input, shape index: {}]
  %s7 = inlined_call_operand.vmem [shape: f32[1,32], index: 7, kind: input, shape index: {}]
  %s8 = inlined_call_operand.vmem [shape: f32[1,32], index: 8, kind: input, shape index: {}]
  %s9 = inlined_call_operand.hbm [shape: f32[16,32], index: 9, kind: output, shape index: {}]
  %s10 = sld [smem:[#allocation0]]
  $region54: #{_lambda_.7} parent=0
    _
  %s12 = ssub.s32 1, %s10
  %s13 = scalar_select 0, %s12, %s10
  $region1: #{_lambda_.7} parent=0
    #allocation4 [shape = 'u8[8192]{0}', space=vmem, size = 0x2000, scoped, tag = 'output window, operand 0, single buffered']
    #allocation5 [shape = 's32[1]{0}', space=sflag, size = 0x4, scoped, tag = 'scoped memory for _lambda_.7']
    %14 = vsyncpa [#allocation5], 0
    // Predicated region
    $region2: #{_lambda_.7} parent=1 // pred_check
      _
    $region3: #{_lambda_.7} parent=1 // pred_check_branch
      %16 = sbr.rel (0) target = $region5
    $region4: #{_lambda_.7} parent=1 // pred_region
      _
    $region5: #{_lambda_.7} parent=1 // pred_fallthru
      _
    // Predicated region
    $region6: #{_lambda_.7} parent=1 // pred_check
      _
    $region7: #{_lambda_.7} parent=1 // pred_check_branch
      %18 = sbr.rel (0) target = $region9
    $region8: #{_lambda_.7} parent=1 // pred_region
      _
    $region9: #{_lambda_.7} parent=1 // pred_fallthru
      _
    // Predicated region
    $region10: #{_lambda_.7} parent=1 // pred_check
      _
    $region11: #{_lambda_.7} parent=1 // pred_check_branch
      %20 = sbr.rel (0) target = $region13
    $region12: #{_lambda_.7} parent=1 // pred_region
      _
    $region13: #{_lambda_.7} parent=1 // pred_fallthru
      _
    // Predicated region
    $region14: #{_lambda_.7} parent=1 // pred_check
      _
    $region15: #{_lambda_.7} parent=1 // pred_check_branch
      %22 = sbr.rel (0) target = $region17
    $region16: #{_lambda_.7} parent=1 // pred_region
      _
    $region17: #{_lambda_.7} parent=1 // pred_fallthru
      _
    // Predicated region
    $region18: #{_lambda_.7} parent=1 // pred_check
      _
    $region19: #{_lambda_.7} parent=1 // pred_check_branch
      %24 = sbr.rel (0) target = $region21
    $region20: #{_lambda_.7} parent=1 // pred_region
      _
    $region21: #{_lambda_.7} parent=1 // pred_fallthru
      _
    // Predicated region
    $region22: #{_lambda_.7} parent=1 // pred_check
      _
    $region23: #{_lambda_.7} parent=1 // pred_check_branch
      %26 = sbr.rel (0) target = $region25
    $region24: #{_lambda_.7} parent=1 // pred_region
      _
    $region25: #{_lambda_.7} parent=1 // pred_fallthru
      _
    // Predicated region
    $region26: #{_lambda_.7} parent=1 // pred_check
      _
    $region27: #{_lambda_.7} parent=1 // pred_check_branch
      %28 = sbr.rel (0) target = $region29
    $region28: #{_lambda_.7} parent=1 // pred_region
      _
    $region29: #{_lambda_.7} parent=1 // pred_fallthru
      _
    // Predicated region
    $region30: #{_lambda_.7} parent=1 // pred_check
      _
    $region31: #{_lambda_.7} parent=1 // pred_check_branch
      %30 = sbr.rel (0) target = $region33
    $region32: #{_lambda_.7} parent=1 // pred_region
      _
    $region33: #{_lambda_.7} parent=1 // pred_fallthru
      _
    // Predicated region
    $region34: #{_lambda_.7} parent=1 // pred_check
      _
    $region35: #{_lambda_.7} parent=1 // pred_check_branch
      %32 = sbr.rel (0) target = $region37
    $region36: #{_lambda_.7} parent=1 // pred_region
      _
    $region37: #{_lambda_.7} parent=1 // pred_fallthru
      _
    %p34 = scmp.eq.s32.totalorder 0, 0
    // Predicated region
    $region38: #{_lambda_.7} parent=1 // pred_check
      %p35 = pneg %p34
    $region39: #{_lambda_.7} parent=1 // pred_check_branch
      %37 = sbr.rel (%p35) target = $region41
    $region40: #{_lambda_.7} parent=1 // pred_region
      %v38 = vld [vmem:[%s0] sm:$0xff]
      %v39 = vld [vmem:[%s0 + $0x8] sm:$0xff]
      %v40 = vld [vmem:[%s1] sm:$0x1]
      %v41 = vld [vmem:[%s2] sm:$0x1]
      %vm42 = vcmask 261120
      %v43 = vsel %vm42, %v38, 0.0
      %44 = vadd.xlane.f32.xlu0 %v43
      %v45 = vpop.xlane.xlu0 %44
      %v46 = vsel %vm42, %v39, 0.0
      %47 = vadd.xlane.f32.xlu0 %v46
      %v48 = vpop.xlane.xlu0 %47
      %v49 = vrcp.pop 32.0
      %v50 = vmul.f32 %v45, %v49
      %v51 = vmul.f32 %v48, %v49
      %v52 = vsub.f32 %v38, %v50
      %v53 = vsub.f32 %v39, %v51
      %v54 = vmul.f32 %v52, %v52
      %v55 = vmul.f32 %v53, %v53
      %v56 = vsel %vm42, %v54, 0.0
      %57 = vadd.xlane.f32.xlu0 %v56
      %v58 = vpop.xlane.xlu0 %57
      %v59 = vsel %vm42, %v55, 0.0
      %60 = vadd.xlane.f32.xlu0 %v59
      %v61 = vpop.xlane.xlu0 %60
      %v62 = vmul.f32 %v58, 0.032258064
      %v63 = vmul.f32 %v61, 0.032258064
      %v65 = vlaneseq
      %v66 = vshrl.u32 %v65, 7
      %v67 = vsub.s32 0, %v66
      %v68 = vrot.slane %v40, %v67
      %v70 = vmul.f32 %v68, %v52
      %v71 = vmul.f32 %v68, %v53
      %v72 = vrsqrt.pop %v62
      %v73 = vmul.f32 %v62, %v72
      %vm74 = vcmp.eq.f32.partialorder %v62, inf
      %v75 = vsel %vm74, %v62, %v73
      %vm76 = vcmp.eq.f32.partialorder %v62, 0.0
      %v77 = vand.u32 %v62, 2147483648
      %v78 = vsel %vm76, %v77, %v75
      %v79 = vrsqrt.pop %v63
      %v80 = vmul.f32 %v63, %v79
      %vm81 = vcmp.eq.f32.partialorder %v63, inf
      %v82 = vsel %vm81, %v63, %v80
      %vm83 = vcmp.eq.f32.partialorder %v63, 0.0
      %v84 = vand.u32 %v63, 2147483648
      %v85 = vsel %vm83, %v84, %v82
      %v86 = vadd.f32 %v78, 1e-06
      %v87 = vadd.f32 %v85, 1e-06
      %v88 = vrcp.pop %v86
      %v89 = vmul.f32 %v70, %v88
      %v90 = vrcp.pop %v87
      %v91 = vmul.f32 %v71, %v90
      %v93 = vlaneseq
      %v94 = vshrl.u32 %v93, 7
      %v95 = vsub.s32 0, %v94
      %v96 = vrot.slane %v41, %v95
      %v98 = vadd.f32 %v89, %v96
      %v99 = vadd.f32 %v91, %v96
      %v100 = vpack.c.bf16 %v99, %v98
      %v102 = vunpack.c.l.b16 %v100
      %v103 = vunpack.c.h.b16 %v100
      %v104 = vpack.c.b16 %v102, %v102
      %v105 = vpack.c.b16 %v103, %v103
      %vm108 = vcmask 257024
      %109 = vst.msk [vmem:[#allocation2] sm:$0xf] %vm108, %v104
      %110 = vst.msk [vmem:[#allocation2 + $0x4] sm:$0xf] %vm108, %v105
      %v111 = vld [vmem:[%s6] sm:$0x1]
      %v113 = vlaneseq
      %v114 = vshrl.u32 %v113, 7
      %v115 = vsub.s32 0, %v114
      %v116 = vrot.slane %v111, %v115
      %v118 = vadd.f32 %v38, %v116
      %v119 = vadd.f32 %v39, %v116
      %120 = vst.msk [vmem:[#allocation3] sm:$0xff] %vm42, %v118
      %121 = vst.msk [vmem:[#allocation3 + $0x8] sm:$0xff] %vm42, %v119
    $region41: #{_lambda_.7} parent=1 // pred_fallthru
      _
    %v122 = vld [vmem:[#allocation2] sm:$0xf]
    %v123 = vld [vmem:[#allocation2 + $0x4] sm:$0xf]
    %v124 = vld [vmem:[%s3] sm:$0xf]
    %v125 = vld [vmem:[%s3 + $0x4] sm:$0xf]
    %v126 = vld [vmem:[%s3 + $0x8] sm:$0xf]
    %v127 = vld [vmem:[%s3 + $0xc] sm:$0xf]
    %v128 = vld [vmem:[%s4] sm:$0x1]
    %v130 = vlaneseq
    %v131 = vshrl.u32 %v130, 7
    %v132 = vsub.s32 0, %v131
    %v133 = vrot.slane %v128, %v132
    %v137 = vunpack.c.l.b16 %v122
    %v138 = vunpack.c.l.b16 %v123
    %v139 = vpack.c.b16 %v138, %v137
    %v144 = vunpack.c.l.b16 %v124
    %v145 = vunpack.c.l.b16 %v125
    %v146 = vunpack.c.l.b16 %v126
    %v147 = vunpack.c.l.b16 %v127
    %v148 = vpack.c.b16 %v145, %v144
    %v149 = vpack.c.b16 %v147, %v146
    %vm152 = vcmask 261120
    %v154 = vsel %vm152, %v139, 0
    %156 = vmatprep.subr.bf16.mxu0 0
    %157 = vmatpush1.bf16.msra.mxu0 0
    %158 = vmatprep.subr.bf16.mxu0 0
    %159 = vmatpush1.bf16.msra.mxu0 0
    %160 = vmatprep.subr.bf16.mxu0 0
    %161 = vmatpush1.bf16.msra.mxu0 0
    %162 = vmatprep.subr.bf16.mxu0 0
    %163 = vmatpush1.bf16.msra.mxu0 0
    %164 = vmatprep.subr.bf16.mxu0 0
    %165 = vmatpush1.bf16.msra.mxu0 0
    %166 = vmatprep.subr.bf16.mxu0 0
    %167 = vmatpush1.bf16.msra.mxu0 0
    %168 = vmatprep.subr.bf16.mxu0 0
    %169 = vmatpush1.bf16.msra.mxu0 %v149
    %170 = vmatprep.subr.bf16.mxu0 0
    %171 = vmatpush1.bf16.msra.mxu0 %v148
    %172 = vmatprep.subr.bf16.mxu0 0
    %173 = vmatpush2.bf16.msra.mxu0 0
    %174 = vmatprep.subr.bf16.mxu0 0
    %175 = vmatpush2.bf16.msra.mxu0 0
    %176 = vmatprep.subr.bf16.mxu0 0
    %177 = vmatpush2.bf16.msra.mxu0 0
    %178 = vmatprep.subr.bf16.mxu0 0
    %179 = vmatpush2.bf16.msra.mxu0 0
    %180 = vmatprep.subr.bf16.mxu0 0
    %181 = vmatpush2.bf16.msra.mxu0 0
    %182 = vmatprep.subr.bf16.mxu0 0
    %183 = vmatpush2.bf16.msra.mxu0 0
    %184 = vmatprep.subr.bf16.mxu0 0
    %185 = vmatpush2.bf16.msra.mxu0 0
    %186 = vmatprep.subr.bf16.mxu0 0
    %187 = vmatpush2.bf16.msra.mxu0 0
    %188 = vmatprep.mubr.bf16.mxu0 0
    %189 = vmatmul.mubr.bf16.gmra.mxu0 %v154
    %v190 = vpop.f32.mrf.mxu0
    %v191 = vadd.f32 %v133, %v190
    %v192 = vpop.f32.mrf.mxu0
    %v193 = vpop.f32.mrf.mxu0
    %v194 = vadd.f32 %v133, %v193
    %v195 = vpop.f32.mrf.mxu0
    %196 = vdwg.mxu0
    %v197 = vmax.f32 %v191, 0.0
    %v198 = vmax.f32 %v194, 0.0
    %v199 = vld [vmem:[#allocation3] sm:$0xff]
    %v200 = vld [vmem:[#allocation3 + $0x8] sm:$0xff]
    %v201 = vpack.c.bf16 %v198, %v197
    %v202 = vld [vmem:[%s5] sm:$0xf]
    %v203 = vld [vmem:[%s5 + $0x4] sm:$0xf]
    %v204 = vld [vmem:[%s5 + $0x8] sm:$0xf]
    %v205 = vld [vmem:[%s5 + $0xc] sm:$0xf]
    %v206 = vld [vmem:[%s5 + $0x10] sm:$0xf]
    %v207 = vld [vmem:[%s5 + $0x14] sm:$0xf]
    %v208 = vld [vmem:[%s5 + $0x18] sm:$0xf]
    %v209 = vld [vmem:[%s5 + $0x1c] sm:$0xf]
    %v218 = vunpack.c.l.b16 %v202
    %v219 = vunpack.c.l.b16 %v203
    %v220 = vunpack.c.l.b16 %v204
    %v221 = vunpack.c.l.b16 %v205
    %v222 = vunpack.c.l.b16 %v206
    %v223 = vunpack.c.l.b16 %v207
    %v224 = vunpack.c.l.b16 %v208
    %v225 = vunpack.c.l.b16 %v209
    %v226 = vpack.c.b16 %v219, %v218
    %v227 = vpack.c.b16 %v221, %v220
    %v228 = vpack.c.b16 %v223, %v222
    %v229 = vpack.c.b16 %v225, %v224
    %vm234 = vcmask 523264
    %v236 = vsel %vm234, %v201, 0
    %238 = vmatprep.subr.bf16.mxu0 0
    %239 = vmatpush1.bf16.msra.mxu0 0
    %240 = vmatprep.subr.bf16.mxu0 0
    %241 = vmatpush1.bf16.msra.mxu0 0
    %242 = vmatprep.subr.bf16.mxu0 0
    %243 = vmatpush1.bf16.msra.mxu0 0
    %244 = vmatprep.subr.bf16.mxu0 0
    %245 = vmatpush1.bf16.msra.mxu0 0
    %246 = vmatprep.subr.bf16.mxu0 0
    %247 = vmatpush1.bf16.msra.mxu0 %v229
    %248 = vmatprep.subr.bf16.mxu0 0
    %249 = vmatpush1.bf16.msra.mxu0 %v228
    %250 = vmatprep.subr.bf16.mxu0 0
    %251 = vmatpush1.bf16.msra.mxu0 %v227
    %252 = vmatprep.subr.bf16.mxu0 0
    %253 = vmatpush1.bf16.msra.mxu0 %v226
    %254 = vmatprep.subr.bf16.mxu0 0
    %255 = vmatpush2.bf16.msra.mxu0 0
    %256 = vmatprep.subr.bf16.mxu0 0
    %257 = vmatpush2.bf16.msra.mxu0 0
    %258 = vmatprep.subr.bf16.mxu0 0
    %259 = vmatpush2.bf16.msra.mxu0 0
    %260 = vmatprep.subr.bf16.mxu0 0
    %261 = vmatpush2.bf16.msra.mxu0 0
    %262 = vmatprep.subr.bf16.mxu0 0
    %263 = vmatpush2.bf16.msra.mxu0 0
    %264 = vmatprep.subr.bf16.mxu0 0
    %265 = vmatpush2.bf16.msra.mxu0 0
    %266 = vmatprep.subr.bf16.mxu0 0
    %267 = vmatpush2.bf16.msra.mxu0 0
    %268 = vmatprep.subr.bf16.mxu0 0
    %269 = vmatpush2.bf16.msra.mxu0 0
    %270 = vmatprep.mubr.bf16.mxu0 0
    %271 = vmatmul.mubr.bf16.gmra.mxu0 %v236
    %v272 = vpop.f32.mrf.mxu0
    %v273 = vadd.f32 0.0, %v272
    %v274 = vpop.f32.mrf.mxu0
    %v275 = vpop.f32.mrf.mxu0
    %v276 = vadd.f32 0.0, %v275
    %v277 = vpop.f32.mrf.mxu0
    %278 = vdwg.mxu0
    %v279 = vadd.f32 %v199, %v273
    %v280 = vadd.f32 %v200, %v276
    %281 = vst.msk [vmem:[#allocation3] sm:$0xff] %vm152, %v279
    %282 = vst.msk [vmem:[#allocation3 + $0x8] sm:$0xff] %vm152, %v280
    // Predicated region
    $region42: #{_lambda_.7} parent=1 // pred_check
      %p283 = pneg %p34
    $region43: #{_lambda_.7} parent=1 // pred_check_branch
      %285 = sbr.rel (%p283) target = $region45
    $region44: #{_lambda_.7} parent=1 // pred_region
      %v286 = vld [vmem:[#allocation3] sm:$0xff]
      %v287 = vld [vmem:[#allocation3 + $0x8] sm:$0xff]
      %v288 = vld [vmem:[%s7] sm:$0x1]
      %v289 = vld [vmem:[%s8] sm:$0x1]
      %v290 = vsel %vm152, %v286, 0.0
      %291 = vadd.xlane.f32.xlu0 %v290
      %v292 = vpop.xlane.xlu0 %291
      %v293 = vsel %vm152, %v287, 0.0
      %294 = vadd.xlane.f32.xlu0 %v293
      %v295 = vpop.xlane.xlu0 %294
      %v296 = vrcp.pop 32.0
      %v297 = vmul.f32 %v292, %v296
      %v298 = vmul.f32 %v295, %v296
      %v299 = vsub.f32 %v286, %v297
      %v300 = vsub.f32 %v287, %v298
      %v301 = vmul.f32 %v299, %v299
      %v302 = vmul.f32 %v300, %v300
      %v303 = vsel %vm152, %v301, 0.0
      %304 = vadd.xlane.f32.xlu0 %v303
      %v305 = vpop.xlane.xlu0 %304
      %v306 = vsel %vm152, %v302, 0.0
      %307 = vadd.xlane.f32.xlu0 %v306
      %v308 = vpop.xlane.xlu0 %307
      %v309 = vmul.f32 %v305, 0.032258064
      %v310 = vmul.f32 %v308, 0.032258064
      %v312 = vlaneseq
      %v313 = vshrl.u32 %v312, 7
      %v314 = vsub.s32 0, %v313
      %v315 = vrot.slane %v288, %v314
      %v317 = vmul.f32 %v315, %v299
      %v318 = vmul.f32 %v315, %v300
      %v319 = vrsqrt.pop %v309
      %v320 = vmul.f32 %v309, %v319
      %vm321 = vcmp.eq.f32.partialorder %v309, inf
      %v322 = vsel %vm321, %v309, %v320
      %vm323 = vcmp.eq.f32.partialorder %v309, 0.0
      %v324 = vand.u32 %v309, 2147483648
      %v325 = vsel %vm323, %v324, %v322
      %v326 = vrsqrt.pop %v310
      %v327 = vmul.f32 %v310, %v326
      %vm328 = vcmp.eq.f32.partialorder %v310, inf
      %v329 = vsel %vm328, %v310, %v327
      %vm330 = vcmp.eq.f32.partialorder %v310, 0.0
      %v331 = vand.u32 %v310, 2147483648
      %v332 = vsel %vm330, %v331, %v329
      %v333 = vadd.f32 %v325, 1e-06
      %v334 = vadd.f32 %v332, 1e-06
      %v335 = vrcp.pop %v333
      %v336 = vmul.f32 %v317, %v335
      %v337 = vrcp.pop %v334
      %v338 = vmul.f32 %v318, %v337
      %v340 = vlaneseq
      %v341 = vshrl.u32 %v340, 7
      %v342 = vsub.s32 0, %v341
      %v343 = vrot.slane %v289, %v342
      %v345 = vadd.f32 %v336, %v343
      %v346 = vadd.f32 %v338, %v343
      %347 = vst.msk [vmem:[#allocation4] sm:$0xff] %vm152, %v345
      %348 = vst.msk [vmem:[#allocation4 + $0x8] sm:$0xff] %vm152, %v346
    $region45: #{_lambda_.7} parent=1 // pred_fallthru
      _
    // Predicated region
    $region46: #{_lambda_.7} parent=1 // pred_check
      _
    $region47: #{_lambda_.7} parent=1 // pred_check_branch
      %350 = sbr.rel (0) target = $region49
    $region48: #{_lambda_.7} parent=1 // pred_region
      %s352 = ssub.s32 256, 256
      %353 = vsyncadd [#allocation5], %s352
      %s354 = sshll.u32 [#allocation4], 4
      %s355 = int_to_ptr.vmem [resolvable:$true] %s354
      %360 = dma.vmem_to_hbm [thread:$0]  %s355, 256, %s9, [#allocation5], 128, 128, 8
    $region49: #{_lambda_.7} parent=1 // pred_fallthru
      _
    // Predicated region
    $region50: #{_lambda_.7} parent=1 // pred_check
      _
    $region51: #{_lambda_.7} parent=1 // pred_check_branch
      %362 = sbr.rel (0) target = $region53
    $region52: #{_lambda_.7} parent=1 // pred_region
      %363 = dma.done [#allocation5], 256
    $region53: #{_lambda_.7} parent=1 // pred_fallthru
      _
    %364 = vsyncpa [#allocation5], 1

</llo_original>
